<compile_context>
chip_gen: v7x
topology: tpu7x:2x2x1
jax: 0.10.0
libtpu: 0.0.40
codegen_flags: <defaults>
</compile_context>

<pallas_src>
import math

import jax
import jax.numpy as jnp
from jax.experimental import pallas as pl
from jax.experimental.pallas import tpu as pltpu


# ----------------------------- helpers ---------------------------------------

def _round_up(n, m):
    return (n + m - 1) // m * m


def _pad_rows(x, rows):
    pad = rows - x.shape[0]
    if pad == 0:
        return x
    return jnp.pad(x, ((0, pad), (0, 0)))


def _vmem_spec():
    return pl.BlockSpec(memory_space=pltpu.MemorySpace.VMEM)


def _vmem_call(kernel, out_shape, *args):
    """Whole-tensor (grid-less) pallas_call, every operand resident in VMEM."""
    multi = isinstance(out_shape, (tuple, list))
    n_out = len(out_shape) if multi else 1
    return pl.pallas_call(
        kernel,
        out_shape=tuple(out_shape) if multi else out_shape,
        in_specs=[_vmem_spec() for _ in args],
        out_specs=tuple(_vmem_spec() for _ in range(n_out)) if multi else _vmem_spec(),
    )(*args)


def _row_call(kernel, args, row_flags, out_cols, n_rows, max_tile=512):
    """1-D row-gridded pallas_call.

    args/row_flags: operands (all 2-D); row-tiled operands get
    BlockSpec((tile, width), i -> (i, 0)), the rest are full blocks (weights,
    biases).  Outputs are f32, row-tiled, with the given column widths.
    Rows are zero-padded to a tile multiple and sliced back afterwards.
    """
    tile = min(max_tile, _round_up(max(n_rows, 1), 8))
    padded = _round_up(max(n_rows, 1), tile)
    grid = (padded // tile,)

    call_args, in_specs = [], []
    for a, is_row in zip(args, row_flags):
        if is_row:
            a = _pad_rows(a, padded)
            in_specs.append(pl.BlockSpec((tile, a.shape[1]), lambda i: (i, 0)))
        else:
            in_specs.append(pl.BlockSpec(a.shape, lambda i: (0, 0)))
        call_args.append(a)

    out_shape = tuple(jax.ShapeDtypeStruct((padded, c), jnp.float32) for c in out_cols)
    out_specs = tuple(pl.BlockSpec((tile, c), lambda i: (i, 0)) for c in out_cols)

    outs = pl.pallas_call(
        kernel,
        grid=grid,
        out_shape=out_shape,
        in_specs=in_specs,
        out_specs=out_specs,
        compiler_params=pltpu.CompilerParams(
            dimension_semantics=("parallel",),
            vmem_limit_bytes=32 * 1024 * 1024),
    )(*call_args)
    outs = tuple(o[:n_rows] for o in outs)
    return outs if len(outs) > 1 else outs[0]


# ----------------------------- Pallas kernels --------------------------------

def _edge_msg_kernel(e_ref, xsrc_ref, w1_ref, b1_ref, w2_ref, b2_ref, o_ref):
    """GINE message: relu(x_j + relu(dec2(relu(dec1(e))))).
    Edge encoder intermediates never leave VMEM; bf16 MXU operands, f32 acc."""
    h = jnp.dot(e_ref[...], w1_ref[...], preferred_element_type=jnp.float32) + b1_ref[...]
    h = jnp.maximum(h, 0.0)
    y = jnp.dot(h.astype(jnp.bfloat16), w2_ref[...],
                preferred_element_type=jnp.float32) + b2_ref[...]
    y = jnp.maximum(y, 0.0)                                   # encoded edge_attr
    o_ref[...] = jnp.maximum(xsrc_ref[...] + y, 0.0)          # message


def _gine_pool1_kernel(x_ref, agg_ref, w1_ref, b1_ref, w2_ref, b2_ref, p_ref,
                       xs_ref, s_ref):
    """GINE MLP((1+eps)*x + agg, eps=0) + outer ReLU, fused with TopKPooling#1:
    score = tanh((x . p)/||p||), outputs (x*score, score)."""
    h = (x_ref[...] + agg_ref[...]).astype(jnp.bfloat16)
    h = jnp.dot(h, w1_ref[...], preferred_element_type=jnp.float32) + b1_ref[...]
    h = jnp.maximum(h, 0.0)
    y = jnp.dot(h.astype(jnp.bfloat16), w2_ref[...],
                preferred_element_type=jnp.float32) + b2_ref[...]
    y = jnp.maximum(y, 0.0)                                   # GINE output + relu
    p = p_ref[...]                                            # (1, 512)
    inv_norm = jax.lax.rsqrt(jnp.sum(p * p, axis=-1, keepdims=True))
    s = jnp.tanh(jnp.sum(y * p, axis=-1, keepdims=True) * inv_norm)
    xs_ref[...] = y * s
    s_ref[...] = s


def _gat_proj_kernel(x_ref, w_ref, sel_ref, xp_ref, a_ref):
    """xp = x @ W (bf16 operands, f32 acc) plus one merged (512, 2H) selector
    matmul producing [a_src | a_dst] in a single (N, 2H) store."""
    xp = jnp.dot(x_ref[...], w_ref[...], preferred_element_type=jnp.float32)
    xp_ref[...] = xp
    a_ref[...] = jnp.dot(xp, sel_ref[...], preferred_element_type=jnp.float32)


def _bias_relu_score_kernel(x_ref, b_ref, p_ref, xs_ref, s_ref):
    """relu(gat_out + bias) fused with TopKPooling#2 scoring/gating."""
    x = jnp.maximum(x_ref[...] + b_ref[...], 0.0)
    p = p_ref[...]
    inv_norm = jax.lax.rsqrt(jnp.sum(p * p, axis=-1, keepdims=True))
    s = jnp.tanh(jnp.sum(x * p, axis=-1, keepdims=True) * inv_norm)
    xs_ref[...] = x * s
    s_ref[...] = s


def _readout_kernel(xa_ref, xb_ref, w1m_ref, w1a_ref, b1_ref,
                    w2_ref, b2_ref, w3_ref, b3_ref, o_ref):
    """x1 + x2 with xi = [gmp(xi) | gap(xi)], then lin1+ReLU, lin2+ReLU,
    lin3+log_softmax in one kernel; the (1,1024) concat is never built
    (lin1 weight is split into max/mean halves)."""
    xa = xa_ref[...]
    xb = xb_ref[...]
    h_max = jnp.max(xa, axis=0, keepdims=True) + jnp.max(xb, axis=0, keepdims=True)
    h_mean = jnp.mean(xa, axis=0, keepdims=True) + jnp.mean(xb, axis=0, keepdims=True)
    y = (jnp.dot(h_max, w1m_ref[...], preferred_element_type=jnp.float32)
         + jnp.dot(h_mean, w1a_ref[...], preferred_element_type=jnp.float32)
         + b1_ref[...])
    y = jnp.maximum(y, 0.0)
    # dropout(p=0.4) is identity in eval mode (training=False)
    y = jnp.dot(y, w2_ref[...], preferred_element_type=jnp.float32) + b2_ref[...]
    y = jnp.maximum(y, 0.0)
    y = jnp.dot(y, w3_ref[...], preferred_element_type=jnp.float32) + b3_ref[...]
    m = jnp.max(y, axis=-1, keepdims=True)
    z = y - m
    o_ref[...] = z - jnp.log(jnp.sum(jnp.exp(z), axis=-1, keepdims=True))


# ----------------------------- kernel wrappers --------------------------------

def pallas_edge_encoder_message(edge_attr, x_src, w1, b1, w2, b2):
    """Fused edge encoder + GINE message, padded to lane-multiple K/N dims."""
    E = edge_attr.shape[0]
    K_IN, K_HID = 128, 128                       # padded from 100 / 64 (zero pad, exact)
    e = jnp.pad(edge_attr.astype(jnp.bfloat16), ((0, 0), (0, K_IN - edge_attr.shape[1])))
    w1p = jnp.pad(w1, ((0, K_IN - w1.shape[0]), (0, K_HID - w1.shape[1]))).astype(jnp.bfloat16)
    b1p = jnp.pad(b1, (0, K_HID - b1.shape[0])).astype(jnp.float32).reshape(1, -1)
    w2p = jnp.pad(w2, ((0, K_HID - w2.shape[0]), (0, 0))).astype(jnp.bfloat16)
    b2p = b2.astype(jnp.float32).reshape(1, -1)
    return _row_call(
        _edge_msg_kernel,
        [e, x_src.astype(jnp.float32), w1p, b1p, w2p, b2p],
        [True, True, False, False, False, False],
        [w2.shape[1]], E)


def pallas_gine_mlp_pool1(x, agg, w1, b1, w2, b2, p):
    N = x.shape[0]
    return _row_call(
        _gine_pool1_kernel,
        [x.astype(jnp.float32), agg.astype(jnp.float32),
         w1.astype(jnp.bfloat16), b1.astype(jnp.float32).reshape(1, -1),
         w2.astype(jnp.bfloat16), b2.astype(jnp.float32).reshape(1, -1),
         p.astype(jnp.float32).reshape(1, -1)],
        [True, True, False, False, False, False, False],
        [w2.shape[1], 1], N)


def _head_selector_matrix(att):
    """(H, C) attention vectors -> (H*C, H) block matrix such that
    (x @ W) @ sel == ((x @ W).reshape(N, H, C) * att).sum(-1)."""
    H, C = att.shape
    eye = jnp.eye(H, dtype=att.dtype)
    return (att[:, :, None] * eye[:, None, :]).reshape(H * C, H)


def pallas_gat_proj(x, W, att_src, att_dst):
    N = x.shape[0]
    H = att_src.shape[0]
    sel = jnp.concatenate(
        [_head_selector_matrix(att_src.astype(jnp.float32)),
         _head_selector_matrix(att_dst.astype(jnp.float32))], axis=1)   # (512, 2H)
    xp, a = _row_call(
        _gat_proj_kernel,
        [x.astype(jnp.bfloat16), W.astype(jnp.bfloat16), sel],
        [True, False, False],
        [W.shape[1], 2 * H], N)
    return xp, a[:, :H], a[:, H:]


def pallas_bias_relu_pool(x, bias, p):
    N = x.shape[0]
    return _row_call(
        _bias_relu_score_kernel,
        [x.astype(jnp.float32), bias.astype(jnp.float32).reshape(1, -1),
         p.astype(jnp.float32).reshape(1, -1)],
        [True, False, False],
        [x.shape[1], 1], N)


def pallas_readout(xa, xb, w1, b1, w2, b2, w3, b3):
    F = xa.shape[1]
    return _vmem_call(
        _readout_kernel,
        jax.ShapeDtypeStruct((1, w3.shape[1]), jnp.float32),
        xa.astype(jnp.float32), xb.astype(jnp.float32),
        w1[:F].astype(jnp.float32), w1[F:].astype(jnp.float32),
        b1.astype(jnp.float32).reshape(1, -1),
        w2.astype(jnp.float32), b2.astype(jnp.float32).reshape(1, -1),
        w3.astype(jnp.float32), b3.astype(jnp.float32).reshape(1, -1))


# ----------------------------- JAX glue (graph ops) ---------------------------

def topk_select(x_scored, score, src, dst, edge_mask, ratio):
    """Select top ceil(ratio*N) nodes by score; remap / mask edges."""
    N = score.shape[0]
    k = int(math.ceil(ratio * N))
    # TODO(synk): data-dependent top-k node selection + edge filtering has no
    # clean Pallas equivalent; done in JAX with static k and edge masking.
    _, perm = jax.lax.top_k(score, k)
    perm = perm.astype(jnp.int32)
    x_new = x_scored[perm]
    keep = jnp.zeros((N,), bool).at[perm].set(True)
    new_idx = jnp.zeros((N,), jnp.int32).at[perm].set(jnp.arange(k, dtype=jnp.int32))
    # Masked-out edges are remapped to node 0; this is ONLY safe because every
    # downstream consumer (the GAT softmax) zeroes their contribution via e_mask.
    e_mask = edge_mask & keep[src] & keep[dst]
    src_new = jnp.where(e_mask, new_idx[src], 0)
    dst_new = jnp.where(e_mask, new_idx[dst], 0)
    return x_new, src_new, dst_new, e_mask


def gat_attention_aggregate(xp, a_src, a_dst, src, dst, edge_mask, heads, out_ch):
    """Masked segment softmax + weighted aggregation (self-loops appended).
    Self-loops guarantee denom > 0 / amax > -inf for every node."""
    # TODO(synk): edge-indexed gather + segment_max/segment_sum stay in JAX glue;
    # a scalar-prefetch mega-kernel would keep the (E, heads*C) intermediates in VMEM.
    N = xp.shape[0]
    xh = xp.reshape(N, heads, out_ch)
    self_idx = jnp.arange(N, dtype=jnp.int32)
    s = jnp.concatenate([src, self_idx])
    d = jnp.concatenate([dst, self_idx])
    m = jnp.concatenate([edge_mask, jnp.ones((N,), bool)])
    alpha = jax.nn.leaky_relu(a_src[s] + a_dst[d], 0.2)
    alpha = jnp.where(m[:, None], alpha, -jnp.inf)
    amax = jax.ops.segment_max(alpha, d, num_segments=N)
    ex = jnp.exp(alpha - amax[d]) * m[:, None]
    denom = jax.ops.segment_sum(ex, d, num_segments=N)
    attn = ex / denom[d]
    out = jax.ops.segment_sum(attn[:, :, None] * xh[s], d, num_segments=N)
    return out.reshape(N, heads * out_ch)      # bias + ReLU fused into pool2 kernel


# ----------------------------- Parameters -------------------------------------

def init_params(key):
    def nrm(k, shape, scale=0.05):
        return scale * jax.random.normal(k, shape, dtype=jnp.float32)
    ks = jax.random.split(key, 20)
    return {
        "dec1_w": nrm(ks[0], (100, 64)),   "dec1_b": nrm(ks[1], (64,)),
        "dec2_w": nrm(ks[2], (64, 32)),    "dec2_b": nrm(ks[3], (32,)),
        "mlp_w1": nrm(ks[4], (32, 128)),   "mlp_b1": nrm(ks[5], (128,)),
        "mlp_w2": nrm(ks[6], (128, 512)),  "mlp_b2": nrm(ks[7], (512,)),
        "pool1_p": nrm(ks[8], (512,)),
        "gat_w": nrm(ks[9], (512, 512)),
        "gat_att_src": nrm(ks[10], (4, 128)),
        "gat_att_dst": nrm(ks[11], (4, 128)),
        "gat_b": nrm(ks[12], (512,)),
        "pool2_p": nrm(ks[13], (512,)),
        "lin1_w": nrm(ks[14], (1024, 128)), "lin1_b": nrm(ks[15], (128,)),
        "lin2_w": nrm(ks[16], (128, 64)),   "lin2_b": nrm(ks[17], (64,)),
        "lin3_w": nrm(ks[18], (64, 8)),     "lin3_b": nrm(ks[19], (8,)),
    }


# ----------------------------- Forward pass -----------------------------------

def net_forward(params, x, edge_index, edge_attr):
    src = edge_index[0]
    dst = edge_index[1]
    N = x.shape[0]
    E = src.shape[0]

    # Fused edge encoder + GINE message: relu(x_j + relu(dec2(relu(dec1(e))))).
    msg = pallas_edge_encoder_message(edge_attr, x[src],
                                      params["dec1_w"], params["dec1_b"],
                                      params["dec2_w"], params["dec2_b"])   # (E, 32)
    # TODO(synk): the segment_sum scatter stays in JAX glue; a scalar-prefetch
    # mega-kernel (src/dst in SMEM, accumulate into a VMEM (N,32) scratch)
    # would fuse the whole GINE stage but is left for a follow-up.
    agg = jax.ops.segment_sum(msg, dst, num_segments=N)

    # GINEConv MLP + outer relu + TopKPooling#1 scoring/gating in one kernel.
    xs, score = pallas_gine_mlp_pool1(x, agg, params["mlp_w1"], params["mlp_b1"],
                                      params["mlp_w2"], params["mlp_b2"],
                                      params["pool1_p"])
    edge_mask = jnp.ones((E,), bool)
    x1, src, dst, edge_mask = topk_select(xs, score[:, 0], src, dst, edge_mask, 0.8)
    x_pool1 = x1                                                 # (k1, 512) -> readout

    # GATConv(512 -> 128, heads=4, concat); bias + outer relu fused into pool2 kernel.
    xp, a_src, a_dst = pallas_gat_proj(x1, params["gat_w"],
                                       params["gat_att_src"], params["gat_att_dst"])
    gat_out = gat_attention_aggregate(xp, a_src, a_dst, src, dst, edge_mask,
                                      heads=4, out_ch=128)

    # TopKPooling #2 (input is relu(gat_out + bias), fused in-kernel).
    xs, score = pallas_bias_relu_pool(gat_out, params["gat_b"], params["pool2_p"])
    x2, src, dst, edge_mask = topk_select(xs, score[:, 0], src, dst, edge_mask, 0.8)
    x_pool2 = x2                                                 # (k2, 512)

    # Fused readout: gmp/gap of both stages, x1+x2, lin1/lin2/lin3 + log_softmax.
    return pallas_readout(x_pool1, x_pool2,
                          params["lin1_w"], params["lin1_b"],
                          params["lin2_w"], params["lin2_b"],
                          params["lin3_w"], params["lin3_b"])    # (1, 8)


net_forward_jit = jax.jit(net_forward)


# ----------------------------- Main --------------------------------------------

if __name__ == "__main__":
    key = jax.random.PRNGKey(0)
    k_par, k_x, k_e, k_ei = jax.random.split(key, 4)

    N, E = 16, 32                       # nodes, edges (single graph, batch = zeros)
    params = init_params(k_par)

    x = jax.random.normal(k_x, (N, 32), dtype=jnp.float32)           # node features (32 == dec2 out)
    edge_attr = jax.random.normal(k_e, (E, 100), dtype=jnp.float32)  # raw edge features
    edge_index = jax.random.randint(k_ei, (2, E), 0, N, dtype=jnp.int32)

    out = net_forward_jit(params, x, edge_index, edge_attr)
    out = jax.block_until_ready(out)
    assert out.shape == (1, 8)
    assert bool(jnp.all(jnp.isfinite(out)))
    print("KERNEL_OK")
</pallas_src>

<mosaic_0001>
module attributes {stable_mosaic.version = 11 : i64} {
  func.func @_edge_msg_kernel(%arg0: i32, %arg1: memref<32x128xbf16, #tpu.memory_space<vmem>>, %arg2: memref<32x32xf32, #tpu.memory_space<vmem>>, %arg3: memref<128x128xbf16, #tpu.memory_space<vmem>>, %arg4: memref<1x128xf32, #tpu.memory_space<vmem>>, %arg5: memref<128x32xbf16, #tpu.memory_space<vmem>>, %arg6: memref<1x32xf32, #tpu.memory_space<vmem>>, %arg7: memref<32x32xf32, #tpu.memory_space<vmem>>) attributes {dimension_semantics = [#tpu.dimension_semantics<parallel>], iteration_bounds = array<i64: 1>, scalar_prefetch = 0 : i64, scratch_operands = 0 : i64, tpu.core_type = #tpu.core_type<tc>, window_params = [{transform_indices = @transform_0, window_bounds = array<i64: 32, 128>}, {transform_indices = @transform_1, window_bounds = array<i64: 32, 32>}, {pipeline_mode = #tpu.pipeline_mode<synchronous>, transform_indices = @transform_2, window_bounds = array<i64: 128, 128>}, {pipeline_mode = #tpu.pipeline_mode<synchronous>, transform_indices = @transform_3, window_bounds = array<i64: 1, 128>}, {pipeline_mode = #tpu.pipeline_mode<synchronous>, transform_indices = @transform_4, window_bounds = array<i64: 128, 32>}, {pipeline_mode = #tpu.pipeline_mode<synchronous>, transform_indices = @transform_5, window_bounds = array<i64: 1, 32>}, {transform_indices = @transform_6, window_bounds = array<i64: 32, 32>}]} {
    %c0 = arith.constant 0 : index
    %c0_0 = arith.constant 0 : index
    %0 = vector.load %arg1[%c0, %c0_0] : memref<32x128xbf16, #tpu.memory_space<vmem>>, vector<32x128xbf16>
    %c0_1 = arith.constant 0 : index
    %c0_2 = arith.constant 0 : index
    %1 = vector.load %arg3[%c0_1, %c0_2] : memref<128x128xbf16, #tpu.memory_space<vmem>>, vector<128x128xbf16>
    %cst = arith.constant dense<0.000000e+00> : vector<32x128xf32>
    %2 = tpu.matmul %0, %1, %cst {dimension_numbers = #tpu.dot_dimension_numbers<[1], [0], [0], [1], [0, 0, 1, 1], [], []>} : vector<32x128xbf16>, vector<128x128xbf16>, vector<32x128xf32> -> vector<32x128xf32>
    %c0_3 = arith.constant 0 : index
    %c0_4 = arith.constant 0 : index
    %3 = vector.load %arg4[%c0_3, %c0_4] : memref<1x128xf32, #tpu.memory_space<vmem>>, vector<1x128xf32>
    %4 = vector.broadcast %3 : vector<1x128xf32> to vector<32x128xf32>
    %5 = arith.addf %2, %4 : vector<32x128xf32>
    %cst_5 = arith.constant 0.000000e+00 : f32
    %6 = vector.broadcast %cst_5 : f32 to vector<32x128xf32>
    %7 = arith.maximumf %5, %6 : vector<32x128xf32>
    %8 = arith.truncf %7 : vector<32x128xf32> to vector<32x128xbf16>
    %c0_6 = arith.constant 0 : index
    %c0_7 = arith.constant 0 : index
    %9 = vector.load %arg5[%c0_6, %c0_7] : memref<128x32xbf16, #tpu.memory_space<vmem>>, vector<128x32xbf16>
    %cst_8 = arith.constant dense<0.000000e+00> : vector<32x32xf32>
    %10 = tpu.matmul %8, %9, %cst_8 {dimension_numbers = #tpu.dot_dimension_numbers<[1], [0], [0], [1], [0, 0, 1, 1], [], []>} : vector<32x128xbf16>, vector<128x32xbf16>, vector<32x32xf32> -> vector<32x32xf32>
    %c0_9 = arith.constant 0 : index
    %c0_10 = arith.constant 0 : index
    %11 = vector.load %arg6[%c0_9, %c0_10] : memref<1x32xf32, #tpu.memory_space<vmem>>, vector<1x32xf32>
    %12 = vector.broadcast %11 : vector<1x32xf32> to vector<32x32xf32>
    %13 = arith.addf %10, %12 : vector<32x32xf32>
    %cst_11 = arith.constant 0.000000e+00 : f32
    %14 = vector.broadcast %cst_11 : f32 to vector<32x32xf32>
    %15 = arith.maximumf %13, %14 : vector<32x32xf32>
    %c0_12 = arith.constant 0 : index
    %c0_13 = arith.constant 0 : index
    %16 = vector.load %arg2[%c0_12, %c0_13] : memref<32x32xf32, #tpu.memory_space<vmem>>, vector<32x32xf32>
    %17 = arith.addf %16, %15 : vector<32x32xf32>
    %cst_14 = arith.constant 0.000000e+00 : f32
    %18 = vector.broadcast %cst_14 : f32 to vector<32x32xf32>
    %19 = arith.maximumf %17, %18 : vector<32x32xf32>
    %c0_15 = arith.constant 0 : index
    %c0_16 = arith.constant 0 : index
    %20 = vector.load %arg7[%c0_15, %c0_16] : memref<32x32xf32, #tpu.memory_space<vmem>>, vector<32x32xf32>
    tpu.vector_store %arg7[%c0_15, %c0_16], %19 {strides = array<i32>} : memref<32x32xf32, #tpu.memory_space<vmem>>, vector<32x32xf32>,
    return
  }
  func.func @transform_0(%arg0: i32) -> (i32, i32) {
    %c0_i32 = arith.constant 0 : i32
    %c0_i32_0 = arith.constant 0 : i32
    return %arg0, %c0_i32 : i32, i32
  }
  func.func @transform_1(%arg0: i32) -> (i32, i32) {
    %c0_i32 = arith.constant 0 : i32
    %c0_i32_0 = arith.constant 0 : i32
    return %arg0, %c0_i32 : i32, i32
  }
  func.func @transform_2(%arg0: i32) -> (i32, i32) {
    %c0_i32 = arith.constant 0 : i32
    %c0_i32_0 = arith.constant 0 : i32
    %c0_i32_1 = arith.constant 0 : i32
    return %c0_i32, %c0_i32_0 : i32, i32
  }
  func.func @transform_3(%arg0: i32) -> (i32, i32) {
    %c0_i32 = arith.constant 0 : i32
    %c0_i32_0 = arith.constant 0 : i32
    %c0_i32_1 = arith.constant 0 : i32
    return %c0_i32, %c0_i32_0 : i32, i32
  }
  func.func @transform_4(%arg0: i32) -> (i32, i32) {
    %c0_i32 = arith.constant 0 : i32
    %c0_i32_0 = arith.constant 0 : i32
    %c0_i32_1 = arith.constant 0 : i32
    return %c0_i32, %c0_i32_0 : i32, i32
  }
  func.func @transform_5(%arg0: i32) -> (i32, i32) {
    %c0_i32 = arith.constant 0 : i32
    %c0_i32_0 = arith.constant 0 : i32
    %c0_i32_1 = arith.constant 0 : i32
    return %c0_i32, %c0_i32_0 : i32, i32
  }
  func.func @transform_6(%arg0: i32) -> (i32, i32) {
    %c0_i32 = arith.constant 0 : i32
    %c0_i32_0 = arith.constant 0 : i32
    return %arg0, %c0_i32 : i32, i32
  }
}

module attributes {stable_mosaic.version = 11 : i64} {
  func.func @_gine_pool1_kernel(%arg0: i32, %arg1: memref<16x32xf32, #tpu.memory_space<vmem>>, %arg2: memref<16x32xf32, #tpu.memory_space<vmem>>, %arg3: memref<32x128xbf16, #tpu.memory_space<vmem>>, %arg4: memref<1x128xf32, #tpu.memory_space<vmem>>, %arg5: memref<128x512xbf16, #tpu.memory_space<vmem>>, %arg6: memref<1x512xf32, #tpu.memory_space<vmem>>, %arg7: memref<1x512xf32, #tpu.memory_space<vmem>>, %arg8: memref<16x512xf32, #tpu.memory_space<vmem>>, %arg9: memref<16x1xf32, #tpu.memory_space<vmem>>) attributes {dimension_semantics = [#tpu.dimension_semantics<parallel>], iteration_bounds = array<i64: 1>, scalar_prefetch = 0 : i64, scratch_operands = 0 : i64, tpu.core_type = #tpu.core_type<tc>, window_params = [{transform_indices = @transform_0, window_bounds = array<i64: 16, 32>}, {transform_indices = @transform_1, window_bounds = array<i64: 16, 32>}, {pipeline_mode = #tpu.pipeline_mode<synchronous>, transform_indices = @transform_2, window_bounds = array<i64: 32, 128>}, {pipeline_mode = #tpu.pipeline_mode<synchronous>, transform_indices = @transform_3, window_bounds = array<i64: 1, 128>}, {pipeline_mode = #tpu.pipeline_mode<synchronous>, transform_indices = @transform_4, window_bounds = array<i64: 128, 512>}, {pipeline_mode = #tpu.pipeline_mode<synchronous>, transform_indices = @transform_5, window_bounds = array<i64: 1, 512>}, {pipeline_mode = #tpu.pipeline_mode<synchronous>, transform_indices = @transform_6, window_bounds = array<i64: 1, 512>}, {transform_indices = @transform_7, window_bounds = array<i64: 16, 512>}, {transform_indices = @transform_8, window_bounds = array<i64: 16, 1>}]} {
    %c0 = arith.constant 0 : index
    %c0_0 = arith.constant 0 : index
    %0 = vector.load %arg1[%c0, %c0_0] : memref<16x32xf32, #tpu.memory_space<vmem>>, vector<16x32xf32>
    %c0_1 = arith.constant 0 : index
    %c0_2 = arith.constant 0 : index
    %1 = vector.load %arg2[%c0_1, %c0_2] : memref<16x32xf32, #tpu.memory_space<vmem>>, vector<16x32xf32>
    %2 = arith.addf %0, %1 : vector<16x32xf32>
    %3 = arith.truncf %2 : vector<16x32xf32> to vector<16x32xbf16>
    %c0_3 = arith.constant 0 : index
    %c0_4 = arith.constant 0 : index
    %4 = vector.load %arg3[%c0_3, %c0_4] : memref<32x128xbf16, #tpu.memory_space<vmem>>, vector<32x128xbf16>
    %cst = arith.constant dense<0.000000e+00> : vector<16x128xf32>
    %5 = tpu.matmul %3, %4, %cst {dimension_numbers = #tpu.dot_dimension_numbers<[1], [0], [0], [1], [0, 0, 1, 1], [], []>} : vector<16x32xbf16>, vector<32x128xbf16>, vector<16x128xf32> -> vector<16x128xf32>
    %c0_5 = arith.constant 0 : index
    %c0_6 = arith.constant 0 : index
    %6 = vector.load %arg4[%c0_5, %c0_6] : memref<1x128xf32, #tpu.memory_space<vmem>>, vector<1x128xf32>
    %7 = vector.broadcast %6 : vector<1x128xf32> to vector<16x128xf32>
    %8 = arith.addf %5, %7 : vector<16x128xf32>
    %cst_7 = arith.constant 0.000000e+00 : f32
    %9 = vector.broadcast %cst_7 : f32 to vector<16x128xf32>
    %10 = arith.maximumf %8, %9 : vector<16x128xf32>
    %11 = arith.truncf %10 : vector<16x128xf32> to vector<16x128xbf16>
    %c0_8 = arith.constant 0 : index
    %c0_9 = arith.constant 0 : index
    %12 = vector.load %arg5[%c0_8, %c0_9] : memref<128x512xbf16, #tpu.memory_space<vmem>>, vector<128x512xbf16>
    %cst_10 = arith.constant dense<0.000000e+00> : vector<16x512xf32>
    %13 = tpu.matmul %11, %12, %cst_10 {dimension_numbers = #tpu.dot_dimension_numbers<[1], [0], [0], [1], [0, 0, 1, 1], [], []>} : vector<16x128xbf16>, vector<128x512xbf16>, vector<16x512xf32> -> vector<16x512xf32>
    %c0_11 = arith.constant 0 : index
    %c0_12 = arith.constant 0 : index
    %14 = vector.load %arg6[%c0_11, %c0_12] : memref<1x512xf32, #tpu.memory_space<vmem>>, vector<1x512xf32>
    %15 = vector.broadcast %14 : vector<1x512xf32> to vector<16x512xf32>
    %16 = arith.addf %13, %15 : vector<16x512xf32>
    %cst_13 = arith.constant 0.000000e+00 : f32
    %17 = vector.broadcast %cst_13 : f32 to vector<16x512xf32>
    %18 = arith.maximumf %16, %17 : vector<16x512xf32>
    %c0_14 = arith.constant 0 : index
    %c0_15 = arith.constant 0 : index
    %19 = vector.load %arg7[%c0_14, %c0_15] : memref<1x512xf32, #tpu.memory_space<vmem>>, vector<1x512xf32>
    %20 = arith.mulf %19, %19 : vector<1x512xf32>
    %cst_16 = arith.constant dense<0.000000e+00> : vector<1xf32>
    %21 = vector.multi_reduction <add>, %20, %cst_16 [1] : vector<1x512xf32> to vector<1xf32>
    %22 = vector.shape_cast %21 : vector<1xf32> to vector<1x1xf32>
    %23 = math.rsqrt %22 : vector<1x1xf32>
    %24 = vector.broadcast %19 : vector<1x512xf32> to vector<16x512xf32>
    %25 = arith.mulf %18, %24 : vector<16x512xf32>
    %cst_17 = arith.constant dense<0.000000e+00> : vector<16xf32>
    %26 = vector.multi_reduction <add>, %25, %cst_17 [1] : vector<16x512xf32> to vector<16xf32>
    %27 = vector.shape_cast %26 : vector<16xf32> to vector<16x1xf32>
    %28 = vector.broadcast %23 : vector<1x1xf32> to vector<16x1xf32>
    %29 = arith.mulf %27, %28 : vector<16x1xf32>
    %30 = math.tanh %29 : vector<16x1xf32>
    %31 = vector.broadcast %30 : vector<16x1xf32> to vector<16x512xf32>
    %32 = arith.mulf %18, %31 : vector<16x512xf32>
    %c0_18 = arith.constant 0 : index
    %c0_19 = arith.constant 0 : index
    %33 = vector.load %arg8[%c0_18, %c0_19] : memref<16x512xf32, #tpu.memory_space<vmem>>, vector<16x512xf32>
    tpu.vector_store %arg8[%c0_18, %c0_19], %32 {strides = array<i32>} : memref<16x512xf32, #tpu.memory_space<vmem>>, vector<16x512xf32>,
    %c0_20 = arith.constant 0 : index
    %c0_21 = arith.constant 0 : index
    %34 = vector.load %arg9[%c0_20, %c0_21] : memref<16x1xf32, #tpu.memory_space<vmem>>, vector<16x1xf32>
    tpu.vector_store %arg9[%c0_20, %c0_21], %30 {strides = array<i32>} : memref<16x1xf32, #tpu.memory_space<vmem>>, vector<16x1xf32>,
    return
  }
  func.func @transform_0(%arg0: i32) -> (i32, i32) {
    %c0_i32 = arith.constant 0 : i32
    %c0_i32_0 = arith.constant 0 : i32
    return %arg0, %c0_i32 : i32, i32
  }
  func.func @transform_1(%arg0: i32) -> (i32, i32) {
    %c0_i32 = arith.constant 0 : i32
    %c0_i32_0 = arith.constant 0 : i32
    return %arg0, %c0_i32 : i32, i32
  }
  func.func @transform_2(%arg0: i32) -> (i32, i32) {
    %c0_i32 = arith.constant 0 : i32
    %c0_i32_0 = arith.constant 0 : i32
    %c0_i32_1 = arith.constant 0 : i32
    return %c0_i32, %c0_i32_0 : i32, i32
  }
  func.func @transform_3(%arg0: i32) -> (i32, i32) {
    %c0_i32 = arith.constant 0 : i32
    %c0_i32_0 = arith.constant 0 : i32
    %c0_i32_1 = arith.constant 0 : i32
    return %c0_i32, %c0_i32_0 : i32, i32
  }
  func.func @transform_4(%arg0: i32) -> (i32, i32) {
    %c0_i32 = arith.constant 0 : i32
    %c0_i32_0 = arith.constant 0 : i32
    %c0_i32_1 = arith.constant 0 : i32
    return %c0_i32, %c0_i32_0 : i32, i32
  }
  func.func @transform_5(%arg0: i32) -> (i32, i32) {
    %c0_i32 = arith.constant 0 : i32
    %c0_i32_0 = arith.constant 0 : i32
    %c0_i32_1 = arith.constant 0 : i32
    return %c0_i32, %c0_i32_0 : i32, i32
  }
  func.func @transform_6(%arg0: i32) -> (i32, i32) {
    %c0_i32 = arith.constant 0 : i32
    %c0_i32_0 = arith.constant 0 : i32
    %c0_i32_1 = arith.constant 0 : i32
    return %c0_i32, %c0_i32_0 : i32, i32
  }
  func.func @transform_7(%arg0: i32) -> (i32, i32) {
    %c0_i32 = arith.constant 0 : i32
    %c0_i32_0 = arith.constant 0 : i32
    return %arg0, %c0_i32 : i32, i32
  }
  func.func @transform_8(%arg0: i32) -> (i32, i32) {
    %c0_i32 = arith.constant 0 : i32
    %c0_i32_0 = arith.constant 0 : i32
    return %arg0, %c0_i32 : i32, i32
  }
}

module attributes {stable_mosaic.version = 11 : i64} {
  func.func @_gat_proj_kernel(%arg0: i32, %arg1: memref<16x512xbf16, #tpu.memory_space<vmem>>, %arg2: memref<512x512xbf16, #tpu.memory_space<vmem>>, %arg3: memref<512x8xf32, #tpu.memory_space<vmem>>, %arg4: memref<16x512xf32, #tpu.memory_space<vmem>>, %arg5: memref<16x8xf32, #tpu.memory_space<vmem>>) attributes {dimension_semantics = [#tpu.dimension_semantics<parallel>], iteration_bounds = array<i64: 1>, scalar_prefetch = 0 : i64, scratch_operands = 0 : i64, tpu.core_type = #tpu.core_type<tc>, window_params = [{transform_indices = @transform_0, window_bounds = array<i64: 16, 512>}, {pipeline_mode = #tpu.pipeline_mode<synchronous>, transform_indices = @transform_1, window_bounds = array<i64: 512, 512>}, {pipeline_mode = #tpu.pipeline_mode<synchronous>, transform_indices = @transform_2, window_bounds = array<i64: 512, 8>}, {transform_indices = @transform_3, window_bounds = array<i64: 16, 512>}, {transform_indices = @transform_4, window_bounds = array<i64: 16, 8>}]} {
    %c0 = arith.constant 0 : index
    %c0_0 = arith.constant 0 : index
    %0 = vector.load %arg1[%c0, %c0_0] : memref<16x512xbf16, #tpu.memory_space<vmem>>, vector<16x512xbf16>
    %c0_1 = arith.constant 0 : index
    %c0_2 = arith.constant 0 : index
    %1 = vector.load %arg2[%c0_1, %c0_2] : memref<512x512xbf16, #tpu.memory_space<vmem>>, vector<512x512xbf16>
    %cst = arith.constant dense<0.000000e+00> : vector<16x512xf32>
    %2 = tpu.matmul %0, %1, %cst {dimension_numbers = #tpu.dot_dimension_numbers<[1], [0], [0], [1], [0, 0, 1, 1], [], []>} : vector<16x512xbf16>, vector<512x512xbf16>, vector<16x512xf32> -> vector<16x512xf32>
    %c0_3 = arith.constant 0 : index
    %c0_4 = arith.constant 0 : index
    %3 = vector.load %arg4[%c0_3, %c0_4] : memref<16x512xf32, #tpu.memory_space<vmem>>, vector<16x512xf32>
    tpu.vector_store %arg4[%c0_3, %c0_4], %2 {strides = array<i32>} : memref<16x512xf32, #tpu.memory_space<vmem>>, vector<16x512xf32>,
    %c0_5 = arith.constant 0 : index
    %c0_6 = arith.constant 0 : index
    %4 = vector.load %arg3[%c0_5, %c0_6] : memref<512x8xf32, #tpu.memory_space<vmem>>, vector<512x8xf32>
    %cst_7 = arith.constant dense<0.000000e+00> : vector<16x8xf32>
    %5 = tpu.matmul %2, %4, %cst_7 {dimension_numbers = #tpu.dot_dimension_numbers<[1], [0], [0], [1], [0, 0, 1, 1], [], []>} : vector<16x512xf32>, vector<512x8xf32>, vector<16x8xf32> -> vector<16x8xf32>
    %c0_8 = arith.constant 0 : index
    %c0_9 = arith.constant 0 : index
    %6 = vector.load %arg5[%c0_8, %c0_9] : memref<16x8xf32, #tpu.memory_space<vmem>>, vector<16x8xf32>
    tpu.vector_store %arg5[%c0_8, %c0_9], %5 {strides = array<i32>} : memref<16x8xf32, #tpu.memory_space<vmem>>, vector<16x8xf32>,
    return
  }
  func.func @transform_0(%arg0: i32) -> (i32, i32) {
    %c0_i32 = arith.constant 0 : i32
    %c0_i32_0 = arith.constant 0 : i32
    return %arg0, %c0_i32 : i32, i32
  }
  func.func @transform_1(%arg0: i32) -> (i32, i32) {
    %c0_i32 = arith.constant 0 : i32
    %c0_i32_0 = arith.constant 0 : i32
    %c0_i32_1 = arith.constant 0 : i32
    return %c0_i32, %c0_i32_0 : i32, i32
  }
  func.func @transform_2(%arg0: i32) -> (i32, i32) {
    %c0_i32 = arith.constant 0 : i32
    %c0_i32_0 = arith.constant 0 : i32
    %c0_i32_1 = arith.constant 0 : i32
    return %c0_i32, %c0_i32_0 : i32, i32
  }
  func.func @transform_3(%arg0: i32) -> (i32, i32) {
    %c0_i32 = arith.constant 0 : i32
    %c0_i32_0 = arith.constant 0 : i32
    return %arg0, %c0_i32 : i32, i32
  }
  func.func @transform_4(%arg0: i32) -> (i32, i32) {
    %c0_i32 = arith.constant 0 : i32
    %c0_i32_0 = arith.constant 0 : i32
    return %arg0, %c0_i32 : i32, i32
  }
}

module attributes {stable_mosaic.version = 11 : i64} {
  func.func @_bias_relu_score_kernel(%arg0: i32, %arg1: memref<16x512xf32, #tpu.memory_space<vmem>>, %arg2: memref<1x512xf32, #tpu.memory_space<vmem>>, %arg3: memref<1x512xf32, #tpu.memory_space<vmem>>, %arg4: memref<16x512xf32, #tpu.memory_space<vmem>>, %arg5: memref<16x1xf32, #tpu.memory_space<vmem>>) attributes {dimension_semantics = [#tpu.dimension_semantics<parallel>], iteration_bounds = array<i64: 1>, scalar_prefetch = 0 : i64, scratch_operands = 0 : i64, tpu.core_type = #tpu.core_type<tc>, window_params = [{transform_indices = @transform_0, window_bounds = array<i64: 16, 512>}, {pipeline_mode = #tpu.pipeline_mode<synchronous>, transform_indices = @transform_1, window_bounds = array<i64: 1, 512>}, {pipeline_mode = #tpu.pipeline_mode<synchronous>, transform_indices = @transform_2, window_bounds = array<i64: 1, 512>}, {transform_indices = @transform_3, window_bounds = array<i64: 16, 512>}, {transform_indices = @transform_4, window_bounds = array<i64: 16, 1>}]} {
    %c0 = arith.constant 0 : index
    %c0_0 = arith.constant 0 : index
    %0 = vector.load %arg1[%c0, %c0_0] : memref<16x512xf32, #tpu.memory_space<vmem>>, vector<16x512xf32>
    %c0_1 = arith.constant 0 : index
    %c0_2 = arith.constant 0 : index
    %1 = vector.load %arg2[%c0_1, %c0_2] : memref<1x512xf32, #tpu.memory_space<vmem>>, vector<1x512xf32>
    %2 = vector.broadcast %1 : vector<1x512xf32> to vector<16x512xf32>
    %3 = arith.addf %0, %2 : vector<16x512xf32>
    %cst = arith.constant 0.000000e+00 : f32
    %4 = vector.broadcast %cst : f32 to vector<16x512xf32>
    %5 = arith.maximumf %3, %4 : vector<16x512xf32>
    %c0_3 = arith.constant 0 : index
    %c0_4 = arith.constant 0 : index
    %6 = vector.load %arg3[%c0_3, %c0_4] : memref<1x512xf32, #tpu.memory_space<vmem>>, vector<1x512xf32>
    %7 = arith.mulf %6, %6 : vector<1x512xf32>
    %cst_5 = arith.constant dense<0.000000e+00> : vector<1xf32>
    %8 = vector.multi_reduction <add>, %7, %cst_5 [1] : vector<1x512xf32> to vector<1xf32>
    %9 = vector.shape_cast %8 : vector<1xf32> to vector<1x1xf32>
    %10 = math.rsqrt %9 : vector<1x1xf32>
    %11 = vector.broadcast %6 : vector<1x512xf32> to vector<16x512xf32>
    %12 = arith.mulf %5, %11 : vector<16x512xf32>
    %cst_6 = arith.constant dense<0.000000e+00> : vector<16xf32>
    %13 = vector.multi_reduction <add>, %12, %cst_6 [1] : vector<16x512xf32> to vector<16xf32>
    %14 = vector.shape_cast %13 : vector<16xf32> to vector<16x1xf32>
    %15 = vector.broadcast %10 : vector<1x1xf32> to vector<16x1xf32>
    %16 = arith.mulf %14, %15 : vector<16x1xf32>
    %17 = math.tanh %16 : vector<16x1xf32>
    %18 = vector.broadcast %17 : vector<16x1xf32> to vector<16x512xf32>
    %19 = arith.mulf %5, %18 : vector<16x512xf32>
    %c0_7 = arith.constant 0 : index
    %c0_8 = arith.constant 0 : index
    %20 = vector.load %arg4[%c0_7, %c0_8] : memref<16x512xf32, #tpu.memory_space<vmem>>, vector<16x512xf32>
    tpu.vector_store %arg4[%c0_7, %c0_8], %19 {strides = array<i32>} : memref<16x512xf32, #tpu.memory_space<vmem>>, vector<16x512xf32>,
    %c0_9 = arith.constant 0 : index
    %c0_10 = arith.constant 0 : index
    %21 = vector.load %arg5[%c0_9, %c0_10] : memref<16x1xf32, #tpu.memory_space<vmem>>, vector<16x1xf32>
    tpu.vector_store %arg5[%c0_9, %c0_10], %17 {strides = array<i32>} : memref<16x1xf32, #tpu.memory_space<vmem>>, vector<16x1xf32>,
    return
  }
  func.func @transform_0(%arg0: i32) -> (i32, i32) {
    %c0_i32 = arith.constant 0 : i32
    %c0_i32_0 = arith.constant 0 : i32
    return %arg0, %c0_i32 : i32, i32
  }
  func.func @transform_1(%arg0: i32) -> (i32, i32) {
    %c0_i32 = arith.constant 0 : i32
    %c0_i32_0 = arith.constant 0 : i32
    %c0_i32_1 = arith.constant 0 : i32
    return %c0_i32, %c0_i32_0 : i32, i32
  }
  func.func @transform_2(%arg0: i32) -> (i32, i32) {
    %c0_i32 = arith.constant 0 : i32
    %c0_i32_0 = arith.constant 0 : i32
    %c0_i32_1 = arith.constant 0 : i32
    return %c0_i32, %c0_i32_0 : i32, i32
  }
  func.func @transform_3(%arg0: i32) -> (i32, i32) {
    %c0_i32 = arith.constant 0 : i32
    %c0_i32_0 = arith.constant 0 : i32
    return %arg0, %c0_i32 : i32, i32
  }
  func.func @transform_4(%arg0: i32) -> (i32, i32) {
    %c0_i32 = arith.constant 0 : i32
    %c0_i32_0 = arith.constant 0 : i32
    return %arg0, %c0_i32 : i32, i32
  }
}

module attributes {stable_mosaic.version = 11 : i64} {
  func.func @_readout_kernel(%arg0: memref<13x512xf32, #tpu.memory_space<vmem>>, %arg1: memref<11x512xf32, #tpu.memory_space<vmem>>, %arg2: memref<512x128xf32, #tpu.memory_space<vmem>>, %arg3: memref<512x128xf32, #tpu.memory_space<vmem>>, %arg4: memref<1x128xf32, #tpu.memory_space<vmem>>, %arg5: memref<128x64xf32, #tpu.memory_space<vmem>>, %arg6: memref<1x64xf32, #tpu.memory_space<vmem>>, %arg7: memref<64x8xf32, #tpu.memory_space<vmem>>, %arg8: memref<1x8xf32, #tpu.memory_space<vmem>>, %arg9: memref<1x8xf32, #tpu.memory_space<vmem>>) attributes {dimension_semantics = [], scalar_prefetch = 0 : i64, scratch_operands = 0 : i64, tpu.core_type = #tpu.core_type<tc>} {
    %c0 = arith.constant 0 : index
    %c0_0 = arith.constant 0 : index
    %0 = vector.load %arg0[%c0, %c0_0] : memref<13x512xf32, #tpu.memory_space<vmem>>, vector<13x512xf32>
    %c0_1 = arith.constant 0 : index
    %c0_2 = arith.constant 0 : index
    %1 = vector.load %arg1[%c0_1, %c0_2] : memref<11x512xf32, #tpu.memory_space<vmem>>, vector<11x512xf32>
    %cst = arith.constant dense<0xFF800000> : vector<512xf32>
    %2 = vector.multi_reduction <maximumf>, %0, %cst [0] : vector<13x512xf32> to vector<512xf32>
    %3 = vector.shape_cast %2 : vector<512xf32> to vector<1x512xf32>
    %cst_3 = arith.constant dense<0xFF800000> : vector<512xf32>
    %4 = vector.multi_reduction <maximumf>, %1, %cst_3 [0] : vector<11x512xf32> to vector<512xf32>
    %5 = vector.shape_cast %4 : vector<512xf32> to vector<1x512xf32>
    %6 = arith.addf %3, %5 : vector<1x512xf32>
    %cst_4 = arith.constant dense<0.000000e+00> : vector<512xf32>
    %7 = vector.multi_reduction <add>, %0, %cst_4 [0] : vector<13x512xf32> to vector<512xf32>
    %8 = vector.shape_cast %7 : vector<512xf32> to vector<1x512xf32>
    %cst_5 = arith.constant 1.300000e+01 : f32
    %9 = vector.broadcast %cst_5 : f32 to vector<1x512xf32>
    %10 = arith.divf %8, %9 : vector<1x512xf32>
    %cst_6 = arith.constant dense<0.000000e+00> : vector<512xf32>
    %11 = vector.multi_reduction <add>, %1, %cst_6 [0] : vector<11x512xf32> to vector<512xf32>
    %12 = vector.shape_cast %11 : vector<512xf32> to vector<1x512xf32>
    %cst_7 = arith.constant 1.100000e+01 : f32
    %13 = vector.broadcast %cst_7 : f32 to vector<1x512xf32>
    %14 = arith.divf %12, %13 : vector<1x512xf32>
    %15 = arith.addf %10, %14 : vector<1x512xf32>
    %c0_8 = arith.constant 0 : index
    %c0_9 = arith.constant 0 : index
    %16 = vector.load %arg2[%c0_8, %c0_9] : memref<512x128xf32, #tpu.memory_space<vmem>>, vector<512x128xf32>
    %cst_10 = arith.constant dense<0.000000e+00> : vector<1x128xf32>
    %17 = tpu.matmul %6, %16, %cst_10 {dimension_numbers = #tpu.dot_dimension_numbers<[1], [0], [0], [1], [0, 0, 1, 1], [], []>} : vector<1x512xf32>, vector<512x128xf32>, vector<1x128xf32> -> vector<1x128xf32>
    %c0_11 = arith.constant 0 : index
    %c0_12 = arith.constant 0 : index
    %18 = vector.load %arg3[%c0_11, %c0_12] : memref<512x128xf32, #tpu.memory_space<vmem>>, vector<512x128xf32>
    %cst_13 = arith.constant dense<0.000000e+00> : vector<1x128xf32>
    %19 = tpu.matmul %15, %18, %cst_13 {dimension_numbers = #tpu.dot_dimension_numbers<[1], [0], [0], [1], [0, 0, 1, 1], [], []>} : vector<1x512xf32>, vector<512x128xf32>, vector<1x128xf32> -> vector<1x128xf32>
    %20 = arith.addf %17, %19 : vector<1x128xf32>
    %c0_14 = arith.constant 0 : index
    %c0_15 = arith.constant 0 : index
    %21 = vector.load %arg4[%c0_14, %c0_15] : memref<1x128xf32, #tpu.memory_space<vmem>>, vector<1x128xf32>
    %22 = arith.addf %20, %21 : vector<1x128xf32>
    %cst_16 = arith.constant 0.000000e+00 : f32
    %23 = vector.broadcast %cst_16 : f32 to vector<1x128xf32>
    %24 = arith.maximumf %22, %23 : vector<1x128xf32>
    %c0_17 = arith.constant 0 : index
    %c0_18 = arith.constant 0 : index
    %25 = vector.load %arg5[%c0_17, %c0_18] : memref<128x64xf32, #tpu.memory_space<vmem>>, vector<128x64xf32>
    %cst_19 = arith.constant dense<0.000000e+00> : vector<1x64xf32>
    %26 = tpu.matmul %24, %25, %cst_19 {dimension_numbers = #tpu.dot_dimension_numbers<[1], [0], [0], [1], [0, 0, 1, 1], [], []>} : vector<1x128xf32>, vector<128x64xf32>, vector<1x64xf32> -> vector<1x64xf32>
    %c0_20 = arith.constant 0 : index
    %c0_21 = arith.constant 0 : index
    %27 = vector.load %arg6[%c0_20, %c0_21] : memref<1x64xf32, #tpu.memory_space<vmem>>, vector<1x64xf32>
    %28 = arith.addf %26, %27 : vector<1x64xf32>
    %cst_22 = arith.constant 0.000000e+00 : f32
    %29 = vector.broadcast %cst_22 : f32 to vector<1x64xf32>
    %30 = arith.maximumf %28, %29 : vector<1x64xf32>
    %c0_23 = arith.constant 0 : index
    %c0_24 = arith.constant 0 : index
    %31 = vector.load %arg7[%c0_23, %c0_24] : memref<64x8xf32, #tpu.memory_space<vmem>>, vector<64x8xf32>
    %cst_25 = arith.constant dense<0.000000e+00> : vector<1x8xf32>
    %32 = tpu.matmul %30, %31, %cst_25 {dimension_numbers = #tpu.dot_dimension_numbers<[1], [0], [0], [1], [0, 0, 1, 1], [], []>} : vector<1x64xf32>, vector<64x8xf32>, vector<1x8xf32> -> vector<1x8xf32>
    %c0_26 = arith.constant 0 : index
    %c0_27 = arith.constant 0 : index
    %33 = vector.load %arg8[%c0_26, %c0_27] : memref<1x8xf32, #tpu.memory_space<vmem>>, vector<1x8xf32>
    %34 = arith.addf %32, %33 : vector<1x8xf32>
    %cst_28 = arith.constant dense<0xFF800000> : vector<1xf32>
    %35 = vector.multi_reduction <maximumf>, %34, %cst_28 [1] : vector<1x8xf32> to vector<1xf32>
    %36 = vector.shape_cast %35 : vector<1xf32> to vector<1x1xf32>
    %37 = vector.broadcast %36 : vector<1x1xf32> to vector<1x8xf32>
    %38 = arith.subf %34, %37 : vector<1x8xf32>
    %39 = math.exp %38 : vector<1x8xf32>
    %cst_29 = arith.constant dense<0.000000e+00> : vector<1xf32>
    %40 = vector.multi_reduction <add>, %39, %cst_29 [1] : vector<1x8xf32> to vector<1xf32>
    %41 = vector.shape_cast %40 : vector<1xf32> to vector<1x1xf32>
    %42 = math.log %41 : vector<1x1xf32>
    %43 = vector.broadcast %42 : vector<1x1xf32> to vector<1x8xf32>
    %44 = arith.subf %38, %43 : vector<1x8xf32>
    %c0_30 = arith.constant 0 : index
    %c0_31 = arith.constant 0 : index
    %45 = vector.load %arg9[%c0_30, %c0_31] : memref<1x8xf32, #tpu.memory_space<vmem>>, vector<1x8xf32>
    tpu.vector_store %arg9[%c0_30, %c0_31], %44 {strides = array<i32>} : memref<1x8xf32, #tpu.memory_space<vmem>>, vector<1x8xf32>,
    return
  }
}

</mosaic_0001>

<llo_original>
// kernel: net_forward.6
$region0: #{net_forward.6}
  #allocation0 [shape = 'u32[]', space=smem, size = 0x4, offset = 0x4, fixed_abs, tag = 'smem constant byte address 0x4 - core index']
  #allocation1 [shape = 'u32[144,128]{1,0:T(1,128)}', space=vmem, size = 0x12000, scoped, tag = 'internal scratch']
  %s0 = inlined_call_operand.vmem [shape: f32[16,32], index: 0, kind: input, shape index: {}]
  %s1 = inlined_call_operand.vmem [shape: f32[16,32], index: 1, kind: input, shape index: {}]
  %s2 = inlined_call_operand.vmem [shape: bf16[32,128], index: 2, kind: input, shape index: {}]
  %s3 = inlined_call_operand.vmem [shape: f32[1,128], index: 3, kind: input, shape index: {}]
  %s4 = inlined_call_operand.vmem [shape: bf16[128,512], index: 4, kind: input, shape index: {}]
  %s5 = inlined_call_operand.vmem [shape: f32[1,512], index: 5, kind: input, shape index: {}]
  %s6 = inlined_call_operand.vmem [shape: f32[1,512], index: 6, kind: input, shape index: {}]
  %s7 = inlined_call_operand.vmem [shape: f32[16,512], index: 7, kind: output, shape index: {0}]
  %s8 = inlined_call_operand.vmem [shape: f32[16,1], index: 8, kind: output, shape index: {1}]
  %9 = xla_tuple %s7, %s8
  %s10 = sld [smem:[#allocation0]]
  $region46: #{net_forward.6} parent=0
    _
  %s12 = ssub.s32 1, %s10
  %s13 = scalar_select 0, %s12, %s10
  // Predicated region
  $region2: #{net_forward.6} parent=0 // pred_check
    _
  $region3: #{net_forward.6} parent=0 // pred_check_branch
    %15 = sbr.rel (0) target = $region5
  $region4: #{net_forward.6} parent=0 // pred_region
    _
  $region5: #{net_forward.6} parent=0 // pred_fallthru
    _
  // Predicated region
  $region6: #{net_forward.6} parent=0 // pred_check
    _
  $region7: #{net_forward.6} parent=0 // pred_check_branch
    %17 = sbr.rel (0) target = $region9
  $region8: #{net_forward.6} parent=0 // pred_region
    _
  $region9: #{net_forward.6} parent=0 // pred_fallthru
    _
  // Predicated region
  $region10: #{net_forward.6} parent=0 // pred_check
    _
  $region11: #{net_forward.6} parent=0 // pred_check_branch
    %19 = sbr.rel (0) target = $region13
  $region12: #{net_forward.6} parent=0 // pred_region
    _
  $region13: #{net_forward.6} parent=0 // pred_fallthru
    _
  // Predicated region
  $region14: #{net_forward.6} parent=0 // pred_check
    _
  $region15: #{net_forward.6} parent=0 // pred_check_branch
    %21 = sbr.rel (0) target = $region17
  $region16: #{net_forward.6} parent=0 // pred_region
    _
  $region17: #{net_forward.6} parent=0 // pred_fallthru
    _
  // Predicated region
  $region18: #{net_forward.6} parent=0 // pred_check
    _
  $region19: #{net_forward.6} parent=0 // pred_check_branch
    %23 = sbr.rel (0) target = $region21
  $region20: #{net_forward.6} parent=0 // pred_region
    _
  $region21: #{net_forward.6} parent=0 // pred_fallthru
    _
  // Predicated region
  $region22: #{net_forward.6} parent=0 // pred_check
    _
  $region23: #{net_forward.6} parent=0 // pred_check_branch
    %25 = sbr.rel (0) target = $region25
  $region24: #{net_forward.6} parent=0 // pred_region
    _
  $region25: #{net_forward.6} parent=0 // pred_fallthru
    _
  // Predicated region
  $region26: #{net_forward.6} parent=0 // pred_check
    _
  $region27: #{net_forward.6} parent=0 // pred_check_branch
    %27 = sbr.rel (0) target = $region29
  $region28: #{net_forward.6} parent=0 // pred_region
    _
  $region29: #{net_forward.6} parent=0 // pred_fallthru
    _
  %v29 = vld [vmem:[%s0] sm:$0xff]
  %v30 = vld [vmem:[%s0 + $0x8] sm:$0xff]
  %v31 = vld [vmem:[%s1] sm:$0xff]
  %v32 = vld [vmem:[%s1 + $0x8] sm:$0xff]
  %v33 = vadd.f32 %v29, %v31
  %v34 = vadd.f32 %v30, %v32
  %v35 = vpack.c.bf16 %v34, %v33
  %v36 = vld [vmem:[%s2] sm:$0xf]
  %v37 = vld [vmem:[%s2 + $0x4] sm:$0xf]
  %v38 = vld [vmem:[%s2 + $0x8] sm:$0xf]
  %v39 = vld [vmem:[%s2 + $0xc] sm:$0xf]
  %v40 = vld [vmem:[%s3] sm:$0x1]
  %v42 = vlaneseq
  %v43 = vshrl.u32 %v42, 7
  %v44 = vsub.s32 0, %v43
  %v45 = vrot.slane %v40, %v44
  %v51 = vunpack.c.l.b16 %v36
  %v52 = vunpack.c.l.b16 %v37
  %v53 = vunpack.c.l.b16 %v38
  %v54 = vunpack.c.l.b16 %v39
  %v55 = vpack.c.b16 %v52, %v51
  %v56 = vpack.c.b16 %v54, %v53
  %vm59 = vcmask 261120
  %v61 = vsel %vm59, %v35, 0
  %63 = vmatprep.subr.bf16.mxu0 0
  %64 = vmatpush1.bf16.msra.mxu0 %v55
  %65 = vmatprep.subr.bf16.mxu0 0
  %66 = vmatpush1.bf16.msra.mxu0 %v56
  %67 = vmatprep.subr.bf16.mxu0 0
  %68 = vmatpush1.bf16.msra.mxu0 0
  %69 = vmatprep.subr.bf16.mxu0 0
  %70 = vmatpush1.bf16.msra.mxu0 0
  %71 = vmatprep.subr.bf16.mxu0 0
  %72 = vmatpush1.bf16.msra.mxu0 0
  %73 = vmatprep.subr.bf16.mxu0 0
  %74 = vmatpush1.bf16.msra.mxu0 0
  %75 = vmatprep.subr.bf16.mxu0 0
  %76 = vmatpush1.bf16.msra.mxu0 0
  %77 = vmatprep.subr.bf16.mxu0 0
  %78 = vmatpush1.bf16.msra.mxu0 0
  %79 = vmatprep.subr.bf16.mxu0 0
  %80 = vmatpush1.bf16.msra.mxu0 0
  %81 = vmatprep.subr.bf16.mxu0 0
  %82 = vmatpush1.bf16.msra.mxu0 0
  %83 = vmatprep.subr.bf16.mxu0 0
  %84 = vmatpush1.bf16.msra.mxu0 0
  %85 = vmatprep.subr.bf16.mxu0 0
  %86 = vmatpush1.bf16.msra.mxu0 0
  %87 = vmatprep.subr.bf16.mxu0 0
  %88 = vmatpush1.bf16.msra.mxu0 0
  %89 = vmatprep.subr.bf16.mxu0 0
  %90 = vmatpush1.bf16.msra.mxu0 0
  %91 = vmatprep.subr.bf16.mxu0 0
  %92 = vmatpush1.bf16.msra.mxu0 0
  %93 = vmatprep.subr.bf16.mxu0 0
  %94 = vmatpush1.bf16.msra.mxu0 0
  %95 = vmatprep.mubr.bf16.mxu0 0
  %96 = vmatmul.mubr.bf16.gmra.mrb[0].mxu0 %v61
  %v97 = vpop.f32.mrb[0].mxu0
  %v98 = vadd.f32 %v45, %v97
  %v99 = vpop.f32.mrb[0].mxu0
  %v100 = vpop.f32.mrb[0].mxu0
  %v101 = vadd.f32 %v45, %v100
  %v102 = vpop.f32.mrb[0].mxu0
  %103 = vdwg.mxu0
  %v104 = vmax.f32 %v98, 0.0
  %v105 = vmax.f32 %v101, 0.0
  %v106 = vpack.c.bf16 %v105, %v104
  %v107 = vld [vmem:[%s4] sm:$0xff]
  %v108 = vld [vmem:[%s4 + $0x8] sm:$0xff]
  %v109 = vld [vmem:[%s4 + $0x10] sm:$0xff]
  %v110 = vld [vmem:[%s4 + $0x18] sm:$0xff]
  %v111 = vld [vmem:[%s4 + $0x20] sm:$0xff]
  %v112 = vld [vmem:[%s4 + $0x28] sm:$0xff]
  %v113 = vld [vmem:[%s4 + $0x30] sm:$0xff]
  %v114 = vld [vmem:[%s4 + $0x38] sm:$0xff]
  %v115 = vld [vmem:[%s4 + $0x40] sm:$0xff]
  %v116 = vld [vmem:[%s4 + $0x48] sm:$0xff]
  %v117 = vld [vmem:[%s4 + $0x50] sm:$0xff]
  %v118 = vld [vmem:[%s4 + $0x58] sm:$0xff]
  %v119 = vld [vmem:[%s4 + $0x60] sm:$0xff]
  %v120 = vld [vmem:[%s4 + $0x68] sm:$0xff]
  %v121 = vld [vmem:[%s4 + $0x70] sm:$0xff]
  %v122 = vld [vmem:[%s4 + $0x78] sm:$0xff]
  %v123 = vld [vmem:[%s4 + $0x80] sm:$0xff]
  %v124 = vld [vmem:[%s4 + $0x88] sm:$0xff]
  %v125 = vld [vmem:[%s4 + $0x90] sm:$0xff]
  %v126 = vld [vmem:[%s4 + $0x98] sm:$0xff]
  %v127 = vld [vmem:[%s4 + $0xa0] sm:$0xff]
  %v128 = vld [vmem:[%s4 + $0xa8] sm:$0xff]
  %v129 = vld [vmem:[%s4 + $0xb0] sm:$0xff]
  %v130 = vld [vmem:[%s4 + $0xb8] sm:$0xff]
  %v131 = vld [vmem:[%s4 + $0xc0] sm:$0xff]
  %v132 = vld [vmem:[%s4 + $0xc8] sm:$0xff]
  %v133 = vld [vmem:[%s4 + $0xd0] sm:$0xff]
  %v134 = vld [vmem:[%s4 + $0xd8] sm:$0xff]
  %v135 = vld [vmem:[%s4 + $0xe0] sm:$0xff]
  %v136 = vld [vmem:[%s4 + $0xe8] sm:$0xff]
  %v137 = vld [vmem:[%s4 + $0xf0] sm:$0xff]
  %v138 = vld [vmem:[%s4 + $0xf8] sm:$0xff]
  %v139 = vld [vmem:[%s5] sm:$0xf]
  %v141 = vlaneseq
  %v142 = vshrl.u32 %v141, 7
  %v143 = vsub.s32 0, %v142
  %v144 = vrot.slane %v139, %v143
  %v145 = vlaneseq
  %v146 = vshrl.u32 %v145, 7
  %v147 = vsub.s32 1, %v146
  %v148 = vrot.slane %v139, %v147
  %v149 = vlaneseq
  %v150 = vshrl.u32 %v149, 7
  %v151 = vsub.s32 2, %v150
  %v152 = vrot.slane %v139, %v151
  %v153 = vlaneseq
  %v154 = vshrl.u32 %v153, 7
  %v155 = vsub.s32 3, %v154
  %v156 = vrot.slane %v139, %v155
  %v193 = vunpack.c.l.b16 %v107
  %v194 = vunpack.c.h.b16 %v107
  %v195 = vunpack.c.l.b16 %v108
  %v196 = vunpack.c.h.b16 %v108
  %v197 = vunpack.c.l.b16 %v109
  %v198 = vunpack.c.h.b16 %v109
  %v199 = vunpack.c.l.b16 %v110
  %v200 = vunpack.c.h.b16 %v110
  %v201 = vunpack.c.l.b16 %v111
  %v202 = vunpack.c.h.b16 %v111
  %v203 = vunpack.c.l.b16 %v112
  %v204 = vunpack.c.h.b16 %v112
  %v205 = vunpack.c.l.b16 %v113
  %v206 = vunpack.c.h.b16 %v113
  %v207 = vunpack.c.l.b16 %v114
  %v208 = vunpack.c.h.b16 %v114
  %v209 = vunpack.c.l.b16 %v115
  %v210 = vunpack.c.h.b16 %v115
  %v211 = vunpack.c.l.b16 %v116
  %v212 = vunpack.c.h.b16 %v116
  %v213 = vunpack.c.l.b16 %v117
  %v214 = vunpack.c.h.b16 %v117
  %v215 = vunpack.c.l.b16 %v118
  %v216 = vunpack.c.h.b16 %v118
  %v217 = vunpack.c.l.b16 %v119
  %v218 = vunpack.c.h.b16 %v119
  %v219 = vunpack.c.l.b16 %v120
  %v220 = vunpack.c.h.b16 %v120
  %v221 = vunpack.c.l.b16 %v121
  %v222 = vunpack.c.h.b16 %v121
  %v223 = vunpack.c.l.b16 %v122
  %v224 = vunpack.c.h.b16 %v122
  %v225 = vunpack.c.l.b16 %v123
  %v226 = vunpack.c.h.b16 %v123
  %v227 = vunpack.c.l.b16 %v124
  %v228 = vunpack.c.h.b16 %v124
  %v229 = vunpack.c.l.b16 %v125
  %v230 = vunpack.c.h.b16 %v125
  %v231 = vunpack.c.l.b16 %v126
  %v232 = vunpack.c.h.b16 %v126
  %v233 = vunpack.c.l.b16 %v127
  %v234 = vunpack.c.h.b16 %v127
  %v235 = vunpack.c.l.b16 %v128
  %v236 = vunpack.c.h.b16 %v128
  %v237 = vunpack.c.l.b16 %v129
  %v238 = vunpack.c.h.b16 %v129
  %v239 = vunpack.c.l.b16 %v130
  %v240 = vunpack.c.h.b16 %v130
  %v241 = vunpack.c.l.b16 %v131
  %v242 = vunpack.c.h.b16 %v131
  %v243 = vunpack.c.l.b16 %v132
  %v244 = vunpack.c.h.b16 %v132
  %v245 = vunpack.c.l.b16 %v133
  %v246 = vunpack.c.h.b16 %v133
  %v247 = vunpack.c.l.b16 %v134
  %v248 = vunpack.c.h.b16 %v134
  %v249 = vunpack.c.l.b16 %v135
  %v250 = vunpack.c.h.b16 %v135
  %v251 = vunpack.c.l.b16 %v136
  %v252 = vunpack.c.h.b16 %v136
  %v253 = vunpack.c.l.b16 %v137
  %v254 = vunpack.c.h.b16 %v137
  %v255 = vunpack.c.l.b16 %v138
  %v256 = vunpack.c.h.b16 %v138
  %v257 = vpack.c.b16 %v197, %v193
  %v258 = vpack.c.b16 %v198, %v194
  %v259 = vpack.c.b16 %v199, %v195
  %v260 = vpack.c.b16 %v200, %v196
  %v261 = vpack.c.b16 %v205, %v201
  %v262 = vpack.c.b16 %v206, %v202
  %v263 = vpack.c.b16 %v207, %v203
  %v264 = vpack.c.b16 %v208, %v204
  %v265 = vpack.c.b16 %v213, %v209
  %v266 = vpack.c.b16 %v214, %v210
  %v267 = vpack.c.b16 %v215, %v211
  %v268 = vpack.c.b16 %v216, %v212
  %v269 = vpack.c.b16 %v221, %v217
  %v270 = vpack.c.b16 %v222, %v218
  %v271 = vpack.c.b16 %v223, %v219
  %v272 = vpack.c.b16 %v224, %v220
  %v273 = vpack.c.b16 %v229, %v225
  %v274 = vpack.c.b16 %v230, %v226
  %v275 = vpack.c.b16 %v231, %v227
  %v276 = vpack.c.b16 %v232, %v228
  %v277 = vpack.c.b16 %v237, %v233
  %v278 = vpack.c.b16 %v238, %v234
  %v279 = vpack.c.b16 %v239, %v235
  %v280 = vpack.c.b16 %v240, %v236
  %v281 = vpack.c.b16 %v245, %v241
  %v282 = vpack.c.b16 %v246, %v242
  %v283 = vpack.c.b16 %v247, %v243
  %v284 = vpack.c.b16 %v248, %v244
  %v285 = vpack.c.b16 %v253, %v249
  %v286 = vpack.c.b16 %v254, %v250
  %v287 = vpack.c.b16 %v255, %v251
  %v288 = vpack.c.b16 %v256, %v252
  %321 = vmatprep.subr.bf16.mxu0 %v258
  %322 = vmatpush1.bf16.msra.mxu0 %v257
  %323 = vmatprep.subr.bf16.mxu0 %v262
  %324 = vmatpush1.bf16.msra.mxu0 %v261
  %325 = vmatprep.subr.bf16.mxu0 %v266
  %326 = vmatpush1.bf16.msra.mxu0 %v265
  %327 = vmatprep.subr.bf16.mxu0 %v270
  %328 = vmatpush1.bf16.msra.mxu0 %v269
  %329 = vmatprep.subr.bf16.mxu0 %v274
  %330 = vmatpush1.bf16.msra.mxu0 %v273
  %331 = vmatprep.subr.bf16.mxu0 %v278
  %332 = vmatpush1.bf16.msra.mxu0 %v277
  %333 = vmatprep.subr.bf16.mxu0 %v282
  %334 = vmatpush1.bf16.msra.mxu0 %v281
  %335 = vmatprep.subr.bf16.mxu0 %v286
  %336 = vmatpush1.bf16.msra.mxu0 %v285
  %337 = vmatprep.subr.bf16.mxu0 0
  %338 = vmatpush1.bf16.msra.mxu0 0
  %339 = vmatprep.subr.bf16.mxu0 0
  %340 = vmatpush1.bf16.msra.mxu0 0
  %341 = vmatprep.subr.bf16.mxu0 0
  %342 = vmatpush1.bf16.msra.mxu0 0
  %343 = vmatprep.subr.bf16.mxu0 0
  %344 = vmatpush1.bf16.msra.mxu0 0
  %345 = vmatprep.subr.bf16.mxu0 0
  %346 = vmatpush1.bf16.msra.mxu0 0
  %347 = vmatprep.subr.bf16.mxu0 0
  %348 = vmatpush1.bf16.msra.mxu0 0
  %349 = vmatprep.subr.bf16.mxu0 0
  %350 = vmatpush1.bf16.msra.mxu0 0
  %351 = vmatprep.subr.bf16.mxu0 0
  %352 = vmatpush1.bf16.msra.mxu0 0
  %353 = vmatprep.mubr.bf16.mxu0 0
  %354 = vmatmul.mubr.bf16.gmra.mrb[0].mxu0 %v106
  %v355 = vpop.f32.mrb[0].mxu0
  %v356 = vadd.f32 %v144, %v355
  %v357 = vpop.f32.mrb[0].mxu0
  %v358 = vadd.f32 %v148, %v357
  %v359 = vpop.f32.mrb[0].mxu0
  %v360 = vadd.f32 %v144, %v359
  %v361 = vpop.f32.mrb[0].mxu0
  %v362 = vadd.f32 %v148, %v361
  %363 = vdwg.mxu0
  %364 = vmatprep.subr.bf16.mxu0 %v260
  %365 = vmatpush1.bf16.msra.mxu0 %v259
  %366 = vmatprep.subr.bf16.mxu0 %v264
  %367 = vmatpush1.bf16.msra.mxu0 %v263
  %368 = vmatprep.subr.bf16.mxu0 %v268
  %369 = vmatpush1.bf16.msra.mxu0 %v267
  %370 = vmatprep.subr.bf16.mxu0 %v272
  %371 = vmatpush1.bf16.msra.mxu0 %v271
  %372 = vmatprep.subr.bf16.mxu0 %v276
  %373 = vmatpush1.bf16.msra.mxu0 %v275
  %374 = vmatprep.subr.bf16.mxu0 %v280
  %375 = vmatpush1.bf16.msra.mxu0 %v279
  %376 = vmatprep.subr.bf16.mxu0 %v284
  %377 = vmatpush1.bf16.msra.mxu0 %v283
  %378 = vmatprep.subr.bf16.mxu0 %v288
  %379 = vmatpush1.bf16.msra.mxu0 %v287
  %380 = vmatprep.subr.bf16.mxu0 0
  %381 = vmatpush1.bf16.msra.mxu0 0
  %382 = vmatprep.subr.bf16.mxu0 0
  %383 = vmatpush1.bf16.msra.mxu0 0
  %384 = vmatprep.subr.bf16.mxu0 0
  %385 = vmatpush1.bf16.msra.mxu0 0
  %386 = vmatprep.subr.bf16.mxu0 0
  %387 = vmatpush1.bf16.msra.mxu0 0
  %388 = vmatprep.subr.bf16.mxu0 0
  %389 = vmatpush1.bf16.msra.mxu0 0
  %390 = vmatprep.subr.bf16.mxu0 0
  %391 = vmatpush1.bf16.msra.mxu0 0
  %392 = vmatprep.subr.bf16.mxu0 0
  %393 = vmatpush1.bf16.msra.mxu0 0
  %394 = vmatprep.subr.bf16.mxu0 0
  %395 = vmatpush1.bf16.msra.mxu0 0
  %396 = vmatprep.mubr.bf16.mxu0 0
  %397 = vmatmul.mubr.bf16.gmra.mrb[0].mxu0 %v106
  %v398 = vpop.f32.mrb[0].mxu0
  %v399 = vadd.f32 %v152, %v398
  %v400 = vpop.f32.mrb[0].mxu0
  %v401 = vadd.f32 %v156, %v400
  %v402 = vpop.f32.mrb[0].mxu0
  %v403 = vadd.f32 %v152, %v402
  %v404 = vpop.f32.mrb[0].mxu0
  %v405 = vadd.f32 %v156, %v404
  %406 = vdwg.mxu0
  %v407 = vmax.f32 %v356, 0.0
  %v408 = vmax.f32 %v358, 0.0
  %v409 = vmax.f32 %v399, 0.0
  %v410 = vmax.f32 %v401, 0.0
  %v411 = vmax.f32 %v360, 0.0
  %v412 = vmax.f32 %v362, 0.0
  %v413 = vmax.f32 %v403, 0.0
  %v414 = vmax.f32 %v405, 0.0
  %v415 = vld [vmem:[%s6] sm:$0xf]
  %v416 = vmul.f32 %v415, %v415
  %v418 = vlaneseq
  %v419 = vshrl.u32 %v418, 7
  %v420 = vsub.s32 0, %v419
  %v421 = vrot.slane %v416, %v420
  %v422 = vlaneseq
  %v423 = vshrl.u32 %v422, 7
  %v424 = vsub.s32 1, %v423
  %v425 = vrot.slane %v416, %v424
  %v426 = vlaneseq
  %v427 = vshrl.u32 %v426, 7
  %v428 = vsub.s32 2, %v427
  %v429 = vrot.slane %v416, %v428
  %v430 = vlaneseq
  %v431 = vshrl.u32 %v430, 7
  %v432 = vsub.s32 3, %v431
  %v433 = vrot.slane %v416, %v432
  %vm438 = vcmask 1040384
  %v439 = vsel %vm438, %v421, 0.0
  %v440 = vsel %vm438, %v425, 0.0
  %v441 = vadd.f32 %v439, %v440
  %v442 = vsel %vm438, %v429, 0.0
  %v443 = vadd.f32 %v441, %v442
  %v444 = vsel %vm438, %v433, 0.0
  %v445 = vadd.f32 %v443, %v444
  %446 = vadd.xlane.f32.xlu0 %v445
  %v447 = vpop.xlane.xlu0 %446
  %v448 = vrsqrt.pop %v447
  %v450 = vlaneseq
  %v451 = vshrl.u32 %v450, 7
  %v452 = vsub.s32 0, %v451
  %v453 = vrot.slane %v415, %v452
  %v454 = vlaneseq
  %v455 = vshrl.u32 %v454, 7
  %v456 = vsub.s32 1, %v455
  %v457 = vrot.slane %v415, %v456
  %v458 = vlaneseq
  %v459 = vshrl.u32 %v458, 7
  %v460 = vsub.s32 2, %v459
  %v461 = vrot.slane %v415, %v460
  %v462 = vlaneseq
  %v463 = vshrl.u32 %v462, 7
  %v464 = vsub.s32 3, %v463
  %v465 = vrot.slane %v415, %v464
  %v470 = vmul.f32 %v407, %v453
  %v471 = vmul.f32 %v408, %v457
  %v472 = vmul.f32 %v409, %v461
  %v473 = vmul.f32 %v410, %v465
  %v474 = vmul.f32 %v411, %v453
  %v475 = vmul.f32 %v412, %v457
  %v476 = vmul.f32 %v413, %v461
  %v477 = vmul.f32 %v414, %v465
  %v478 = vadd.f32 %v470, %v471
  %v479 = vadd.f32 %v478, %v472
  %v480 = vadd.f32 %v479, %v473
  %481 = vadd.xlane.f32.xlu0 %v480
  %v482 = vpop.xlane.xlu0 %481
  %v483 = vadd.f32 %v474, %v475
  %v484 = vadd.f32 %v483, %v476
  %v485 = vadd.f32 %v484, %v477
  %486 = vadd.xlane.f32.xlu0 %v485
  %v487 = vpop.xlane.xlu0 %486
  %v488 = vlaneseq
  %v489 = vshrl.u32 %v488, 7
  %v490 = vsub.s32 0, %v489
  %v491 = vrot.slane %v448, %v490
  %v492 = vmul.f32 %v482, %v491
  %v493 = vmul.f32 %v487, %v491
  %v494 = vtanh.pop %v492
  %v495 = vtanh.pop %v493
  %v496 = vmul.f32 %v407, %v494
  %v497 = vmul.f32 %v408, %v494
  %v498 = vmul.f32 %v409, %v494
  %v499 = vmul.f32 %v410, %v494
  %v500 = vmul.f32 %v411, %v495
  %v501 = vmul.f32 %v412, %v495
  %v502 = vmul.f32 %v413, %v495
  %v503 = vmul.f32 %v414, %v495
  %504 = vst [vmem:[%s7] sm:$0xff] %v496
  %505 = vst [vmem:[%s7 + $0x8] sm:$0xff] %v497
  %506 = vst [vmem:[%s7 + $0x10] sm:$0xff] %v498
  %507 = vst [vmem:[%s7 + $0x18] sm:$0xff] %v499
  %508 = vst [vmem:[%s7 + $0x20] sm:$0xff] %v500
  %509 = vst [vmem:[%s7 + $0x28] sm:$0xff] %v501
  %510 = vst [vmem:[%s7 + $0x30] sm:$0xff] %v502
  %511 = vst [vmem:[%s7 + $0x38] sm:$0xff] %v503
  %vm512 = vcmask 7168
  %513 = vst.msk [vmem:[%s8] sm:$0xff] %vm512, %v494
  %514 = vst.msk [vmem:[%s8 + $0x8] sm:$0xff] %vm512, %v495
  // Predicated region
  $region30: #{net_forward.6} parent=0 // pred_check
    _
  $region31: #{net_forward.6} parent=0 // pred_check_branch
    %516 = sbr.rel (0) target = $region33
  $region32: #{net_forward.6} parent=0 // pred_region
    _
  $region33: #{net_forward.6} parent=0 // pred_fallthru
    _
  // Predicated region
  $region34: #{net_forward.6} parent=0 // pred_check
    _
  $region35: #{net_forward.6} parent=0 // pred_check_branch
    %518 = sbr.rel (0) target = $region37
  $region36: #{net_forward.6} parent=0 // pred_region
    _
  $region37: #{net_forward.6} parent=0 // pred_fallthru
    _
  // Predicated region
  $region38: #{net_forward.6} parent=0 // pred_check
    _
  $region39: #{net_forward.6} parent=0 // pred_check_branch
    %520 = sbr.rel (0) target = $region41
  $region40: #{net_forward.6} parent=0 // pred_region
    _
  $region41: #{net_forward.6} parent=0 // pred_fallthru
    _
  // Predicated region
  $region42: #{net_forward.6} parent=0 // pred_check
    _
  $region43: #{net_forward.6} parent=0 // pred_check_branch
    %522 = sbr.rel (0) target = $region45
  $region44: #{net_forward.6} parent=0 // pred_region
    _
  $region45: #{net_forward.6} parent=0 // pred_fallthru
    _

// kernel: net_forward.5
$region0: #{net_forward.5}
  #allocation0 [shape = 'u32[]', space=smem, size = 0x4, offset = 0x4, fixed_abs, tag = 'smem constant byte address 0x4 - core index']
  #allocation1 [shape = 'u32[144,128]{1,0:T(1,128)}', space=vmem, size = 0x12000, scoped, tag = 'internal scratch']
  %s0 = inlined_call_operand.vmem [shape: bf16[32,128], index: 0, kind: input, shape index: {}]
  %s1 = inlined_call_operand.vmem [shape: f32[32,32], index: 1, kind: input, shape index: {}]
  %s2 = inlined_call_operand.vmem [shape: bf16[128,128], index: 2, kind: input, shape index: {}]
  %s3 = inlined_call_operand.vmem [shape: f32[1,128], index: 3, kind: input, shape index: {}]
  %s4 = inlined_call_operand.vmem [shape: bf16[128,32], index: 4, kind: input, shape index: {}]
  %s5 = inlined_call_operand.vmem [shape: f32[1,32], index: 5, kind: input, shape index: {}]
  %s6 = inlined_call_operand.vmem [shape: f32[32,32], index: 6, kind: output, shape index: {}]
  %s7 = sld [smem:[#allocation0]]
  $region34: #{net_forward.5} parent=0
    _
  %s9 = ssub.s32 1, %s7
  %s10 = scalar_select 0, %s9, %s7
  // Predicated region
  $region2: #{net_forward.5} parent=0 // pred_check
    _
  $region3: #{net_forward.5} parent=0 // pred_check_branch
    %12 = sbr.rel (0) target = $region5
  $region4: #{net_forward.5} parent=0 // pred_region
    _
  $region5: #{net_forward.5} parent=0 // pred_fallthru
    _
  // Predicated region
  $region6: #{net_forward.5} parent=0 // pred_check
    _
  $region7: #{net_forward.5} parent=0 // pred_check_branch
    %14 = sbr.rel (0) target = $region9
  $region8: #{net_forward.5} parent=0 // pred_region
    _
  $region9: #{net_forward.5} parent=0 // pred_fallthru
    _
  // Predicated region
  $region10: #{net_forward.5} parent=0 // pred_check
    _
  $region11: #{net_forward.5} parent=0 // pred_check_branch
    %16 = sbr.rel (0) target = $region13
  $region12: #{net_forward.5} parent=0 // pred_region
    _
  $region13: #{net_forward.5} parent=0 // pred_fallthru
    _
  // Predicated region
  $region14: #{net_forward.5} parent=0 // pred_check
    _
  $region15: #{net_forward.5} parent=0 // pred_check_branch
    %18 = sbr.rel (0) target = $region17
  $region16: #{net_forward.5} parent=0 // pred_region
    _
  $region17: #{net_forward.5} parent=0 // pred_fallthru
    _
  // Predicated region
  $region18: #{net_forward.5} parent=0 // pred_check
    _
  $region19: #{net_forward.5} parent=0 // pred_check_branch
    %20 = sbr.rel (0) target = $region21
  $region20: #{net_forward.5} parent=0 // pred_region
    _
  $region21: #{net_forward.5} parent=0 // pred_fallthru
    _
  // Predicated region
  $region22: #{net_forward.5} parent=0 // pred_check
    _
  $region23: #{net_forward.5} parent=0 // pred_check_branch
    %22 = sbr.rel (0) target = $region25
  $region24: #{net_forward.5} parent=0 // pred_region
    _
  $region25: #{net_forward.5} parent=0 // pred_fallthru
    _
  %v24 = vld [vmem:[%s0] sm:$0xf]
  %v25 = vld [vmem:[%s0 + $0x4] sm:$0xf]
  %v26 = vld [vmem:[%s0 + $0x8] sm:$0xf]
  %v27 = vld [vmem:[%s0 + $0xc] sm:$0xf]
  %v28 = vld [vmem:[%s2] sm:$0xf]
  %v29 = vld [vmem:[%s2 + $0x4] sm:$0xf]
  %v30 = vld [vmem:[%s2 + $0x8] sm:$0xf]
  %v31 = vld [vmem:[%s2 + $0xc] sm:$0xf]
  %v32 = vld [vmem:[%s2 + $0x10] sm:$0xf]
  %v33 = vld [vmem:[%s2 + $0x14] sm:$0xf]
  %v34 = vld [vmem:[%s2 + $0x18] sm:$0xf]
  %v35 = vld [vmem:[%s2 + $0x1c] sm:$0xf]
  %v36 = vld [vmem:[%s2 + $0x20] sm:$0xf]
  %v37 = vld [vmem:[%s2 + $0x24] sm:$0xf]
  %v38 = vld [vmem:[%s2 + $0x28] sm:$0xf]
  %v39 = vld [vmem:[%s2 + $0x2c] sm:$0xf]
  %v40 = vld [vmem:[%s2 + $0x30] sm:$0xf]
  %v41 = vld [vmem:[%s2 + $0x34] sm:$0xf]
  %v42 = vld [vmem:[%s2 + $0x38] sm:$0xf]
  %v43 = vld [vmem:[%s2 + $0x3c] sm:$0xf]
  %v44 = vld [vmem:[%s3] sm:$0x1]
  %v46 = vlaneseq
  %v47 = vshrl.u32 %v46, 7
  %v48 = vsub.s32 0, %v47
  %v49 = vrot.slane %v44, %v48
  %v55 = vunpack.c.l.b16 %v24
  %v56 = vunpack.c.l.b16 %v25
  %v57 = vunpack.c.l.b16 %v26
  %v58 = vunpack.c.l.b16 %v27
  %v59 = vpack.c.b16 %v56, %v55
  %v60 = vpack.c.b16 %v58, %v57
  %v79 = vunpack.c.l.b16 %v28
  %v80 = vunpack.c.l.b16 %v29
  %v81 = vunpack.c.l.b16 %v30
  %v82 = vunpack.c.l.b16 %v31
  %v83 = vunpack.c.l.b16 %v32
  %v84 = vunpack.c.l.b16 %v33
  %v85 = vunpack.c.l.b16 %v34
  %v86 = vunpack.c.l.b16 %v35
  %v87 = vunpack.c.l.b16 %v36
  %v88 = vunpack.c.l.b16 %v37
  %v89 = vunpack.c.l.b16 %v38
  %v90 = vunpack.c.l.b16 %v39
  %v91 = vunpack.c.l.b16 %v40
  %v92 = vunpack.c.l.b16 %v41
  %v93 = vunpack.c.l.b16 %v42
  %v94 = vunpack.c.l.b16 %v43
  %v95 = vpack.c.b16 %v80, %v79
  %v96 = vpack.c.b16 %v82, %v81
  %v97 = vpack.c.b16 %v84, %v83
  %v98 = vpack.c.b16 %v86, %v85
  %v99 = vpack.c.b16 %v88, %v87
  %v100 = vpack.c.b16 %v90, %v89
  %v101 = vpack.c.b16 %v92, %v91
  %v102 = vpack.c.b16 %v94, %v93
  %111 = vmatprep.subr.bf16.mxu0 0
  %112 = vmatpush1.bf16.msra.mxu0 %v95
  %113 = vmatprep.subr.bf16.mxu0 0
  %114 = vmatpush1.bf16.msra.mxu0 %v96
  %115 = vmatprep.subr.bf16.mxu0 0
  %116 = vmatpush1.bf16.msra.mxu0 %v97
  %117 = vmatprep.subr.bf16.mxu0 0
  %118 = vmatpush1.bf16.msra.mxu0 %v98
  %119 = vmatprep.subr.bf16.mxu0 0
  %120 = vmatpush1.bf16.msra.mxu0 %v99
  %121 = vmatprep.subr.bf16.mxu0 0
  %122 = vmatpush1.bf16.msra.mxu0 %v100
  %123 = vmatprep.subr.bf16.mxu0 0
  %124 = vmatpush1.bf16.msra.mxu0 %v101
  %125 = vmatprep.subr.bf16.mxu0 0
  %126 = vmatpush1.bf16.msra.mxu0 %v102
  %127 = vmatprep.subr.bf16.mxu0 0
  %128 = vmatpush1.bf16.msra.mxu0 0
  %129 = vmatprep.subr.bf16.mxu0 0
  %130 = vmatpush1.bf16.msra.mxu0 0
  %131 = vmatprep.subr.bf16.mxu0 0
  %132 = vmatpush1.bf16.msra.mxu0 0
  %133 = vmatprep.subr.bf16.mxu0 0
  %134 = vmatpush1.bf16.msra.mxu0 0
  %135 = vmatprep.subr.bf16.mxu0 0
  %136 = vmatpush1.bf16.msra.mxu0 0
  %137 = vmatprep.subr.bf16.mxu0 0
  %138 = vmatpush1.bf16.msra.mxu0 0
  %139 = vmatprep.subr.bf16.mxu0 0
  %140 = vmatpush1.bf16.msra.mxu0 0
  %141 = vmatprep.subr.bf16.mxu0 0
  %142 = vmatpush1.bf16.msra.mxu0 0
  %143 = vmatprep.mubr.bf16.mxu0 0
  %144 = vmatmul.mubr.bf16.gmra.mrb[0].mxu0 %v59
  %v145 = vpop.f32.mrb[0].mxu0
  %v146 = vadd.f32 %v49, %v145
  %v147 = vpop.f32.mrb[0].mxu0
  %v148 = vpop.f32.mrb[0].mxu0
  %v149 = vadd.f32 %v49, %v148
  %v150 = vpop.f32.mrb[0].mxu0
  %151 = vmatprep.mubr.bf16.mxu0 0
  %152 = vmatmul.mubr.bf16.gmra.mrb[0].mxu0 %v60
  %v153 = vpop.f32.mrb[0].mxu0
  %v154 = vadd.f32 %v49, %v153
  %v155 = vpop.f32.mrb[0].mxu0
  %v156 = vpop.f32.mrb[0].mxu0
  %v157 = vadd.f32 %v49, %v156
  %v158 = vpop.f32.mrb[0].mxu0
  %159 = vdwg.mxu0
  %v160 = vmax.f32 %v146, 0.0
  %v161 = vmax.f32 %v149, 0.0
  %v162 = vmax.f32 %v154, 0.0
  %v163 = vmax.f32 %v157, 0.0
  %v164 = vpack.c.bf16 %v161, %v160
  %v165 = vpack.c.bf16 %v163, %v162
  %v166 = vld [vmem:[%s4] sm:$0xf]
  %v167 = vld [vmem:[%s4 + $0x4] sm:$0xf]
  %v168 = vld [vmem:[%s4 + $0x8] sm:$0xf]
  %v169 = vld [vmem:[%s4 + $0xc] sm:$0xf]
  %v170 = vld [vmem:[%s4 + $0x10] sm:$0xf]
  %v171 = vld [vmem:[%s4 + $0x14] sm:$0xf]
  %v172 = vld [vmem:[%s4 + $0x18] sm:$0xf]
  %v173 = vld [vmem:[%s4 + $0x1c] sm:$0xf]
  %v174 = vld [vmem:[%s4 + $0x20] sm:$0xf]
  %v175 = vld [vmem:[%s4 + $0x24] sm:$0xf]
  %v176 = vld [vmem:[%s4 + $0x28] sm:$0xf]
  %v177 = vld [vmem:[%s4 + $0x2c] sm:$0xf]
  %v178 = vld [vmem:[%s4 + $0x30] sm:$0xf]
  %v179 = vld [vmem:[%s4 + $0x34] sm:$0xf]
  %v180 = vld [vmem:[%s4 + $0x38] sm:$0xf]
  %v181 = vld [vmem:[%s4 + $0x3c] sm:$0xf]
  %v182 = vld [vmem:[%s5] sm:$0x1]
  %v184 = vlaneseq
  %v185 = vshrl.u32 %v184, 7
  %v186 = vsub.s32 0, %v185
  %v187 = vrot.slane %v182, %v186
  %v205 = vunpack.c.l.b16 %v166
  %v206 = vunpack.c.l.b16 %v167
  %v207 = vunpack.c.l.b16 %v168
  %v208 = vunpack.c.l.b16 %v169
  %v209 = vunpack.c.l.b16 %v170
  %v210 = vunpack.c.l.b16 %v171
  %v211 = vunpack.c.l.b16 %v172
  %v212 = vunpack.c.l.b16 %v173
  %v213 = vunpack.c.l.b16 %v174
  %v214 = vunpack.c.l.b16 %v175
  %v215 = vunpack.c.l.b16 %v176
  %v216 = vunpack.c.l.b16 %v177
  %v217 = vunpack.c.l.b16 %v178
  %v218 = vunpack.c.l.b16 %v179
  %v219 = vunpack.c.l.b16 %v180
  %v220 = vunpack.c.l.b16 %v181
  %v221 = vpack.c.b16 %v206, %v205
  %v222 = vpack.c.b16 %v208, %v207
  %v223 = vpack.c.b16 %v210, %v209
  %v224 = vpack.c.b16 %v212, %v211
  %v225 = vpack.c.b16 %v214, %v213
  %v226 = vpack.c.b16 %v216, %v215
  %v227 = vpack.c.b16 %v218, %v217
  %v228 = vpack.c.b16 %v220, %v219
  %237 = vmatprep.subr.bf16.mxu0 0
  %238 = vmatpush1.bf16.msra.mxu0 %v221
  %239 = vmatprep.subr.bf16.mxu0 0
  %240 = vmatpush1.bf16.msra.mxu0 %v222
  %241 = vmatprep.subr.bf16.mxu0 0
  %242 = vmatpush1.bf16.msra.mxu0 %v223
  %243 = vmatprep.subr.bf16.mxu0 0
  %244 = vmatpush1.bf16.msra.mxu0 %v224
  %245 = vmatprep.subr.bf16.mxu0 0
  %246 = vmatpush1.bf16.msra.mxu0 %v225
  %247 = vmatprep.subr.bf16.mxu0 0
  %248 = vmatpush1.bf16.msra.mxu0 %v226
  %249 = vmatprep.subr.bf16.mxu0 0
  %250 = vmatpush1.bf16.msra.mxu0 %v227
  %251 = vmatprep.subr.bf16.mxu0 0
  %252 = vmatpush1.bf16.msra.mxu0 %v228
  %253 = vmatprep.subr.bf16.mxu0 0
  %254 = vmatpush1.bf16.msra.mxu0 0
  %255 = vmatprep.subr.bf16.mxu0 0
  %256 = vmatpush1.bf16.msra.mxu0 0
  %257 = vmatprep.subr.bf16.mxu0 0
  %258 = vmatpush1.bf16.msra.mxu0 0
  %259 = vmatprep.subr.bf16.mxu0 0
  %260 = vmatpush1.bf16.msra.mxu0 0
  %261 = vmatprep.subr.bf16.mxu0 0
  %262 = vmatpush1.bf16.msra.mxu0 0
  %263 = vmatprep.subr.bf16.mxu0 0
  %264 = vmatpush1.bf16.msra.mxu0 0
  %265 = vmatprep.subr.bf16.mxu0 0
  %266 = vmatpush1.bf16.msra.mxu0 0
  %267 = vmatprep.subr.bf16.mxu0 0
  %268 = vmatpush1.bf16.msra.mxu0 0
  %269 = vmatprep.mubr.bf16.mxu0 0
  %270 = vmatmul.mubr.bf16.gmra.mrb[0].mxu0 %v164
  %v271 = vpop.f32.mrb[0].mxu0
  %v272 = vadd.f32 %v187, %v271
  %v273 = vpop.f32.mrb[0].mxu0
  %v274 = vpop.f32.mrb[0].mxu0
  %v275 = vadd.f32 %v187, %v274
  %v276 = vpop.f32.mrb[0].mxu0
  %277 = vmatprep.mubr.bf16.mxu0 0
  %278 = vmatmul.mubr.bf16.gmra.mrb[0].mxu0 %v165
  %v279 = vpop.f32.mrb[0].mxu0
  %v280 = vadd.f32 %v187, %v279
  %v281 = vpop.f32.mrb[0].mxu0
  %v282 = vpop.f32.mrb[0].mxu0
  %v283 = vadd.f32 %v187, %v282
  %v284 = vpop.f32.mrb[0].mxu0
  %285 = vdwg.mxu0
  %v286 = vmax.f32 %v272, 0.0
  %v287 = vmax.f32 %v275, 0.0
  %v288 = vmax.f32 %v280, 0.0
  %v289 = vmax.f32 %v283, 0.0
  %v290 = vld [vmem:[%s1] sm:$0xff]
  %v291 = vld [vmem:[%s1 + $0x8] sm:$0xff]
  %v292 = vld [vmem:[%s1 + $0x10] sm:$0xff]
  %v293 = vld [vmem:[%s1 + $0x18] sm:$0xff]
  %v294 = vadd.f32 %v290, %v286
  %v295 = vadd.f32 %v291, %v287
  %v296 = vadd.f32 %v292, %v288
  %v297 = vadd.f32 %v293, %v289
  %v298 = vmax.f32 %v294, 0.0
  %v299 = vmax.f32 %v295, 0.0
  %v300 = vmax.f32 %v296, 0.0
  %v301 = vmax.f32 %v297, 0.0
  %vm302 = vcmask 261120
  %303 = vst.msk [vmem:[%s6] sm:$0xff] %vm302, %v298
  %304 = vst.msk [vmem:[%s6 + $0x8] sm:$0xff] %vm302, %v299
  %305 = vst.msk [vmem:[%s6 + $0x10] sm:$0xff] %vm302, %v300
  %306 = vst.msk [vmem:[%s6 + $0x18] sm:$0xff] %vm302, %v301
  // Predicated region
  $region26: #{net_forward.5} parent=0 // pred_check
    _
  $region27: #{net_forward.5} parent=0 // pred_check_branch
    %308 = sbr.rel (0) target = $region29
  $region28: #{net_forward.5} parent=0 // pred_region
    _
  $region29: #{net_forward.5} parent=0 // pred_fallthru
    _
  // Predicated region
  $region30: #{net_forward.5} parent=0 // pred_check
    _
  $region31: #{net_forward.5} parent=0 // pred_check_branch
    %310 = sbr.rel (0) target = $region33
  $region32: #{net_forward.5} parent=0 // pred_region
    _
  $region33: #{net_forward.5} parent=0 // pred_fallthru
    _

// kernel: net_forward.7
$region0: #{net_forward.7}
  #allocation0 [shape = 'u32[]', space=smem, size = 0x4, offset = 0x4, fixed_abs, tag = 'smem constant byte address 0x4 - core index']
  #allocation1 [shape = 'u32[144,128]{1,0:T(1,128)}', space=vmem, size = 0x12000, scoped, tag = 'internal scratch']
  %s0 = inlined_call_operand.vmem [shape: bf16[16,512], index: 0, kind: input, shape index: {}]
  %s1 = inlined_call_operand.vmem [shape: bf16[512,512], index: 1, kind: input, shape index: {}]
  %s2 = inlined_call_operand.vmem [shape: f32[512,8], index: 2, kind: input, shape index: {}]
  %s3 = inlined_call_operand.vmem [shape: f32[16,512], index: 3, kind: output, shape index: {0}]
  %s4 = inlined_call_operand.vmem [shape: f32[16,8], index: 4, kind: output, shape index: {1}]
  %5 = xla_tuple %s3, %s4
  %s6 = sld [smem:[#allocation0]]
  $region30: #{net_forward.7} parent=0
    _
  %s8 = ssub.s32 1, %s6
  %s9 = scalar_select 0, %s8, %s6
  // Predicated region
  $region2: #{net_forward.7} parent=0 // pred_check
    _
  $region3: #{net_forward.7} parent=0 // pred_check_branch
    %11 = sbr.rel (0) target = $region5
  $region4: #{net_forward.7} parent=0 // pred_region
    _
  $region5: #{net_forward.7} parent=0 // pred_fallthru
    _
  // Predicated region
  $region6: #{net_forward.7} parent=0 // pred_check
    _
  $region7: #{net_forward.7} parent=0 // pred_check_branch
    %13 = sbr.rel (0) target = $region9
  $region8: #{net_forward.7} parent=0 // pred_region
    _
  $region9: #{net_forward.7} parent=0 // pred_fallthru
    _
  // Predicated region
  $region10: #{net_forward.7} parent=0 // pred_check
    _
  $region11: #{net_forward.7} parent=0 // pred_check_branch
    %15 = sbr.rel (0) target = $region13
  $region12: #{net_forward.7} parent=0 // pred_region
    _
  $region13: #{net_forward.7} parent=0 // pred_fallthru
    _
  %v16 = vld [vmem:[%s0] sm:$0xff]
  %v17 = vld [vmem:[%s0 + $0x8] sm:$0xff]
  %v18 = vld [vmem:[%s0 + $0x10] sm:$0xff]
  %v19 = vld [vmem:[%s0 + $0x18] sm:$0xff]
  %v20 = vld [vmem:[%s1] sm:$0xff]
  %v21 = vld [vmem:[%s1 + $0x8] sm:$0xff]
  %v22 = vld [vmem:[%s1 + $0x10] sm:$0xff]
  %v23 = vld [vmem:[%s1 + $0x18] sm:$0xff]
  %v24 = vld [vmem:[%s1 + $0x20] sm:$0xff]
  %v25 = vld [vmem:[%s1 + $0x28] sm:$0xff]
  %v26 = vld [vmem:[%s1 + $0x30] sm:$0xff]
  %v27 = vld [vmem:[%s1 + $0x38] sm:$0xff]
  %v28 = vld [vmem:[%s1 + $0x40] sm:$0xff]
  %v29 = vld [vmem:[%s1 + $0x48] sm:$0xff]
  %v30 = vld [vmem:[%s1 + $0x50] sm:$0xff]
  %v31 = vld [vmem:[%s1 + $0x58] sm:$0xff]
  %v32 = vld [vmem:[%s1 + $0x60] sm:$0xff]
  %v33 = vld [vmem:[%s1 + $0x68] sm:$0xff]
  %v34 = vld [vmem:[%s1 + $0x70] sm:$0xff]
  %v35 = vld [vmem:[%s1 + $0x78] sm:$0xff]
  %v36 = vld [vmem:[%s1 + $0x80] sm:$0xff]
  %v37 = vld [vmem:[%s1 + $0x88] sm:$0xff]
  %v38 = vld [vmem:[%s1 + $0x90] sm:$0xff]
  %v39 = vld [vmem:[%s1 + $0x98] sm:$0xff]
  %v40 = vld [vmem:[%s1 + $0xa0] sm:$0xff]
  %v41 = vld [vmem:[%s1 + $0xa8] sm:$0xff]
  %v42 = vld [vmem:[%s1 + $0xb0] sm:$0xff]
  %v43 = vld [vmem:[%s1 + $0xb8] sm:$0xff]
  %v44 = vld [vmem:[%s1 + $0xc0] sm:$0xff]
  %v45 = vld [vmem:[%s1 + $0xc8] sm:$0xff]
  %v46 = vld [vmem:[%s1 + $0xd0] sm:$0xff]
  %v47 = vld [vmem:[%s1 + $0xd8] sm:$0xff]
  %v48 = vld [vmem:[%s1 + $0xe0] sm:$0xff]
  %v49 = vld [vmem:[%s1 + $0xe8] sm:$0xff]
  %v50 = vld [vmem:[%s1 + $0xf0] sm:$0xff]
  %v51 = vld [vmem:[%s1 + $0xf8] sm:$0xff]
  %v52 = vld [vmem:[%s1 + $0x100] sm:$0xff]
  %v53 = vld [vmem:[%s1 + $0x108] sm:$0xff]
  %v54 = vld [vmem:[%s1 + $0x110] sm:$0xff]
  %v55 = vld [vmem:[%s1 + $0x118] sm:$0xff]
  %v56 = vld [vmem:[%s1 + $0x120] sm:$0xff]
  %v57 = vld [vmem:[%s1 + $0x128] sm:$0xff]
  %v58 = vld [vmem:[%s1 + $0x130] sm:$0xff]
  %v59 = vld [vmem:[%s1 + $0x138] sm:$0xff]
  %v60 = vld [vmem:[%s1 + $0x140] sm:$0xff]
  %v61 = vld [vmem:[%s1 + $0x148] sm:$0xff]
  %v62 = vld [vmem:[%s1 + $0x150] sm:$0xff]
  %v63 = vld [vmem:[%s1 + $0x158] sm:$0xff]
  %v64 = vld [vmem:[%s1 + $0x160] sm:$0xff]
  %v65 = vld [vmem:[%s1 + $0x168] sm:$0xff]
  %v66 = vld [vmem:[%s1 + $0x170] sm:$0xff]
  %v67 = vld [vmem:[%s1 + $0x178] sm:$0xff]
  %v68 = vld [vmem:[%s1 + $0x180] sm:$0xff]
  %v69 = vld [vmem:[%s1 + $0x188] sm:$0xff]
  %v70 = vld [vmem:[%s1 + $0x190] sm:$0xff]
  %v71 = vld [vmem:[%s1 + $0x198] sm:$0xff]
  %v72 = vld [vmem:[%s1 + $0x1a0] sm:$0xff]
  %v73 = vld [vmem:[%s1 + $0x1a8] sm:$0xff]
  %v74 = vld [vmem:[%s1 + $0x1b0] sm:$0xff]
  %v75 = vld [vmem:[%s1 + $0x1b8] sm:$0xff]
  %v76 = vld [vmem:[%s1 + $0x1c0] sm:$0xff]
  %v77 = vld [vmem:[%s1 + $0x1c8] sm:$0xff]
  %v78 = vld [vmem:[%s1 + $0x1d0] sm:$0xff]
  %v79 = vld [vmem:[%s1 + $0x1d8] sm:$0xff]
  %v80 = vld [vmem:[%s1 + $0x1e0] sm:$0xff]
  %v81 = vld [vmem:[%s1 + $0x1e8] sm:$0xff]
  %v82 = vld [vmem:[%s1 + $0x1f0] sm:$0xff]
  %v83 = vld [vmem:[%s1 + $0x1f8] sm:$0xff]
  %v84 = vld [vmem:[%s1 + $0x200] sm:$0xff]
  %v85 = vld [vmem:[%s1 + $0x208] sm:$0xff]
  %v86 = vld [vmem:[%s1 + $0x210] sm:$0xff]
  %v87 = vld [vmem:[%s1 + $0x218] sm:$0xff]
  %v88 = vld [vmem:[%s1 + $0x220] sm:$0xff]
  %v89 = vld [vmem:[%s1 + $0x228] sm:$0xff]
  %v90 = vld [vmem:[%s1 + $0x230] sm:$0xff]
  %v91 = vld [vmem:[%s1 + $0x238] sm:$0xff]
  %v92 = vld [vmem:[%s1 + $0x240] sm:$0xff]
  %v93 = vld [vmem:[%s1 + $0x248] sm:$0xff]
  %v94 = vld [vmem:[%s1 + $0x250] sm:$0xff]
  %v95 = vld [vmem:[%s1 + $0x258] sm:$0xff]
  %v96 = vld [vmem:[%s1 + $0x260] sm:$0xff]
  %v97 = vld [vmem:[%s1 + $0x268] sm:$0xff]
  %v98 = vld [vmem:[%s1 + $0x270] sm:$0xff]
  %v99 = vld [vmem:[%s1 + $0x278] sm:$0xff]
  %v100 = vld [vmem:[%s1 + $0x280] sm:$0xff]
  %v101 = vld [vmem:[%s1 + $0x288] sm:$0xff]
  %v102 = vld [vmem:[%s1 + $0x290] sm:$0xff]
  %v103 = vld [vmem:[%s1 + $0x298] sm:$0xff]
  %v104 = vld [vmem:[%s1 + $0x2a0] sm:$0xff]
  %v105 = vld [vmem:[%s1 + $0x2a8] sm:$0xff]
  %v106 = vld [vmem:[%s1 + $0x2b0] sm:$0xff]
  %v107 = vld [vmem:[%s1 + $0x2b8] sm:$0xff]
  %v108 = vld [vmem:[%s1 + $0x2c0] sm:$0xff]
  %v109 = vld [vmem:[%s1 + $0x2c8] sm:$0xff]
  %v110 = vld [vmem:[%s1 + $0x2d0] sm:$0xff]
  %v111 = vld [vmem:[%s1 + $0x2d8] sm:$0xff]
  %v112 = vld [vmem:[%s1 + $0x2e0] sm:$0xff]
  %v113 = vld [vmem:[%s1 + $0x2e8] sm:$0xff]
  %v114 = vld [vmem:[%s1 + $0x2f0] sm:$0xff]
  %v115 = vld [vmem:[%s1 + $0x2f8] sm:$0xff]
  %v116 = vld [vmem:[%s1 + $0x300] sm:$0xff]
  %v117 = vld [vmem:[%s1 + $0x308] sm:$0xff]
  %v118 = vld [vmem:[%s1 + $0x310] sm:$0xff]
  %v119 = vld [vmem:[%s1 + $0x318] sm:$0xff]
  %v120 = vld [vmem:[%s1 + $0x320] sm:$0xff]
  %v121 = vld [vmem:[%s1 + $0x328] sm:$0xff]
  %v122 = vld [vmem:[%s1 + $0x330] sm:$0xff]
  %v123 = vld [vmem:[%s1 + $0x338] sm:$0xff]
  %v124 = vld [vmem:[%s1 + $0x340] sm:$0xff]
  %v125 = vld [vmem:[%s1 + $0x348] sm:$0xff]
  %v126 = vld [vmem:[%s1 + $0x350] sm:$0xff]
  %v127 = vld [vmem:[%s1 + $0x358] sm:$0xff]
  %v128 = vld [vmem:[%s1 + $0x360] sm:$0xff]
  %v129 = vld [vmem:[%s1 + $0x368] sm:$0xff]
  %v130 = vld [vmem:[%s1 + $0x370] sm:$0xff]
  %v131 = vld [vmem:[%s1 + $0x378] sm:$0xff]
  %v132 = vld [vmem:[%s1 + $0x380] sm:$0xff]
  %v133 = vld [vmem:[%s1 + $0x388] sm:$0xff]
  %v134 = vld [vmem:[%s1 + $0x390] sm:$0xff]
  %v135 = vld [vmem:[%s1 + $0x398] sm:$0xff]
  %v136 = vld [vmem:[%s1 + $0x3a0] sm:$0xff]
  %v137 = vld [vmem:[%s1 + $0x3a8] sm:$0xff]
  %v138 = vld [vmem:[%s1 + $0x3b0] sm:$0xff]
  %v139 = vld [vmem:[%s1 + $0x3b8] sm:$0xff]
  %v140 = vld [vmem:[%s1 + $0x3c0] sm:$0xff]
  %v141 = vld [vmem:[%s1 + $0x3c8] sm:$0xff]
  %v142 = vld [vmem:[%s1 + $0x3d0] sm:$0xff]
  %v143 = vld [vmem:[%s1 + $0x3d8] sm:$0xff]
  %v144 = vld [vmem:[%s1 + $0x3e0] sm:$0xff]
  %v145 = vld [vmem:[%s1 + $0x3e8] sm:$0xff]
  %v146 = vld [vmem:[%s1 + $0x3f0] sm:$0xff]
  %v147 = vld [vmem:[%s1 + $0x3f8] sm:$0xff]
  %v152 = vunpack.c.l.b16 %v16
  %v153 = vunpack.c.h.b16 %v16
  %v154 = vunpack.c.l.b16 %v17
  %v155 = vunpack.c.h.b16 %v17
  %v156 = vunpack.c.l.b16 %v18
  %v157 = vunpack.c.h.b16 %v18
  %v158 = vunpack.c.l.b16 %v19
  %v159 = vunpack.c.h.b16 %v19
  %v160 = vpack.c.b16 %v156, %v152
  %v161 = vpack.c.b16 %v157, %v153
  %v162 = vpack.c.b16 %v158, %v154
  %v163 = vpack.c.b16 %v159, %v155
  %v296 = vunpack.c.l.b16 %v20
  %v297 = vunpack.c.h.b16 %v20
  %v298 = vunpack.c.l.b16 %v21
  %v299 = vunpack.c.h.b16 %v21
  %v300 = vunpack.c.l.b16 %v22
  %v301 = vunpack.c.h.b16 %v22
  %v302 = vunpack.c.l.b16 %v23
  %v303 = vunpack.c.h.b16 %v23
  %v304 = vunpack.c.l.b16 %v24
  %v305 = vunpack.c.h.b16 %v24
  %v306 = vunpack.c.l.b16 %v25
  %v307 = vunpack.c.h.b16 %v25
  %v308 = vunpack.c.l.b16 %v26
  %v309 = vunpack.c.h.b16 %v26
  %v310 = vunpack.c.l.b16 %v27
  %v311 = vunpack.c.h.b16 %v27
  %v312 = vunpack.c.l.b16 %v28
  %v313 = vunpack.c.h.b16 %v28
  %v314 = vunpack.c.l.b16 %v29
  %v315 = vunpack.c.h.b16 %v29
  %v316 = vunpack.c.l.b16 %v30
  %v317 = vunpack.c.h.b16 %v30
  %v318 = vunpack.c.l.b16 %v31
  %v319 = vunpack.c.h.b16 %v31
  %v320 = vunpack.c.l.b16 %v32
  %v321 = vunpack.c.h.b16 %v32
  %v322 = vunpack.c.l.b16 %v33
  %v323 = vunpack.c.h.b16 %v33
  %v324 = vunpack.c.l.b16 %v34
  %v325 = vunpack.c.h.b16 %v34
  %v326 = vunpack.c.l.b16 %v35
  %v327 = vunpack.c.h.b16 %v35
  %v328 = vunpack.c.l.b16 %v36
  %v329 = vunpack.c.h.b16 %v36
  %v330 = vunpack.c.l.b16 %v37
  %v331 = vunpack.c.h.b16 %v37
  %v332 = vunpack.c.l.b16 %v38
  %v333 = vunpack.c.h.b16 %v38
  %v334 = vunpack.c.l.b16 %v39
  %v335 = vunpack.c.h.b16 %v39
  %v336 = vunpack.c.l.b16 %v40
  %v337 = vunpack.c.h.b16 %v40
  %v338 = vunpack.c.l.b16 %v41
  %v339 = vunpack.c.h.b16 %v41
  %v340 = vunpack.c.l.b16 %v42
  %v341 = vunpack.c.h.b16 %v42
  %v342 = vunpack.c.l.b16 %v43
  %v343 = vunpack.c.h.b16 %v43
  %v344 = vunpack.c.l.b16 %v44
  %v345 = vunpack.c.h.b16 %v44
  %v346 = vunpack.c.l.b16 %v45
  %v347 = vunpack.c.h.b16 %v45
  %v348 = vunpack.c.l.b16 %v46
  %v349 = vunpack.c.h.b16 %v46
  %v350 = vunpack.c.l.b16 %v47
  %v351 = vunpack.c.h.b16 %v47
  %v352 = vunpack.c.l.b16 %v48
  %v353 = vunpack.c.h.b16 %v48
  %v354 = vunpack.c.l.b16 %v49
  %v355 = vunpack.c.h.b16 %v49
  %v356 = vunpack.c.l.b16 %v50
  %v357 = vunpack.c.h.b16 %v50
  %v358 = vunpack.c.l.b16 %v51
  %v359 = vunpack.c.h.b16 %v51
  %v360 = vunpack.c.l.b16 %v52
  %v361 = vunpack.c.h.b16 %v52
  %v362 = vunpack.c.l.b16 %v53
  %v363 = vunpack.c.h.b16 %v53
  %v364 = vunpack.c.l.b16 %v54
  %v365 = vunpack.c.h.b16 %v54
  %v366 = vunpack.c.l.b16 %v55
  %v367 = vunpack.c.h.b16 %v55
  %v368 = vunpack.c.l.b16 %v56
  %v369 = vunpack.c.h.b16 %v56
  %v370 = vunpack.c.l.b16 %v57
  %v371 = vunpack.c.h.b16 %v57
  %v372 = vunpack.c.l.b16 %v58
  %v373 = vunpack.c.h.b16 %v58
  %v374 = vunpack.c.l.b16 %v59
  %v375 = vunpack.c.h.b16 %v59
  %v376 = vunpack.c.l.b16 %v60
  %v377 = vunpack.c.h.b16 %v60
  %v378 = vunpack.c.l.b16 %v61
  %v379 = vunpack.c.h.b16 %v61
  %v380 = vunpack.c.l.b16 %v62
  %v381 = vunpack.c.h.b16 %v62
  %v382 = vunpack.c.l.b16 %v63
  %v383 = vunpack.c.h.b16 %v63
  %v384 = vunpack.c.l.b16 %v64
  %v385 = vunpack.c.h.b16 %v64
  %v386 = vunpack.c.l.b16 %v65
  %v387 = vunpack.c.h.b16 %v65
  %v388 = vunpack.c.l.b16 %v66
  %v389 = vunpack.c.h.b16 %v66
  %v390 = vunpack.c.l.b16 %v67
  %v391 = vunpack.c.h.b16 %v67
  %v392 = vunpack.c.l.b16 %v68
  %v393 = vunpack.c.h.b16 %v68
  %v394 = vunpack.c.l.b16 %v69
  %v395 = vunpack.c.h.b16 %v69
  %v396 = vunpack.c.l.b16 %v70
  %v397 = vunpack.c.h.b16 %v70
  %v398 = vunpack.c.l.b16 %v71
  %v399 = vunpack.c.h.b16 %v71
  %v400 = vunpack.c.l.b16 %v72
  %v401 = vunpack.c.h.b16 %v72
  %v402 = vunpack.c.l.b16 %v73
  %v403 = vunpack.c.h.b16 %v73
  %v404 = vunpack.c.l.b16 %v74
  %v405 = vunpack.c.h.b16 %v74
  %v406 = vunpack.c.l.b16 %v75
  %v407 = vunpack.c.h.b16 %v75
  %v408 = vunpack.c.l.b16 %v76
  %v409 = vunpack.c.h.b16 %v76
  %v410 = vunpack.c.l.b16 %v77
  %v411 = vunpack.c.h.b16 %v77
  %v412 = vunpack.c.l.b16 %v78
  %v413 = vunpack.c.h.b16 %v78
  %v414 = vunpack.c.l.b16 %v79
  %v415 = vunpack.c.h.b16 %v79
  %v416 = vunpack.c.l.b16 %v80
  %v417 = vunpack.c.h.b16 %v80
  %v418 = vunpack.c.l.b16 %v81
  %v419 = vunpack.c.h.b16 %v81
  %v420 = vunpack.c.l.b16 %v82
  %v421 = vunpack.c.h.b16 %v82
  %v422 = vunpack.c.l.b16 %v83
  %v423 = vunpack.c.h.b16 %v83
  %v424 = vunpack.c.l.b16 %v84
  %v425 = vunpack.c.h.b16 %v84
  %v426 = vunpack.c.l.b16 %v85
  %v427 = vunpack.c.h.b16 %v85
  %v428 = vunpack.c.l.b16 %v86
  %v429 = vunpack.c.h.b16 %v86
  %v430 = vunpack.c.l.b16 %v87
  %v431 = vunpack.c.h.b16 %v87
  %v432 = vunpack.c.l.b16 %v88
  %v433 = vunpack.c.h.b16 %v88
  %v434 = vunpack.c.l.b16 %v89
  %v435 = vunpack.c.h.b16 %v89
  %v436 = vunpack.c.l.b16 %v90
  %v437 = vunpack.c.h.b16 %v90
  %v438 = vunpack.c.l.b16 %v91
  %v439 = vunpack.c.h.b16 %v91
  %v440 = vunpack.c.l.b16 %v92
  %v441 = vunpack.c.h.b16 %v92
  %v442 = vunpack.c.l.b16 %v93
  %v443 = vunpack.c.h.b16 %v93
  %v444 = vunpack.c.l.b16 %v94
  %v445 = vunpack.c.h.b16 %v94
  %v446 = vunpack.c.l.b16 %v95
  %v447 = vunpack.c.h.b16 %v95
  %v448 = vunpack.c.l.b16 %v96
  %v449 = vunpack.c.h.b16 %v96
  %v450 = vunpack.c.l.b16 %v97
  %v451 = vunpack.c.h.b16 %v97
  %v452 = vunpack.c.l.b16 %v98
  %v453 = vunpack.c.h.b16 %v98
  %v454 = vunpack.c.l.b16 %v99
  %v455 = vunpack.c.h.b16 %v99
  %v456 = vunpack.c.l.b16 %v100
  %v457 = vunpack.c.h.b16 %v100
  %v458 = vunpack.c.l.b16 %v101
  %v459 = vunpack.c.h.b16 %v101
  %v460 = vunpack.c.l.b16 %v102
  %v461 = vunpack.c.h.b16 %v102
  %v462 = vunpack.c.l.b16 %v103
  %v463 = vunpack.c.h.b16 %v103
  %v464 = vunpack.c.l.b16 %v104
  %v465 = vunpack.c.h.b16 %v104
  %v466 = vunpack.c.l.b16 %v105
  %v467 = vunpack.c.h.b16 %v105
  %v468 = vunpack.c.l.b16 %v106
  %v469 = vunpack.c.h.b16 %v106
  %v470 = vunpack.c.l.b16 %v107
  %v471 = vunpack.c.h.b16 %v107
  %v472 = vunpack.c.l.b16 %v108
  %v473 = vunpack.c.h.b16 %v108
  %v474 = vunpack.c.l.b16 %v109
  %v475 = vunpack.c.h.b16 %v109
  %v476 = vunpack.c.l.b16 %v110
  %v477 = vunpack.c.h.b16 %v110
  %v478 = vunpack.c.l.b16 %v111
  %v479 = vunpack.c.h.b16 %v111
  %v480 = vunpack.c.l.b16 %v112
  %v481 = vunpack.c.h.b16 %v112
  %v482 = vunpack.c.l.b16 %v113
  %v483 = vunpack.c.h.b16 %v113
  %v484 = vunpack.c.l.b16 %v114
  %v485 = vunpack.c.h.b16 %v114
  %v486 = vunpack.c.l.b16 %v115
  %v487 = vunpack.c.h.b16 %v115
  %v488 = vunpack.c.l.b16 %v116
  %v489 = vunpack.c.h.b16 %v116
  %v490 = vunpack.c.l.b16 %v117
  %v491 = vunpack.c.h.b16 %v117
  %v492 = vunpack.c.l.b16 %v118
  %v493 = vunpack.c.h.b16 %v118
  %v494 = vunpack.c.l.b16 %v119
  %v495 = vunpack.c.h.b16 %v119
  %v496 = vunpack.c.l.b16 %v120
  %v497 = vunpack.c.h.b16 %v120
  %v498 = vunpack.c.l.b16 %v121
  %v499 = vunpack.c.h.b16 %v121
  %v500 = vunpack.c.l.b16 %v122
  %v501 = vunpack.c.h.b16 %v122
  %v502 = vunpack.c.l.b16 %v123
  %v503 = vunpack.c.h.b16 %v123
  %v504 = vunpack.c.l.b16 %v124
  %v505 = vunpack.c.h.b16 %v124
  %v506 = vunpack.c.l.b16 %v125
  %v507 = vunpack.c.h.b16 %v125
  %v508 = vunpack.c.l.b16 %v126
  %v509 = vunpack.c.h.b16 %v126
  %v510 = vunpack.c.l.b16 %v127
  %v511 = vunpack.c.h.b16 %v127
  %v512 = vunpack.c.l.b16 %v128
  %v513 = vunpack.c.h.b16 %v128
  %v514 = vunpack.c.l.b16 %v129
  %v515 = vunpack.c.h.b16 %v129
  %v516 = vunpack.c.l.b16 %v130
  %v517 = vunpack.c.h.b16 %v130
  %v518 = vunpack.c.l.b16 %v131
  %v519 = vunpack.c.h.b16 %v131
  %v520 = vunpack.c.l.b16 %v132
  %v521 = vunpack.c.h.b16 %v132
  %v522 = vunpack.c.l.b16 %v133
  %v523 = vunpack.c.h.b16 %v133
  %v524 = vunpack.c.l.b16 %v134
  %v525 = vunpack.c.h.b16 %v134
  %v526 = vunpack.c.l.b16 %v135
  %v527 = vunpack.c.h.b16 %v135
  %v528 = vunpack.c.l.b16 %v136
  %v529 = vunpack.c.h.b16 %v136
  %v530 = vunpack.c.l.b16 %v137
  %v531 = vunpack.c.h.b16 %v137
  %v532 = vunpack.c.l.b16 %v138
  %v533 = vunpack.c.h.b16 %v138
  %v534 = vunpack.c.l.b16 %v139
  %v535 = vunpack.c.h.b16 %v139
  %v536 = vunpack.c.l.b16 %v140
  %v537 = vunpack.c.h.b16 %v140
  %v538 = vunpack.c.l.b16 %v141
  %v539 = vunpack.c.h.b16 %v141
  %v540 = vunpack.c.l.b16 %v142
  %v541 = vunpack.c.h.b16 %v142
  %v542 = vunpack.c.l.b16 %v143
  %v543 = vunpack.c.h.b16 %v143
  %v544 = vunpack.c.l.b16 %v144
  %v545 = vunpack.c.h.b16 %v144
  %v546 = vunpack.c.l.b16 %v145
  %v547 = vunpack.c.h.b16 %v145
  %v548 = vunpack.c.l.b16 %v146
  %v549 = vunpack.c.h.b16 %v146
  %v550 = vunpack.c.l.b16 %v147
  %v551 = vunpack.c.h.b16 %v147
  %v552 = vpack.c.b16 %v300, %v296
  %v553 = vpack.c.b16 %v301, %v297
  %v554 = vpack.c.b16 %v302, %v298
  %v555 = vpack.c.b16 %v303, %v299
  %v556 = vpack.c.b16 %v308, %v304
  %v557 = vpack.c.b16 %v309, %v305
  %v558 = vpack.c.b16 %v310, %v306
  %v559 = vpack.c.b16 %v311, %v307
  %v560 = vpack.c.b16 %v316, %v312
  %v561 = vpack.c.b16 %v317, %v313
  %v562 = vpack.c.b16 %v318, %v314
  %v563 = vpack.c.b16 %v319, %v315
  %v564 = vpack.c.b16 %v324, %v320
  %v565 = vpack.c.b16 %v325, %v321
  %v566 = vpack.c.b16 %v326, %v322
  %v567 = vpack.c.b16 %v327, %v323
  %v568 = vpack.c.b16 %v332, %v328
  %v569 = vpack.c.b16 %v333, %v329
  %v570 = vpack.c.b16 %v334, %v330
  %v571 = vpack.c.b16 %v335, %v331
  %v572 = vpack.c.b16 %v340, %v336
  %v573 = vpack.c.b16 %v341, %v337
  %v574 = vpack.c.b16 %v342, %v338
  %v575 = vpack.c.b16 %v343, %v339
  %v576 = vpack.c.b16 %v348, %v344
  %v577 = vpack.c.b16 %v349, %v345
  %v578 = vpack.c.b16 %v350, %v346
  %v579 = vpack.c.b16 %v351, %v347
  %v580 = vpack.c.b16 %v356, %v352
  %v581 = vpack.c.b16 %v357, %v353
  %v582 = vpack.c.b16 %v358, %v354
  %v583 = vpack.c.b16 %v359, %v355
  %v584 = vpack.c.b16 %v364, %v360
  %v585 = vpack.c.b16 %v365, %v361
  %v586 = vpack.c.b16 %v366, %v362
  %v587 = vpack.c.b16 %v367, %v363
  %v588 = vpack.c.b16 %v372, %v368
  %v589 = vpack.c.b16 %v373, %v369
  %v590 = vpack.c.b16 %v374, %v370
  %v591 = vpack.c.b16 %v375, %v371
  %v592 = vpack.c.b16 %v380, %v376
  %v593 = vpack.c.b16 %v381, %v377
  %v594 = vpack.c.b16 %v382, %v378
  %v595 = vpack.c.b16 %v383, %v379
  %v596 = vpack.c.b16 %v388, %v384
  %v597 = vpack.c.b16 %v389, %v385
  %v598 = vpack.c.b16 %v390, %v386
  %v599 = vpack.c.b16 %v391, %v387
  %v600 = vpack.c.b16 %v396, %v392
  %v601 = vpack.c.b16 %v397, %v393
  %v602 = vpack.c.b16 %v398, %v394
  %v603 = vpack.c.b16 %v399, %v395
  %v604 = vpack.c.b16 %v404, %v400
  %v605 = vpack.c.b16 %v405, %v401
  %v606 = vpack.c.b16 %v406, %v402
  %v607 = vpack.c.b16 %v407, %v403
  %v608 = vpack.c.b16 %v412, %v408
  %v609 = vpack.c.b16 %v413, %v409
  %v610 = vpack.c.b16 %v414, %v410
  %v611 = vpack.c.b16 %v415, %v411
  %v612 = vpack.c.b16 %v420, %v416
  %v613 = vpack.c.b16 %v421, %v417
  %v614 = vpack.c.b16 %v422, %v418
  %v615 = vpack.c.b16 %v423, %v419
  %v616 = vpack.c.b16 %v428, %v424
  %v617 = vpack.c.b16 %v429, %v425
  %v618 = vpack.c.b16 %v430, %v426
  %v619 = vpack.c.b16 %v431, %v427
  %v620 = vpack.c.b16 %v436, %v432
  %v621 = vpack.c.b16 %v437, %v433
  %v622 = vpack.c.b16 %v438, %v434
  %v623 = vpack.c.b16 %v439, %v435
  %v624 = vpack.c.b16 %v444, %v440
  %v625 = vpack.c.b16 %v445, %v441
  %v626 = vpack.c.b16 %v446, %v442
  %v627 = vpack.c.b16 %v447, %v443
  %v628 = vpack.c.b16 %v452, %v448
  %v629 = vpack.c.b16 %v453, %v449
  %v630 = vpack.c.b16 %v454, %v450
  %v631 = vpack.c.b16 %v455, %v451
  %v632 = vpack.c.b16 %v460, %v456
  %v633 = vpack.c.b16 %v461, %v457
  %v634 = vpack.c.b16 %v462, %v458
  %v635 = vpack.c.b16 %v463, %v459
  %v636 = vpack.c.b16 %v468, %v464
  %v637 = vpack.c.b16 %v469, %v465
  %v638 = vpack.c.b16 %v470, %v466
  %v639 = vpack.c.b16 %v471, %v467
  %v640 = vpack.c.b16 %v476, %v472
  %v641 = vpack.c.b16 %v477, %v473
  %v642 = vpack.c.b16 %v478, %v474
  %v643 = vpack.c.b16 %v479, %v475
  %v644 = vpack.c.b16 %v484, %v480
  %v645 = vpack.c.b16 %v485, %v481
  %v646 = vpack.c.b16 %v486, %v482
  %v647 = vpack.c.b16 %v487, %v483
  %v648 = vpack.c.b16 %v492, %v488
  %v649 = vpack.c.b16 %v493, %v489
  %v650 = vpack.c.b16 %v494, %v490
  %v651 = vpack.c.b16 %v495, %v491
  %v652 = vpack.c.b16 %v500, %v496
  %v653 = vpack.c.b16 %v501, %v497
  %v654 = vpack.c.b16 %v502, %v498
  %v655 = vpack.c.b16 %v503, %v499
  %v656 = vpack.c.b16 %v508, %v504
  %v657 = vpack.c.b16 %v509, %v505
  %v658 = vpack.c.b16 %v510, %v506
  %v659 = vpack.c.b16 %v511, %v507
  %v660 = vpack.c.b16 %v516, %v512
  %v661 = vpack.c.b16 %v517, %v513
  %v662 = vpack.c.b16 %v518, %v514
  %v663 = vpack.c.b16 %v519, %v515
  %v664 = vpack.c.b16 %v524, %v520
  %v665 = vpack.c.b16 %v525, %v521
  %v666 = vpack.c.b16 %v526, %v522
  %v667 = vpack.c.b16 %v527, %v523
  %v668 = vpack.c.b16 %v532, %v528
  %v669 = vpack.c.b16 %v533, %v529
  %v670 = vpack.c.b16 %v534, %v530
  %v671 = vpack.c.b16 %v535, %v531
  %v672 = vpack.c.b16 %v540, %v536
  %v673 = vpack.c.b16 %v541, %v537
  %v674 = vpack.c.b16 %v542, %v538
  %v675 = vpack.c.b16 %v543, %v539
  %v676 = vpack.c.b16 %v548, %v544
  %v677 = vpack.c.b16 %v549, %v545
  %v678 = vpack.c.b16 %v550, %v546
  %v679 = vpack.c.b16 %v551, %v547
  %808 = vmatprep.subr.bf16.mxu0 %v553
  %809 = vmatpush1.bf16.msra.mxu0 %v552
  %810 = vmatprep.subr.bf16.mxu0 %v557
  %811 = vmatpush1.bf16.msra.mxu0 %v556
  %812 = vmatprep.subr.bf16.mxu0 %v561
  %813 = vmatpush1.bf16.msra.mxu0 %v560
  %814 = vmatprep.subr.bf16.mxu0 %v565
  %815 = vmatpush1.bf16.msra.mxu0 %v564
  %816 = vmatprep.subr.bf16.mxu0 %v569
  %817 = vmatpush1.bf16.msra.mxu0 %v568
  %818 = vmatprep.subr.bf16.mxu0 %v573
  %819 = vmatpush1.bf16.msra.mxu0 %v572
  %820 = vmatprep.subr.bf16.mxu0 %v577
  %821 = vmatpush1.bf16.msra.mxu0 %v576
  %822 = vmatprep.subr.bf16.mxu0 %v581
  %823 = vmatpush1.bf16.msra.mxu0 %v580
  %824 = vmatprep.subr.bf16.mxu0 %v585
  %825 = vmatpush1.bf16.msra.mxu0 %v584
  %826 = vmatprep.subr.bf16.mxu0 %v589
  %827 = vmatpush1.bf16.msra.mxu0 %v588
  %828 = vmatprep.subr.bf16.mxu0 %v593
  %829 = vmatpush1.bf16.msra.mxu0 %v592
  %830 = vmatprep.subr.bf16.mxu0 %v597
  %831 = vmatpush1.bf16.msra.mxu0 %v596
  %832 = vmatprep.subr.bf16.mxu0 %v601
  %833 = vmatpush1.bf16.msra.mxu0 %v600
  %834 = vmatprep.subr.bf16.mxu0 %v605
  %835 = vmatpush1.bf16.msra.mxu0 %v604
  %836 = vmatprep.subr.bf16.mxu0 %v609
  %837 = vmatpush1.bf16.msra.mxu0 %v608
  %838 = vmatprep.subr.bf16.mxu0 %v613
  %839 = vmatpush1.bf16.msra.mxu0 %v612
  %840 = vmatprep.mubr.bf16.mxu0 %v161
  %841 = vmatmul.mubr.bf16.gmra.mrb[0].mxu0 %v160
  %v842 = vpop.f32.mrb[0].mxu0
  %v843 = vadd.f32 0.0, %v842
  %v844 = vpop.f32.mrb[0].mxu0
  %v845 = vadd.f32 0.0, %v844
  %v846 = vpop.f32.mrb[0].mxu0
  %v847 = vadd.f32 0.0, %v846
  %v848 = vpop.f32.mrb[0].mxu0
  %v849 = vadd.f32 0.0, %v848
  %850 = vdwg.mxu0
  %851 = vmatprep.subr.bf16.mxu0 %v617
  %852 = vmatpush1.bf16.msra.mxu0 %v616
  %853 = vmatprep.subr.bf16.mxu0 %v621
  %854 = vmatpush1.bf16.msra.mxu0 %v620
  %855 = vmatprep.subr.bf16.mxu0 %v625
  %856 = vmatpush1.bf16.msra.mxu0 %v624
  %857 = vmatprep.subr.bf16.mxu0 %v629
  %858 = vmatpush1.bf16.msra.mxu0 %v628
  %859 = vmatprep.subr.bf16.mxu0 %v633
  %860 = vmatpush1.bf16.msra.mxu0 %v632
  %861 = vmatprep.subr.bf16.mxu0 %v637
  %862 = vmatpush1.bf16.msra.mxu0 %v636
  %863 = vmatprep.subr.bf16.mxu0 %v641
  %864 = vmatpush1.bf16.msra.mxu0 %v640
  %865 = vmatprep.subr.bf16.mxu0 %v645
  %866 = vmatpush1.bf16.msra.mxu0 %v644
  %867 = vmatprep.subr.bf16.mxu0 %v649
  %868 = vmatpush1.bf16.msra.mxu0 %v648
  %869 = vmatprep.subr.bf16.mxu0 %v653
  %870 = vmatpush1.bf16.msra.mxu0 %v652
  %871 = vmatprep.subr.bf16.mxu0 %v657
  %872 = vmatpush1.bf16.msra.mxu0 %v656
  %873 = vmatprep.subr.bf16.mxu0 %v661
  %874 = vmatpush1.bf16.msra.mxu0 %v660
  %875 = vmatprep.subr.bf16.mxu0 %v665
  %876 = vmatpush1.bf16.msra.mxu0 %v664
  %877 = vmatprep.subr.bf16.mxu0 %v669
  %878 = vmatpush1.bf16.msra.mxu0 %v668
  %879 = vmatprep.subr.bf16.mxu0 %v673
  %880 = vmatpush1.bf16.msra.mxu0 %v672
  %881 = vmatprep.subr.bf16.mxu0 %v677
  %882 = vmatpush1.bf16.msra.mxu0 %v676
  %883 = vmatprep.mubr.bf16.mxu0 %v163
  %884 = vmatmul.mubr.bf16.gmra.mrb[0].mxu0 %v162
  %v885 = vpop.f32.mrb[0].mxu0
  %v886 = vadd.f32 %v843, %v885
  %v887 = vpop.f32.mrb[0].mxu0
  %v888 = vadd.f32 %v845, %v887
  %v889 = vpop.f32.mrb[0].mxu0
  %v890 = vadd.f32 %v847, %v889
  %v891 = vpop.f32.mrb[0].mxu0
  %v892 = vadd.f32 %v849, %v891
  %893 = vdwg.mxu0
  %894 = vmatprep.subr.bf16.mxu0 %v555
  %895 = vmatpush1.bf16.msra.mxu0 %v554
  %896 = vmatprep.subr.bf16.mxu0 %v559
  %897 = vmatpush1.bf16.msra.mxu0 %v558
  %898 = vmatprep.subr.bf16.mxu0 %v563
  %899 = vmatpush1.bf16.msra.mxu0 %v562
  %900 = vmatprep.subr.bf16.mxu0 %v567
  %901 = vmatpush1.bf16.msra.mxu0 %v566
  %902 = vmatprep.subr.bf16.mxu0 %v571
  %903 = vmatpush1.bf16.msra.mxu0 %v570
  %904 = vmatprep.subr.bf16.mxu0 %v575
  %905 = vmatpush1.bf16.msra.mxu0 %v574
  %906 = vmatprep.subr.bf16.mxu0 %v579
  %907 = vmatpush1.bf16.msra.mxu0 %v578
  %908 = vmatprep.subr.bf16.mxu0 %v583
  %909 = vmatpush1.bf16.msra.mxu0 %v582
  %910 = vmatprep.subr.bf16.mxu0 %v587
  %911 = vmatpush1.bf16.msra.mxu0 %v586
  %912 = vmatprep.subr.bf16.mxu0 %v591
  %913 = vmatpush1.bf16.msra.mxu0 %v590
  %914 = vmatprep.subr.bf16.mxu0 %v595
  %915 = vmatpush1.bf16.msra.mxu0 %v594
  %916 = vmatprep.subr.bf16.mxu0 %v599
  %917 = vmatpush1.bf16.msra.mxu0 %v598
  %918 = vmatprep.subr.bf16.mxu0 %v603
  %919 = vmatpush1.bf16.msra.mxu0 %v602
  %920 = vmatprep.subr.bf16.mxu0 %v607
  %921 = vmatpush1.bf16.msra.mxu0 %v606
  %922 = vmatprep.subr.bf16.mxu0 %v611
  %923 = vmatpush1.bf16.msra.mxu0 %v610
  %924 = vmatprep.subr.bf16.mxu0 %v615
  %925 = vmatpush1.bf16.msra.mxu0 %v614
  %926 = vmatprep.mubr.bf16.mxu0 %v161
  %927 = vmatmul.mubr.bf16.gmra.mrb[0].mxu0 %v160
  %v928 = vpop.f32.mrb[0].mxu0
  %v929 = vadd.f32 0.0, %v928
  %v930 = vpop.f32.mrb[0].mxu0
  %v931 = vadd.f32 0.0, %v930
  %v932 = vpop.f32.mrb[0].mxu0
  %v933 = vadd.f32 0.0, %v932
  %v934 = vpop.f32.mrb[0].mxu0
  %v935 = vadd.f32 0.0, %v934
  %936 = vdwg.mxu0
  %937 = vmatprep.subr.bf16.mxu0 %v619
  %938 = vmatpush1.bf16.msra.mxu0 %v618
  %939 = vmatprep.subr.bf16.mxu0 %v623
  %940 = vmatpush1.bf16.msra.mxu0 %v622
  %941 = vmatprep.subr.bf16.mxu0 %v627
  %942 = vmatpush1.bf16.msra.mxu0 %v626
  %943 = vmatprep.subr.bf16.mxu0 %v631
  %944 = vmatpush1.bf16.msra.mxu0 %v630
  %945 = vmatprep.subr.bf16.mxu0 %v635
  %946 = vmatpush1.bf16.msra.mxu0 %v634
  %947 = vmatprep.subr.bf16.mxu0 %v639
  %948 = vmatpush1.bf16.msra.mxu0 %v638
  %949 = vmatprep.subr.bf16.mxu0 %v643
  %950 = vmatpush1.bf16.msra.mxu0 %v642
  %951 = vmatprep.subr.bf16.mxu0 %v647
  %952 = vmatpush1.bf16.msra.mxu0 %v646
  %953 = vmatprep.subr.bf16.mxu0 %v651
  %954 = vmatpush1.bf16.msra.mxu0 %v650
  %955 = vmatprep.subr.bf16.mxu0 %v655
  %956 = vmatpush1.bf16.msra.mxu0 %v654
  %957 = vmatprep.subr.bf16.mxu0 %v659
  %958 = vmatpush1.bf16.msra.mxu0 %v658
  %959 = vmatprep.subr.bf16.mxu0 %v663
  %960 = vmatpush1.bf16.msra.mxu0 %v662
  %961 = vmatprep.subr.bf16.mxu0 %v667
  %962 = vmatpush1.bf16.msra.mxu0 %v666
  %963 = vmatprep.subr.bf16.mxu0 %v671
  %964 = vmatpush1.bf16.msra.mxu0 %v670
  %965 = vmatprep.subr.bf16.mxu0 %v675
  %966 = vmatpush1.bf16.msra.mxu0 %v674
  %967 = vmatprep.subr.bf16.mxu0 %v679
  %968 = vmatpush1.bf16.msra.mxu0 %v678
  %969 = vmatprep.mubr.bf16.mxu0 %v163
  %970 = vmatmul.mubr.bf16.gmra.mrb[0].mxu0 %v162
  %v971 = vpop.f32.mrb[0].mxu0
  %v972 = vadd.f32 %v929, %v971
  %v973 = vpop.f32.mrb[0].mxu0
  %v974 = vadd.f32 %v931, %v973
  %v975 = vpop.f32.mrb[0].mxu0
  %v976 = vadd.f32 %v933, %v975
  %v977 = vpop.f32.mrb[0].mxu0
  %v978 = vadd.f32 %v935, %v977
  %979 = vdwg.mxu0
  %980 = vst [vmem:[%s3] sm:$0xff] %v886
  %981 = vst [vmem:[%s3 + $0x8] sm:$0xff] %v888
  %982 = vst [vmem:[%s3 + $0x10] sm:$0xff] %v972
  %983 = vst [vmem:[%s3 + $0x18] sm:$0xff] %v974
  %984 = vst [vmem:[%s3 + $0x20] sm:$0xff] %v890
  %985 = vst [vmem:[%s3 + $0x28] sm:$0xff] %v892
  %986 = vst [vmem:[%s3 + $0x30] sm:$0xff] %v976
  %987 = vst [vmem:[%s3 + $0x38] sm:$0xff] %v978
  %v988 = vld [vmem:[%s2] sm:$0xff]
  %v989 = vld [vmem:[%s2 + $0x8] sm:$0xff]
  %v990 = vld [vmem:[%s2 + $0x10] sm:$0xff]
  %v991 = vld [vmem:[%s2 + $0x18] sm:$0xff]
  %v992 = vld [vmem:[%s2 + $0x20] sm:$0xff]
  %v993 = vld [vmem:[%s2 + $0x28] sm:$0xff]
  %v994 = vld [vmem:[%s2 + $0x30] sm:$0xff]
  %v995 = vld [vmem:[%s2 + $0x38] sm:$0xff]
  %v996 = vld [vmem:[%s2 + $0x40] sm:$0xff]
  %v997 = vld [vmem:[%s2 + $0x48] sm:$0xff]
  %v998 = vld [vmem:[%s2 + $0x50] sm:$0xff]
  %v999 = vld [vmem:[%s2 + $0x58] sm:$0xff]
  %v1000 = vld [vmem:[%s2 + $0x60] sm:$0xff]
  %v1001 = vld [vmem:[%s2 + $0x68] sm:$0xff]
  %v1002 = vld [vmem:[%s2 + $0x70] sm:$0xff]
  %v1003 = vld [vmem:[%s2 + $0x78] sm:$0xff]
  %v1004 = vld [vmem:[%s2 + $0x80] sm:$0xff]
  %v1005 = vld [vmem:[%s2 + $0x88] sm:$0xff]
  %v1006 = vld [vmem:[%s2 + $0x90] sm:$0xff]
  %v1007 = vld [vmem:[%s2 + $0x98] sm:$0xff]
  %v1008 = vld [vmem:[%s2 + $0xa0] sm:$0xff]
  %v1009 = vld [vmem:[%s2 + $0xa8] sm:$0xff]
  %v1010 = vld [vmem:[%s2 + $0xb0] sm:$0xff]
  %v1011 = vld [vmem:[%s2 + $0xb8] sm:$0xff]
  %v1012 = vld [vmem:[%s2 + $0xc0] sm:$0xff]
  %v1013 = vld [vmem:[%s2 + $0xc8] sm:$0xff]
  %v1014 = vld [vmem:[%s2 + $0xd0] sm:$0xff]
  %v1015 = vld [vmem:[%s2 + $0xd8] sm:$0xff]
  %v1016 = vld [vmem:[%s2 + $0xe0] sm:$0xff]
  %v1017 = vld [vmem:[%s2 + $0xe8] sm:$0xff]
  %v1018 = vld [vmem:[%s2 + $0xf0] sm:$0xff]
  %v1019 = vld [vmem:[%s2 + $0xf8] sm:$0xff]
  %v1020 = vld [vmem:[%s2 + $0x100] sm:$0xff]
  %v1021 = vld [vmem:[%s2 + $0x108] sm:$0xff]
  %v1022 = vld [vmem:[%s2 + $0x110] sm:$0xff]
  %v1023 = vld [vmem:[%s2 + $0x118] sm:$0xff]
  %v1024 = vld [vmem:[%s2 + $0x120] sm:$0xff]
  %v1025 = vld [vmem:[%s2 + $0x128] sm:$0xff]
  %v1026 = vld [vmem:[%s2 + $0x130] sm:$0xff]
  %v1027 = vld [vmem:[%s2 + $0x138] sm:$0xff]
  %v1028 = vld [vmem:[%s2 + $0x140] sm:$0xff]
  %v1029 = vld [vmem:[%s2 + $0x148] sm:$0xff]
  %v1030 = vld [vmem:[%s2 + $0x150] sm:$0xff]
  %v1031 = vld [vmem:[%s2 + $0x158] sm:$0xff]
  %v1032 = vld [vmem:[%s2 + $0x160] sm:$0xff]
  %v1033 = vld [vmem:[%s2 + $0x168] sm:$0xff]
  %v1034 = vld [vmem:[%s2 + $0x170] sm:$0xff]
  %v1035 = vld [vmem:[%s2 + $0x178] sm:$0xff]
  %v1036 = vld [vmem:[%s2 + $0x180] sm:$0xff]
  %v1037 = vld [vmem:[%s2 + $0x188] sm:$0xff]
  %v1038 = vld [vmem:[%s2 + $0x190] sm:$0xff]
  %v1039 = vld [vmem:[%s2 + $0x198] sm:$0xff]
  %v1040 = vld [vmem:[%s2 + $0x1a0] sm:$0xff]
  %v1041 = vld [vmem:[%s2 + $0x1a8] sm:$0xff]
  %v1042 = vld [vmem:[%s2 + $0x1b0] sm:$0xff]
  %v1043 = vld [vmem:[%s2 + $0x1b8] sm:$0xff]
  %v1044 = vld [vmem:[%s2 + $0x1c0] sm:$0xff]
  %v1045 = vld [vmem:[%s2 + $0x1c8] sm:$0xff]
  %v1046 = vld [vmem:[%s2 + $0x1d0] sm:$0xff]
  %v1047 = vld [vmem:[%s2 + $0x1d8] sm:$0xff]
  %v1048 = vld [vmem:[%s2 + $0x1e0] sm:$0xff]
  %v1049 = vld [vmem:[%s2 + $0x1e8] sm:$0xff]
  %v1050 = vld [vmem:[%s2 + $0x1f0] sm:$0xff]
  %v1051 = vld [vmem:[%s2 + $0x1f8] sm:$0xff]
  %1052 = vmatprep.subr.mxu0 0.0
  %1053 = vmatpush1.msra.mxu0 %v988
  %1054 = vmatprep.subr.mxu0 0.0
  %1055 = vmatpush1.msra.mxu0 %v989
  %1056 = vmatprep.subr.mxu0 0.0
  %1057 = vmatpush1.msra.mxu0 %v990
  %1058 = vmatprep.subr.mxu0 0.0
  %1059 = vmatpush1.msra.mxu0 %v991
  %1060 = vmatprep.subr.mxu0 0.0
  %1061 = vmatpush1.msra.mxu0 %v992
  %1062 = vmatprep.subr.mxu0 0.0
  %1063 = vmatpush1.msra.mxu0 %v993
  %1064 = vmatprep.subr.mxu0 0.0
  %1065 = vmatpush1.msra.mxu0 %v994
  %1066 = vmatprep.subr.mxu0 0.0
  %1067 = vmatpush1.msra.mxu0 %v995
  %1068 = vmatprep.subr.mxu0 0.0
  %1069 = vmatpush1.msra.mxu0 %v996
  %1070 = vmatprep.subr.mxu0 0.0
  %1071 = vmatpush1.msra.mxu0 %v997
  %1072 = vmatprep.subr.mxu0 0.0
  %1073 = vmatpush1.msra.mxu0 %v998
  %1074 = vmatprep.subr.mxu0 0.0
  %1075 = vmatpush1.msra.mxu0 %v999
  %1076 = vmatprep.subr.mxu0 0.0
  %1077 = vmatpush1.msra.mxu0 %v1000
  %1078 = vmatprep.subr.mxu0 0.0
  %1079 = vmatpush1.msra.mxu0 %v1001
  %1080 = vmatprep.subr.mxu0 0.0
  %1081 = vmatpush1.msra.mxu0 %v1002
  %1082 = vmatprep.subr.mxu0 0.0
  %1083 = vmatpush1.msra.mxu0 %v1003
  %1084 = vmatprep.subr.mxu0 0.0
  %1085 = vmatpush1.msra.mxu0 %v1004
  %1086 = vmatprep.subr.mxu0 0.0
  %1087 = vmatpush1.msra.mxu0 %v1005
  %1088 = vmatprep.subr.mxu0 0.0
  %1089 = vmatpush1.msra.mxu0 %v1006
  %1090 = vmatprep.subr.mxu0 0.0
  %1091 = vmatpush1.msra.mxu0 %v1007
  %1092 = vmatprep.subr.mxu0 0.0
  %1093 = vmatpush1.msra.mxu0 %v1008
  %1094 = vmatprep.subr.mxu0 0.0
  %1095 = vmatpush1.msra.mxu0 %v1009
  %1096 = vmatprep.subr.mxu0 0.0
  %1097 = vmatpush1.msra.mxu0 %v1010
  %1098 = vmatprep.subr.mxu0 0.0
  %1099 = vmatpush1.msra.mxu0 %v1011
  %1100 = vmatprep.subr.mxu0 0.0
  %1101 = vmatpush1.msra.mxu0 %v1012
  %1102 = vmatprep.subr.mxu0 0.0
  %1103 = vmatpush1.msra.mxu0 %v1013
  %1104 = vmatprep.subr.mxu0 0.0
  %1105 = vmatpush1.msra.mxu0 %v1014
  %1106 = vmatprep.subr.mxu0 0.0
  %1107 = vmatpush1.msra.mxu0 %v1015
  %1108 = vmatprep.subr.mxu0 0.0
  %1109 = vmatpush1.msra.mxu0 %v1016
  %1110 = vmatprep.subr.mxu0 0.0
  %1111 = vmatpush1.msra.mxu0 %v1017
  %1112 = vmatprep.subr.mxu0 0.0
  %1113 = vmatpush1.msra.mxu0 %v1018
  %1114 = vmatprep.subr.mxu0 0.0
  %1115 = vmatpush1.msra.mxu0 %v1019
  %1116 = vmatprep.mubr.f32.mxu0 %v888
  %1117 = vmatmul.mubr.f32.gmra.mrb[0].mxu0 %v886
  %v1118 = vpop.f32.mrb[0].mxu0
  %v1119 = vadd.f32 0.0, %v1118
  %v1120 = vpop.f32.mrb[0].mxu0
  %1121 = vmatprep.mubr.f32.mxu0 %v892
  %1122 = vmatmul.mubr.f32.gmra.mrb[0].mxu0 %v890
  %v1123 = vpop.f32.mrb[0].mxu0
  %v1124 = vadd.f32 0.0, %v1123
  %v1125 = vpop.f32.mrb[0].mxu0
  %1126 = vdwg.mxu0
  %1127 = vmatprep.subr.mxu0 0.0
  %1128 = vmatpush1.msra.mxu0 %v1020
  %1129 = vmatprep.subr.mxu0 0.0
  %1130 = vmatpush1.msra.mxu0 %v1021
  %1131 = vmatprep.subr.mxu0 0.0
  %1132 = vmatpush1.msra.mxu0 %v1022
  %1133 = vmatprep.subr.mxu0 0.0
  %1134 = vmatpush1.msra.mxu0 %v1023
  %1135 = vmatprep.subr.mxu0 0.0
  %1136 = vmatpush1.msra.mxu0 %v1024
  %1137 = vmatprep.subr.mxu0 0.0
  %1138 = vmatpush1.msra.mxu0 %v1025
  %1139 = vmatprep.subr.mxu0 0.0
  %1140 = vmatpush1.msra.mxu0 %v1026
  %1141 = vmatprep.subr.mxu0 0.0
  %1142 = vmatpush1.msra.mxu0 %v1027
  %1143 = vmatprep.subr.mxu0 0.0
  %1144 = vmatpush1.msra.mxu0 %v1028
  %1145 = vmatprep.subr.mxu0 0.0
  %1146 = vmatpush1.msra.mxu0 %v1029
  %1147 = vmatprep.subr.mxu0 0.0
  %1148 = vmatpush1.msra.mxu0 %v1030
  %1149 = vmatprep.subr.mxu0 0.0
  %1150 = vmatpush1.msra.mxu0 %v1031
  %1151 = vmatprep.subr.mxu0 0.0
  %1152 = vmatpush1.msra.mxu0 %v1032
  %1153 = vmatprep.subr.mxu0 0.0
  %1154 = vmatpush1.msra.mxu0 %v1033
  %1155 = vmatprep.subr.mxu0 0.0
  %1156 = vmatpush1.msra.mxu0 %v1034
  %1157 = vmatprep.subr.mxu0 0.0
  %1158 = vmatpush1.msra.mxu0 %v1035
  %1159 = vmatprep.subr.mxu0 0.0
  %1160 = vmatpush1.msra.mxu0 %v1036
  %1161 = vmatprep.subr.mxu0 0.0
  %1162 = vmatpush1.msra.mxu0 %v1037
  %1163 = vmatprep.subr.mxu0 0.0
  %1164 = vmatpush1.msra.mxu0 %v1038
  %1165 = vmatprep.subr.mxu0 0.0
  %1166 = vmatpush1.msra.mxu0 %v1039
  %1167 = vmatprep.subr.mxu0 0.0
  %1168 = vmatpush1.msra.mxu0 %v1040
  %1169 = vmatprep.subr.mxu0 0.0
  %1170 = vmatpush1.msra.mxu0 %v1041
  %1171 = vmatprep.subr.mxu0 0.0
  %1172 = vmatpush1.msra.mxu0 %v1042
  %1173 = vmatprep.subr.mxu0 0.0
  %1174 = vmatpush1.msra.mxu0 %v1043
  %1175 = vmatprep.subr.mxu0 0.0
  %1176 = vmatpush1.msra.mxu0 %v1044
  %1177 = vmatprep.subr.mxu0 0.0
  %1178 = vmatpush1.msra.mxu0 %v1045
  %1179 = vmatprep.subr.mxu0 0.0
  %1180 = vmatpush1.msra.mxu0 %v1046
  %1181 = vmatprep.subr.mxu0 0.0
  %1182 = vmatpush1.msra.mxu0 %v1047
  %1183 = vmatprep.subr.mxu0 0.0
  %1184 = vmatpush1.msra.mxu0 %v1048
  %1185 = vmatprep.subr.mxu0 0.0
  %1186 = vmatpush1.msra.mxu0 %v1049
  %1187 = vmatprep.subr.mxu0 0.0
  %1188 = vmatpush1.msra.mxu0 %v1050
  %1189 = vmatprep.subr.mxu0 0.0
  %1190 = vmatpush1.msra.mxu0 %v1051
  %1191 = vmatprep.mubr.f32.mxu0 %v974
  %1192 = vmatmul.mubr.f32.gmra.mrb[0].mxu0 %v972
  %v1193 = vpop.f32.mrb[0].mxu0
  %v1194 = vadd.f32 %v1119, %v1193
  %v1195 = vpop.f32.mrb[0].mxu0
  %1196 = vmatprep.mubr.f32.mxu0 %v978
  %1197 = vmatmul.mubr.f32.gmra.mrb[0].mxu0 %v976
  %v1198 = vpop.f32.mrb[0].mxu0
  %v1199 = vadd.f32 %v1124, %v1198
  %v1200 = vpop.f32.mrb[0].mxu0
  %1201 = vdwg.mxu0
  %vm1202 = vcmask 64512
  %1203 = vst.msk [vmem:[%s4] sm:$0xff] %vm1202, %v1194
  %1204 = vst.msk [vmem:[%s4 + $0x8] sm:$0xff] %vm1202, %v1199
  // Predicated region
  $region14: #{net_forward.7} parent=0 // pred_check
    _
  $region15: #{net_forward.7} parent=0 // pred_check_branch
    %1206 = sbr.rel (0) target = $region17
  $region16: #{net_forward.7} parent=0 // pred_region
    _
  $region17: #{net_forward.7} parent=0 // pred_fallthru
    _
  // Predicated region
  $region18: #{net_forward.7} parent=0 // pred_check
    _
  $region19: #{net_forward.7} parent=0 // pred_check_branch
    %1208 = sbr.rel (0) target = $region21
  $region20: #{net_forward.7} parent=0 // pred_region
    _
  $region21: #{net_forward.7} parent=0 // pred_fallthru
    _
  // Predicated region
  $region22: #{net_forward.7} parent=0 // pred_check
    _
  $region23: #{net_forward.7} parent=0 // pred_check_branch
    %1210 = sbr.rel (0) target = $region25
  $region24: #{net_forward.7} parent=0 // pred_region
    _
  $region25: #{net_forward.7} parent=0 // pred_fallthru
    _
  // Predicated region
  $region26: #{net_forward.7} parent=0 // pred_check
    _
  $region27: #{net_forward.7} parent=0 // pred_check_branch
    %1212 = sbr.rel (0) target = $region29
  $region28: #{net_forward.7} parent=0 // pred_region
    _
  $region29: #{net_forward.7} parent=0 // pred_fallthru
    _

// kernel: net_forward.8
$region0: #{net_forward.8}
  #allocation0 [shape = 'u32[]', space=smem, size = 0x4, offset = 0x4, fixed_abs, tag = 'smem constant byte address 0x4 - core index']
  #allocation1 [shape = 'u32[144,128]{1,0:T(1,128)}', space=vmem, size = 0x12000, scoped, tag = 'internal scratch']
  %s0 = inlined_call_operand.vmem [shape: f32[16,512], index: 0, kind: input, shape index: {}]
  %s1 = inlined_call_operand.vmem [shape: f32[1,512], index: 1, kind: input, shape index: {}]
  %s2 = inlined_call_operand.vmem [shape: f32[1,512], index: 2, kind: input, shape index: {}]
  %s3 = inlined_call_operand.vmem [shape: f32[16,512], index: 3, kind: output, shape index: {0}]
  %s4 = inlined_call_operand.vmem [shape: f32[16,1], index: 4, kind: output, shape index: {1}]
  %5 = xla_tuple %s3, %s4
  %s6 = sld [smem:[#allocation0]]
  $region30: #{net_forward.8} parent=0
    _
  %s8 = ssub.s32 1, %s6
  %s9 = scalar_select 0, %s8, %s6
  // Predicated region
  $region2: #{net_forward.8} parent=0 // pred_check
    _
  $region3: #{net_forward.8} parent=0 // pred_check_branch
    %11 = sbr.rel (0) target = $region5
  $region4: #{net_forward.8} parent=0 // pred_region
    _
  $region5: #{net_forward.8} parent=0 // pred_fallthru
    _
  // Predicated region
  $region6: #{net_forward.8} parent=0 // pred_check
    _
  $region7: #{net_forward.8} parent=0 // pred_check_branch
    %13 = sbr.rel (0) target = $region9
  $region8: #{net_forward.8} parent=0 // pred_region
    _
  $region9: #{net_forward.8} parent=0 // pred_fallthru
    _
  // Predicated region
  $region10: #{net_forward.8} parent=0 // pred_check
    _
  $region11: #{net_forward.8} parent=0 // pred_check_branch
    %15 = sbr.rel (0) target = $region13
  $region12: #{net_forward.8} parent=0 // pred_region
    _
  $region13: #{net_forward.8} parent=0 // pred_fallthru
    _
  %v16 = vld [vmem:[%s0] sm:$0xff]
  %v17 = vld [vmem:[%s0 + $0x8] sm:$0xff]
  %v18 = vld [vmem:[%s0 + $0x10] sm:$0xff]
  %v19 = vld [vmem:[%s0 + $0x18] sm:$0xff]
  %v20 = vld [vmem:[%s0 + $0x20] sm:$0xff]
  %v21 = vld [vmem:[%s0 + $0x28] sm:$0xff]
  %v22 = vld [vmem:[%s0 + $0x30] sm:$0xff]
  %v23 = vld [vmem:[%s0 + $0x38] sm:$0xff]
  %v24 = vld [vmem:[%s1] sm:$0xf]
  %v26 = vlaneseq
  %v27 = vshrl.u32 %v26, 7
  %v28 = vsub.s32 0, %v27
  %v29 = vrot.slane %v24, %v28
  %v30 = vlaneseq
  %v31 = vshrl.u32 %v30, 7
  %v32 = vsub.s32 1, %v31
  %v33 = vrot.slane %v24, %v32
  %v34 = vlaneseq
  %v35 = vshrl.u32 %v34, 7
  %v36 = vsub.s32 2, %v35
  %v37 = vrot.slane %v24, %v36
  %v38 = vlaneseq
  %v39 = vshrl.u32 %v38, 7
  %v40 = vsub.s32 3, %v39
  %v41 = vrot.slane %v24, %v40
  %v46 = vadd.f32 %v16, %v29
  %v47 = vadd.f32 %v17, %v33
  %v48 = vadd.f32 %v18, %v37
  %v49 = vadd.f32 %v19, %v41
  %v50 = vadd.f32 %v20, %v29
  %v51 = vadd.f32 %v21, %v33
  %v52 = vadd.f32 %v22, %v37
  %v53 = vadd.f32 %v23, %v41
  %v54 = vmax.f32 %v46, 0.0
  %v55 = vmax.f32 %v47, 0.0
  %v56 = vmax.f32 %v48, 0.0
  %v57 = vmax.f32 %v49, 0.0
  %v58 = vmax.f32 %v50, 0.0
  %v59 = vmax.f32 %v51, 0.0
  %v60 = vmax.f32 %v52, 0.0
  %v61 = vmax.f32 %v53, 0.0
  %v62 = vld [vmem:[%s2] sm:$0xf]
  %v63 = vmul.f32 %v62, %v62
  %v65 = vlaneseq
  %v66 = vshrl.u32 %v65, 7
  %v67 = vsub.s32 0, %v66
  %v68 = vrot.slane %v63, %v67
  %v69 = vlaneseq
  %v70 = vshrl.u32 %v69, 7
  %v71 = vsub.s32 1, %v70
  %v72 = vrot.slane %v63, %v71
  %v73 = vlaneseq
  %v74 = vshrl.u32 %v73, 7
  %v75 = vsub.s32 2, %v74
  %v76 = vrot.slane %v63, %v75
  %v77 = vlaneseq
  %v78 = vshrl.u32 %v77, 7
  %v79 = vsub.s32 3, %v78
  %v80 = vrot.slane %v63, %v79
  %vm85 = vcmask 1040384
  %v86 = vsel %vm85, %v68, 0.0
  %v87 = vsel %vm85, %v72, 0.0
  %v88 = vadd.f32 %v86, %v87
  %v89 = vsel %vm85, %v76, 0.0
  %v90 = vadd.f32 %v88, %v89
  %v91 = vsel %vm85, %v80, 0.0
  %v92 = vadd.f32 %v90, %v91
  %93 = vadd.xlane.f32.xlu0 %v92
  %v94 = vpop.xlane.xlu0 %93
  %v95 = vrsqrt.pop %v94
  %v97 = vlaneseq
  %v98 = vshrl.u32 %v97, 7
  %v99 = vsub.s32 0, %v98
  %v100 = vrot.slane %v62, %v99
  %v101 = vlaneseq
  %v102 = vshrl.u32 %v101, 7
  %v103 = vsub.s32 1, %v102
  %v104 = vrot.slane %v62, %v103
  %v105 = vlaneseq
  %v106 = vshrl.u32 %v105, 7
  %v107 = vsub.s32 2, %v106
  %v108 = vrot.slane %v62, %v107
  %v109 = vlaneseq
  %v110 = vshrl.u32 %v109, 7
  %v111 = vsub.s32 3, %v110
  %v112 = vrot.slane %v62, %v111
  %v117 = vmul.f32 %v54, %v100
  %v118 = vmul.f32 %v55, %v104
  %v119 = vmul.f32 %v56, %v108
  %v120 = vmul.f32 %v57, %v112
  %v121 = vmul.f32 %v58, %v100
  %v122 = vmul.f32 %v59, %v104
  %v123 = vmul.f32 %v60, %v108
  %v124 = vmul.f32 %v61, %v112
  %v125 = vadd.f32 %v117, %v118
  %v126 = vadd.f32 %v125, %v119
  %v127 = vadd.f32 %v126, %v120
  %128 = vadd.xlane.f32.xlu0 %v127
  %v129 = vpop.xlane.xlu0 %128
  %v130 = vadd.f32 %v121, %v122
  %v131 = vadd.f32 %v130, %v123
  %v132 = vadd.f32 %v131, %v124
  %133 = vadd.xlane.f32.xlu0 %v132
  %v134 = vpop.xlane.xlu0 %133
  %v135 = vlaneseq
  %v136 = vshrl.u32 %v135, 7
  %v137 = vsub.s32 0, %v136
  %v138 = vrot.slane %v95, %v137
  %v139 = vmul.f32 %v129, %v138
  %v140 = vmul.f32 %v134, %v138
  %v141 = vtanh.pop %v139
  %v142 = vtanh.pop %v140
  %v143 = vmul.f32 %v54, %v141
  %v144 = vmul.f32 %v55, %v141
  %v145 = vmul.f32 %v56, %v141
  %v146 = vmul.f32 %v57, %v141
  %v147 = vmul.f32 %v58, %v142
  %v148 = vmul.f32 %v59, %v142
  %v149 = vmul.f32 %v60, %v142
  %v150 = vmul.f32 %v61, %v142
  %151 = vst [vmem:[%s3] sm:$0xff] %v143
  %152 = vst [vmem:[%s3 + $0x8] sm:$0xff] %v144
  %153 = vst [vmem:[%s3 + $0x10] sm:$0xff] %v145
  %154 = vst [vmem:[%s3 + $0x18] sm:$0xff] %v146
  %155 = vst [vmem:[%s3 + $0x20] sm:$0xff] %v147
  %156 = vst [vmem:[%s3 + $0x28] sm:$0xff] %v148
  %157 = vst [vmem:[%s3 + $0x30] sm:$0xff] %v149
  %158 = vst [vmem:[%s3 + $0x38] sm:$0xff] %v150
  %vm159 = vcmask 7168
  %160 = vst.msk [vmem:[%s4] sm:$0xff] %vm159, %v141
  %161 = vst.msk [vmem:[%s4 + $0x8] sm:$0xff] %vm159, %v142
  // Predicated region
  $region14: #{net_forward.8} parent=0 // pred_check
    _
  $region15: #{net_forward.8} parent=0 // pred_check_branch
    %163 = sbr.rel (0) target = $region17
  $region16: #{net_forward.8} parent=0 // pred_region
    _
  $region17: #{net_forward.8} parent=0 // pred_fallthru
    _
  // Predicated region
  $region18: #{net_forward.8} parent=0 // pred_check
    _
  $region19: #{net_forward.8} parent=0 // pred_check_branch
    %165 = sbr.rel (0) target = $region21
  $region20: #{net_forward.8} parent=0 // pred_region
    _
  $region21: #{net_forward.8} parent=0 // pred_fallthru
    _
  // Predicated region
  $region22: #{net_forward.8} parent=0 // pred_check
    _
  $region23: #{net_forward.8} parent=0 // pred_check_branch
    %167 = sbr.rel (0) target = $region25
  $region24: #{net_forward.8} parent=0 // pred_region
    _
  $region25: #{net_forward.8} parent=0 // pred_fallthru
    _
  // Predicated region
  $region26: #{net_forward.8} parent=0 // pred_check
    _
  $region27: #{net_forward.8} parent=0 // pred_check_branch
    %169 = sbr.rel (0) target = $region29
  $region28: #{net_forward.8} parent=0 // pred_region
    _
  $region29: #{net_forward.8} parent=0 // pred_fallthru
    _

// kernel: net_forward.9
$region0: #{net_forward.9}
  #allocation0 [shape = 'u32[]', space=smem, size = 0x4, offset = 0x4, fixed_abs, tag = 'smem constant byte address 0x4 - core index']
  #allocation1 [shape = 'u32[144,128]{1,0:T(1,128)}', space=vmem, size = 0x12000, scoped, tag = 'internal scratch']
  %s0 = inlined_call_operand.vmem [shape: f32[13,512], index: 0, kind: input, shape index: {}]
  %s1 = inlined_call_operand.vmem [shape: f32[11,512], index: 1, kind: input, shape index: {}]
  %s2 = inlined_call_operand.vmem [shape: f32[512,128], index: 2, kind: input, shape index: {}]
  %s3 = inlined_call_operand.vmem [shape: f32[512,128], index: 3, kind: input, shape index: {}]
  %s4 = inlined_call_operand.vmem [shape: f32[1,128], index: 4, kind: input, shape index: {}]
  %s5 = inlined_call_operand.vmem [shape: f32[128,64], index: 5, kind: input, shape index: {}]
  %s6 = inlined_call_operand.vmem [shape: f32[1,64], index: 6, kind: input, shape index: {}]
  %s7 = inlined_call_operand.vmem [shape: f32[64,8], index: 7, kind: input, shape index: {}]
  %s8 = inlined_call_operand.vmem [shape: f32[1,8], index: 8, kind: input, shape index: {}]
  %s9 = inlined_call_operand.hbm [shape: f32[1,8], index: 9, kind: output, shape index: {}]
  %s10 = sld [smem:[#allocation0]]
  $region46: #{net_forward.9} parent=0
    _
  %s12 = ssub.s32 1, %s10
  %s13 = scalar_select 0, %s12, %s10
  $region1: #{net_forward.9} parent=0
    #allocation2 [shape = 'u8[512]{0}', space=vmem, size = 0x400, scoped, tag = 'output window, operand 0, single buffered']
    #allocation3 [shape = 's32[1]{0}', space=sflag, size = 0x4, scoped, tag = 'scoped memory for net_forward.9']
    %14 = vsyncpa [#allocation3], 0
    // Predicated region
    $region2: #{net_forward.9} parent=1 // pred_check
      _
    $region3: #{net_forward.9} parent=1 // pred_check_branch
      %16 = sbr.rel (0) target = $region5
    $region4: #{net_forward.9} parent=1 // pred_region
      _
    $region5: #{net_forward.9} parent=1 // pred_fallthru
      _
    // Predicated region
    $region6: #{net_forward.9} parent=1 // pred_check
      _
    $region7: #{net_forward.9} parent=1 // pred_check_branch
      %18 = sbr.rel (0) target = $region9
    $region8: #{net_forward.9} parent=1 // pred_region
      _
    $region9: #{net_forward.9} parent=1 // pred_fallthru
      _
    // Predicated region
    $region10: #{net_forward.9} parent=1 // pred_check
      _
    $region11: #{net_forward.9} parent=1 // pred_check_branch
      %20 = sbr.rel (0) target = $region13
    $region12: #{net_forward.9} parent=1 // pred_region
      _
    $region13: #{net_forward.9} parent=1 // pred_fallthru
      _
    // Predicated region
    $region14: #{net_forward.9} parent=1 // pred_check
      _
    $region15: #{net_forward.9} parent=1 // pred_check_branch
      %22 = sbr.rel (0) target = $region17
    $region16: #{net_forward.9} parent=1 // pred_region
      _
    $region17: #{net_forward.9} parent=1 // pred_fallthru
      _
    // Predicated region
    $region18: #{net_forward.9} parent=1 // pred_check
      _
    $region19: #{net_forward.9} parent=1 // pred_check_branch
      %24 = sbr.rel (0) target = $region21
    $region20: #{net_forward.9} parent=1 // pred_region
      _
    $region21: #{net_forward.9} parent=1 // pred_fallthru
      _
    // Predicated region
    $region22: #{net_forward.9} parent=1 // pred_check
      _
    $region23: #{net_forward.9} parent=1 // pred_check_branch
      %26 = sbr.rel (0) target = $region25
    $region24: #{net_forward.9} parent=1 // pred_region
      _
    $region25: #{net_forward.9} parent=1 // pred_fallthru
      _
    // Predicated region
    $region26: #{net_forward.9} parent=1 // pred_check
      _
    $region27: #{net_forward.9} parent=1 // pred_check_branch
      %28 = sbr.rel (0) target = $region29
    $region28: #{net_forward.9} parent=1 // pred_region
      _
    $region29: #{net_forward.9} parent=1 // pred_fallthru
      _
    // Predicated region
    $region30: #{net_forward.9} parent=1 // pred_check
      _
    $region31: #{net_forward.9} parent=1 // pred_check_branch
      %30 = sbr.rel (0) target = $region33
    $region32: #{net_forward.9} parent=1 // pred_region
      _
    $region33: #{net_forward.9} parent=1 // pred_fallthru
      _
    // Predicated region
    $region34: #{net_forward.9} parent=1 // pred_check
      _
    $region35: #{net_forward.9} parent=1 // pred_check_branch
      %32 = sbr.rel (0) target = $region37
    $region36: #{net_forward.9} parent=1 // pred_region
      _
    $region37: #{net_forward.9} parent=1 // pred_fallthru
      _
    %v33 = vld [vmem:[%s0] sm:$0xff]
    %v34 = vld [vmem:[%s0 + $0x8] sm:$0xff]
    %v35 = vld [vmem:[%s0 + $0x10] sm:$0xff]
    %v36 = vld [vmem:[%s0 + $0x18] sm:$0xff]
    %v37 = vld [vmem:[%s0 + $0x20] sm:$0x1f]
    %v38 = vld [vmem:[%s0 + $0x28] sm:$0x1f]
    %v39 = vld [vmem:[%s0 + $0x30] sm:$0x1f]
    %v40 = vld [vmem:[%s0 + $0x38] sm:$0x1f]
    %v41 = vld [vmem:[%s1] sm:$0xff]
    %v42 = vld [vmem:[%s1 + $0x8] sm:$0xff]
    %v43 = vld [vmem:[%s1 + $0x10] sm:$0xff]
    %v44 = vld [vmem:[%s1 + $0x18] sm:$0xff]
    %v45 = vld [vmem:[%s1 + $0x20] sm:$0x7]
    %v46 = vld [vmem:[%s1 + $0x28] sm:$0x7]
    %v47 = vld [vmem:[%s1 + $0x30] sm:$0x7]
    %v48 = vld [vmem:[%s1 + $0x38] sm:$0x7]
    %vm49 = vcmask 1044480
    %v50 = vsel %vm49, %v37, -inf
    %v51 = vmax.f32 %v33, %v50
    %v52 = vrot.slane %v51, 4
    %v53 = vmax.f32 %v51, %v52
    %v54 = vrot.slane %v53, 2
    %v55 = vmax.f32 %v53, %v54
    %v56 = vrot.slane %v55, 1
    %v57 = vmax.f32 %v55, %v56
    %v58 = vsel %vm49, %v38, -inf
    %v59 = vmax.f32 %v34, %v58
    %v60 = vrot.slane %v59, 4
    %v61 = vmax.f32 %v59, %v60
    %v62 = vrot.slane %v61, 2
    %v63 = vmax.f32 %v61, %v62
    %v64 = vrot.slane %v63, 1
    %v65 = vmax.f32 %v63, %v64
    %v66 = vsel %vm49, %v39, -inf
    %v67 = vmax.f32 %v35, %v66
    %v68 = vrot.slane %v67, 4
    %v69 = vmax.f32 %v67, %v68
    %v70 = vrot.slane %v69, 2
    %v71 = vmax.f32 %v69, %v70
    %v72 = vrot.slane %v71, 1
    %v73 = vmax.f32 %v71, %v72
    %v74 = vsel %vm49, %v40, -inf
    %v75 = vmax.f32 %v36, %v74
    %v76 = vrot.slane %v75, 4
    %v77 = vmax.f32 %v75, %v76
    %v78 = vrot.slane %v77, 2
    %v79 = vmax.f32 %v77, %v78
    %v80 = vrot.slane %v79, 1
    %v81 = vmax.f32 %v79, %v80
    %vm82 = vcmask 1042432
    %v83 = vsel %vm82, %v45, -inf
    %v84 = vmax.f32 %v41, %v83
    %v85 = vrot.slane %v84, 4
    %v86 = vmax.f32 %v84, %v85
    %v87 = vrot.slane %v86, 2
    %v88 = vmax.f32 %v86, %v87
    %v89 = vrot.slane %v88, 1
    %v90 = vmax.f32 %v88, %v89
    %v91 = vsel %vm82, %v46, -inf
    %v92 = vmax.f32 %v42, %v91
    %v93 = vrot.slane %v92, 4
    %v94 = vmax.f32 %v92, %v93
    %v95 = vrot.slane %v94, 2
    %v96 = vmax.f32 %v94, %v95
    %v97 = vrot.slane %v96, 1
    %v98 = vmax.f32 %v96, %v97
    %v99 = vsel %vm82, %v47, -inf
    %v100 = vmax.f32 %v43, %v99
    %v101 = vrot.slane %v100, 4
    %v102 = vmax.f32 %v100, %v101
    %v103 = vrot.slane %v102, 2
    %v104 = vmax.f32 %v102, %v103
    %v105 = vrot.slane %v104, 1
    %v106 = vmax.f32 %v104, %v105
    %v107 = vsel %vm82, %v48, -inf
    %v108 = vmax.f32 %v44, %v107
    %v109 = vrot.slane %v108, 4
    %v110 = vmax.f32 %v108, %v109
    %v111 = vrot.slane %v110, 2
    %v112 = vmax.f32 %v110, %v111
    %v113 = vrot.slane %v112, 1
    %v114 = vmax.f32 %v112, %v113
    %v115 = vadd.f32 %v57, %v90
    %v116 = vadd.f32 %v65, %v98
    %v117 = vadd.f32 %v73, %v106
    %v118 = vadd.f32 %v81, %v114
    %v119 = vsel %vm49, %v37, 0.0
    %v120 = vadd.f32 %v33, %v119
    %v121 = vrot.slane %v120, 4
    %v122 = vadd.f32 %v120, %v121
    %v123 = vrot.slane %v122, 2
    %v124 = vadd.f32 %v122, %v123
    %v125 = vrot.slane %v124, 1
    %v126 = vadd.f32 %v124, %v125
    %v127 = vsel %vm49, %v38, 0.0
    %v128 = vadd.f32 %v34, %v127
    %v129 = vrot.slane %v128, 4
    %v130 = vadd.f32 %v128, %v129
    %v131 = vrot.slane %v130, 2
    %v132 = vadd.f32 %v130, %v131
    %v133 = vrot.slane %v132, 1
    %v134 = vadd.f32 %v132, %v133
    %v135 = vsel %vm49, %v39, 0.0
    %v136 = vadd.f32 %v35, %v135
    %v137 = vrot.slane %v136, 4
    %v138 = vadd.f32 %v136, %v137
    %v139 = vrot.slane %v138, 2
    %v140 = vadd.f32 %v138, %v139
    %v141 = vrot.slane %v140, 1
    %v142 = vadd.f32 %v140, %v141
    %v143 = vsel %vm49, %v40, 0.0
    %v144 = vadd.f32 %v36, %v143
    %v145 = vrot.slane %v144, 4
    %v146 = vadd.f32 %v144, %v145
    %v147 = vrot.slane %v146, 2
    %v148 = vadd.f32 %v146, %v147
    %v149 = vrot.slane %v148, 1
    %v150 = vadd.f32 %v148, %v149
    %v151 = vrcp.pop 13.0
    %v152 = vmul.f32 %v126, %v151
    %v153 = vmul.f32 %v134, %v151
    %v154 = vmul.f32 %v142, %v151
    %v155 = vmul.f32 %v150, %v151
    %v156 = vsel %vm82, %v45, 0.0
    %v157 = vadd.f32 %v41, %v156
    %v158 = vrot.slane %v157, 4
    %v159 = vadd.f32 %v157, %v158
    %v160 = vrot.slane %v159, 2
    %v161 = vadd.f32 %v159, %v160
    %v162 = vrot.slane %v161, 1
    %v163 = vadd.f32 %v161, %v162
    %v164 = vsel %vm82, %v46, 0.0
    %v165 = vadd.f32 %v42, %v164
    %v166 = vrot.slane %v165, 4
    %v167 = vadd.f32 %v165, %v166
    %v168 = vrot.slane %v167, 2
    %v169 = vadd.f32 %v167, %v168
    %v170 = vrot.slane %v169, 1
    %v171 = vadd.f32 %v169, %v170
    %v172 = vsel %vm82, %v47, 0.0
    %v173 = vadd.f32 %v43, %v172
    %v174 = vrot.slane %v173, 4
    %v175 = vadd.f32 %v173, %v174
    %v176 = vrot.slane %v175, 2
    %v177 = vadd.f32 %v175, %v176
    %v178 = vrot.slane %v177, 1
    %v179 = vadd.f32 %v177, %v178
    %v180 = vsel %vm82, %v48, 0.0
    %v181 = vadd.f32 %v44, %v180
    %v182 = vrot.slane %v181, 4
    %v183 = vadd.f32 %v181, %v182
    %v184 = vrot.slane %v183, 2
    %v185 = vadd.f32 %v183, %v184
    %v186 = vrot.slane %v185, 1
    %v187 = vadd.f32 %v185, %v186
    %v188 = vrcp.pop 11.0
    %v189 = vmul.f32 %v163, %v188
    %v190 = vmul.f32 %v171, %v188
    %v191 = vmul.f32 %v179, %v188
    %v192 = vmul.f32 %v187, %v188
    %v193 = vadd.f32 %v152, %v189
    %v194 = vadd.f32 %v153, %v190
    %v195 = vadd.f32 %v154, %v191
    %v196 = vadd.f32 %v155, %v192
    %v197 = vld [vmem:[%s2] sm:$0xff]
    %v198 = vld [vmem:[%s2 + $0x8] sm:$0xff]
    %v199 = vld [vmem:[%s2 + $0x10] sm:$0xff]
    %v200 = vld [vmem:[%s2 + $0x18] sm:$0xff]
    %v201 = vld [vmem:[%s2 + $0x20] sm:$0xff]
    %v202 = vld [vmem:[%s2 + $0x28] sm:$0xff]
    %v203 = vld [vmem:[%s2 + $0x30] sm:$0xff]
    %v204 = vld [vmem:[%s2 + $0x38] sm:$0xff]
    %v205 = vld [vmem:[%s2 + $0x40] sm:$0xff]
    %v206 = vld [vmem:[%s2 + $0x48] sm:$0xff]
    %v207 = vld [vmem:[%s2 + $0x50] sm:$0xff]
    %v208 = vld [vmem:[%s2 + $0x58] sm:$0xff]
    %v209 = vld [vmem:[%s2 + $0x60] sm:$0xff]
    %v210 = vld [vmem:[%s2 + $0x68] sm:$0xff]
    %v211 = vld [vmem:[%s2 + $0x70] sm:$0xff]
    %v212 = vld [vmem:[%s2 + $0x78] sm:$0xff]
    %v213 = vld [vmem:[%s2 + $0x80] sm:$0xff]
    %v214 = vld [vmem:[%s2 + $0x88] sm:$0xff]
    %v215 = vld [vmem:[%s2 + $0x90] sm:$0xff]
    %v216 = vld [vmem:[%s2 + $0x98] sm:$0xff]
    %v217 = vld [vmem:[%s2 + $0xa0] sm:$0xff]
    %v218 = vld [vmem:[%s2 + $0xa8] sm:$0xff]
    %v219 = vld [vmem:[%s2 + $0xb0] sm:$0xff]
    %v220 = vld [vmem:[%s2 + $0xb8] sm:$0xff]
    %v221 = vld [vmem:[%s2 + $0xc0] sm:$0xff]
    %v222 = vld [vmem:[%s2 + $0xc8] sm:$0xff]
    %v223 = vld [vmem:[%s2 + $0xd0] sm:$0xff]
    %v224 = vld [vmem:[%s2 + $0xd8] sm:$0xff]
    %v225 = vld [vmem:[%s2 + $0xe0] sm:$0xff]
    %v226 = vld [vmem:[%s2 + $0xe8] sm:$0xff]
    %v227 = vld [vmem:[%s2 + $0xf0] sm:$0xff]
    %v228 = vld [vmem:[%s2 + $0xf8] sm:$0xff]
    %v229 = vld [vmem:[%s2 + $0x100] sm:$0xff]
    %v230 = vld [vmem:[%s2 + $0x108] sm:$0xff]
    %v231 = vld [vmem:[%s2 + $0x110] sm:$0xff]
    %v232 = vld [vmem:[%s2 + $0x118] sm:$0xff]
    %v233 = vld [vmem:[%s2 + $0x120] sm:$0xff]
    %v234 = vld [vmem:[%s2 + $0x128] sm:$0xff]
    %v235 = vld [vmem:[%s2 + $0x130] sm:$0xff]
    %v236 = vld [vmem:[%s2 + $0x138] sm:$0xff]
    %v237 = vld [vmem:[%s2 + $0x140] sm:$0xff]
    %v238 = vld [vmem:[%s2 + $0x148] sm:$0xff]
    %v239 = vld [vmem:[%s2 + $0x150] sm:$0xff]
    %v240 = vld [vmem:[%s2 + $0x158] sm:$0xff]
    %v241 = vld [vmem:[%s2 + $0x160] sm:$0xff]
    %v242 = vld [vmem:[%s2 + $0x168] sm:$0xff]
    %v243 = vld [vmem:[%s2 + $0x170] sm:$0xff]
    %v244 = vld [vmem:[%s2 + $0x178] sm:$0xff]
    %v245 = vld [vmem:[%s2 + $0x180] sm:$0xff]
    %v246 = vld [vmem:[%s2 + $0x188] sm:$0xff]
    %v247 = vld [vmem:[%s2 + $0x190] sm:$0xff]
    %v248 = vld [vmem:[%s2 + $0x198] sm:$0xff]
    %v249 = vld [vmem:[%s2 + $0x1a0] sm:$0xff]
    %v250 = vld [vmem:[%s2 + $0x1a8] sm:$0xff]
    %v251 = vld [vmem:[%s2 + $0x1b0] sm:$0xff]
    %v252 = vld [vmem:[%s2 + $0x1b8] sm:$0xff]
    %v253 = vld [vmem:[%s2 + $0x1c0] sm:$0xff]
    %v254 = vld [vmem:[%s2 + $0x1c8] sm:$0xff]
    %v255 = vld [vmem:[%s2 + $0x1d0] sm:$0xff]
    %v256 = vld [vmem:[%s2 + $0x1d8] sm:$0xff]
    %v257 = vld [vmem:[%s2 + $0x1e0] sm:$0xff]
    %v258 = vld [vmem:[%s2 + $0x1e8] sm:$0xff]
    %v259 = vld [vmem:[%s2 + $0x1f0] sm:$0xff]
    %v260 = vld [vmem:[%s2 + $0x1f8] sm:$0xff]
    %v261 = vld [vmem:[%s3] sm:$0xff]
    %v262 = vld [vmem:[%s3 + $0x8] sm:$0xff]
    %v263 = vld [vmem:[%s3 + $0x10] sm:$0xff]
    %v264 = vld [vmem:[%s3 + $0x18] sm:$0xff]
    %v265 = vld [vmem:[%s3 + $0x20] sm:$0xff]
    %v266 = vld [vmem:[%s3 + $0x28] sm:$0xff]
    %v267 = vld [vmem:[%s3 + $0x30] sm:$0xff]
    %v268 = vld [vmem:[%s3 + $0x38] sm:$0xff]
    %v269 = vld [vmem:[%s3 + $0x40] sm:$0xff]
    %v270 = vld [vmem:[%s3 + $0x48] sm:$0xff]
    %v271 = vld [vmem:[%s3 + $0x50] sm:$0xff]
    %v272 = vld [vmem:[%s3 + $0x58] sm:$0xff]
    %v273 = vld [vmem:[%s3 + $0x60] sm:$0xff]
    %v274 = vld [vmem:[%s3 + $0x68] sm:$0xff]
    %v275 = vld [vmem:[%s3 + $0x70] sm:$0xff]
    %v276 = vld [vmem:[%s3 + $0x78] sm:$0xff]
    %v277 = vld [vmem:[%s3 + $0x80] sm:$0xff]
    %v278 = vld [vmem:[%s3 + $0x88] sm:$0xff]
    %v279 = vld [vmem:[%s3 + $0x90] sm:$0xff]
    %v280 = vld [vmem:[%s3 + $0x98] sm:$0xff]
    %v281 = vld [vmem:[%s3 + $0xa0] sm:$0xff]
    %v282 = vld [vmem:[%s3 + $0xa8] sm:$0xff]
    %v283 = vld [vmem:[%s3 + $0xb0] sm:$0xff]
    %v284 = vld [vmem:[%s3 + $0xb8] sm:$0xff]
    %v285 = vld [vmem:[%s3 + $0xc0] sm:$0xff]
    %v286 = vld [vmem:[%s3 + $0xc8] sm:$0xff]
    %v287 = vld [vmem:[%s3 + $0xd0] sm:$0xff]
    %v288 = vld [vmem:[%s3 + $0xd8] sm:$0xff]
    %v289 = vld [vmem:[%s3 + $0xe0] sm:$0xff]
    %v290 = vld [vmem:[%s3 + $0xe8] sm:$0xff]
    %v291 = vld [vmem:[%s3 + $0xf0] sm:$0xff]
    %v292 = vld [vmem:[%s3 + $0xf8] sm:$0xff]
    %v293 = vld [vmem:[%s3 + $0x100] sm:$0xff]
    %v294 = vld [vmem:[%s3 + $0x108] sm:$0xff]
    %v295 = vld [vmem:[%s3 + $0x110] sm:$0xff]
    %v296 = vld [vmem:[%s3 + $0x118] sm:$0xff]
    %v297 = vld [vmem:[%s3 + $0x120] sm:$0xff]
    %v298 = vld [vmem:[%s3 + $0x128] sm:$0xff]
    %v299 = vld [vmem:[%s3 + $0x130] sm:$0xff]
    %v300 = vld [vmem:[%s3 + $0x138] sm:$0xff]
    %v301 = vld [vmem:[%s3 + $0x140] sm:$0xff]
    %v302 = vld [vmem:[%s3 + $0x148] sm:$0xff]
    %v303 = vld [vmem:[%s3 + $0x150] sm:$0xff]
    %v304 = vld [vmem:[%s3 + $0x158] sm:$0xff]
    %v305 = vld [vmem:[%s3 + $0x160] sm:$0xff]
    %v306 = vld [vmem:[%s3 + $0x168] sm:$0xff]
    %v307 = vld [vmem:[%s3 + $0x170] sm:$0xff]
    %v308 = vld [vmem:[%s3 + $0x178] sm:$0xff]
    %v309 = vld [vmem:[%s3 + $0x180] sm:$0xff]
    %v310 = vld [vmem:[%s3 + $0x188] sm:$0xff]
    %v311 = vld [vmem:[%s3 + $0x190] sm:$0xff]
    %v312 = vld [vmem:[%s3 + $0x198] sm:$0xff]
    %v313 = vld [vmem:[%s3 + $0x1a0] sm:$0xff]
    %v314 = vld [vmem:[%s3 + $0x1a8] sm:$0xff]
    %v315 = vld [vmem:[%s3 + $0x1b0] sm:$0xff]
    %v316 = vld [vmem:[%s3 + $0x1b8] sm:$0xff]
    %v317 = vld [vmem:[%s3 + $0x1c0] sm:$0xff]
    %v318 = vld [vmem:[%s3 + $0x1c8] sm:$0xff]
    %v319 = vld [vmem:[%s3 + $0x1d0] sm:$0xff]
    %v320 = vld [vmem:[%s3 + $0x1d8] sm:$0xff]
    %v321 = vld [vmem:[%s3 + $0x1e0] sm:$0xff]
    %v322 = vld [vmem:[%s3 + $0x1e8] sm:$0xff]
    %v323 = vld [vmem:[%s3 + $0x1f0] sm:$0xff]
    %v324 = vld [vmem:[%s3 + $0x1f8] sm:$0xff]
    %325 = vmatprep.subr.mxu0 0.0
    %326 = vmatpush1.msra.mxu0 %v261
    %327 = vmatprep.subr.mxu0 0.0
    %328 = vmatpush1.msra.mxu0 %v262
    %329 = vmatprep.subr.mxu0 0.0
    %330 = vmatpush1.msra.mxu0 %v263
    %331 = vmatprep.subr.mxu0 0.0
    %332 = vmatpush1.msra.mxu0 %v264
    %333 = vmatprep.subr.mxu0 0.0
    %334 = vmatpush1.msra.mxu0 %v265
    %335 = vmatprep.subr.mxu0 0.0
    %336 = vmatpush1.msra.mxu0 %v266
    %337 = vmatprep.subr.mxu0 0.0
    %338 = vmatpush1.msra.mxu0 %v267
    %339 = vmatprep.subr.mxu0 0.0
    %340 = vmatpush1.msra.mxu0 %v268
    %341 = vmatprep.subr.mxu0 0.0
    %342 = vmatpush1.msra.mxu0 %v269
    %343 = vmatprep.subr.mxu0 0.0
    %344 = vmatpush1.msra.mxu0 %v270
    %345 = vmatprep.subr.mxu0 0.0
    %346 = vmatpush1.msra.mxu0 %v271
    %347 = vmatprep.subr.mxu0 0.0
    %348 = vmatpush1.msra.mxu0 %v272
    %349 = vmatprep.subr.mxu0 0.0
    %350 = vmatpush1.msra.mxu0 %v273
    %351 = vmatprep.subr.mxu0 0.0
    %352 = vmatpush1.msra.mxu0 %v274
    %353 = vmatprep.subr.mxu0 0.0
    %354 = vmatpush1.msra.mxu0 %v275
    %355 = vmatprep.subr.mxu0 0.0
    %356 = vmatpush1.msra.mxu0 %v276
    %357 = vmatprep.subr.mxu0 0.0
    %358 = vmatpush1.msra.mxu0 %v277
    %359 = vmatprep.subr.mxu0 0.0
    %360 = vmatpush1.msra.mxu0 %v278
    %361 = vmatprep.subr.mxu0 0.0
    %362 = vmatpush1.msra.mxu0 %v279
    %363 = vmatprep.subr.mxu0 0.0
    %364 = vmatpush1.msra.mxu0 %v280
    %365 = vmatprep.subr.mxu0 0.0
    %366 = vmatpush1.msra.mxu0 %v281
    %367 = vmatprep.subr.mxu0 0.0
    %368 = vmatpush1.msra.mxu0 %v282
    %369 = vmatprep.subr.mxu0 0.0
    %370 = vmatpush1.msra.mxu0 %v283
    %371 = vmatprep.subr.mxu0 0.0
    %372 = vmatpush1.msra.mxu0 %v284
    %373 = vmatprep.subr.mxu0 0.0
    %374 = vmatpush1.msra.mxu0 %v285
    %375 = vmatprep.subr.mxu0 0.0
    %376 = vmatpush1.msra.mxu0 %v286
    %377 = vmatprep.subr.mxu0 0.0
    %378 = vmatpush1.msra.mxu0 %v287
    %379 = vmatprep.subr.mxu0 0.0
    %380 = vmatpush1.msra.mxu0 %v288
    %381 = vmatprep.subr.mxu0 0.0
    %382 = vmatpush1.msra.mxu0 %v289
    %383 = vmatprep.subr.mxu0 0.0
    %384 = vmatpush1.msra.mxu0 %v290
    %385 = vmatprep.subr.mxu0 0.0
    %386 = vmatpush1.msra.mxu0 %v291
    %387 = vmatprep.subr.mxu0 0.0
    %388 = vmatpush1.msra.mxu0 %v292
    %389 = vmatprep.mubr.f32.mxu0 %v194
    %390 = vmatmul.mubr.f32.gmra.mrb[0].mxu0 %v193
    %v391 = vpop.f32.mrb[0].mxu0
    %v392 = vadd.f32 0.0, %v391
    %v393 = vpop.f32.mrb[0].mxu0
    %394 = vdwg.mxu0
    %395 = vmatprep.subr.mxu0 0.0
    %396 = vmatpush1.msra.mxu0 %v293
    %397 = vmatprep.subr.mxu0 0.0
    %398 = vmatpush1.msra.mxu0 %v294
    %399 = vmatprep.subr.mxu0 0.0
    %400 = vmatpush1.msra.mxu0 %v295
    %401 = vmatprep.subr.mxu0 0.0
    %402 = vmatpush1.msra.mxu0 %v296
    %403 = vmatprep.subr.mxu0 0.0
    %404 = vmatpush1.msra.mxu0 %v297
    %405 = vmatprep.subr.mxu0 0.0
    %406 = vmatpush1.msra.mxu0 %v298
    %407 = vmatprep.subr.mxu0 0.0
    %408 = vmatpush1.msra.mxu0 %v299
    %409 = vmatprep.subr.mxu0 0.0
    %410 = vmatpush1.msra.mxu0 %v300
    %411 = vmatprep.subr.mxu0 0.0
    %412 = vmatpush1.msra.mxu0 %v301
    %413 = vmatprep.subr.mxu0 0.0
    %414 = vmatpush1.msra.mxu0 %v302
    %415 = vmatprep.subr.mxu0 0.0
    %416 = vmatpush1.msra.mxu0 %v303
    %417 = vmatprep.subr.mxu0 0.0
    %418 = vmatpush1.msra.mxu0 %v304
    %419 = vmatprep.subr.mxu0 0.0
    %420 = vmatpush1.msra.mxu0 %v305
    %421 = vmatprep.subr.mxu0 0.0
    %422 = vmatpush1.msra.mxu0 %v306
    %423 = vmatprep.subr.mxu0 0.0
    %424 = vmatpush1.msra.mxu0 %v307
    %425 = vmatprep.subr.mxu0 0.0
    %426 = vmatpush1.msra.mxu0 %v308
    %427 = vmatprep.subr.mxu0 0.0
    %428 = vmatpush1.msra.mxu0 %v309
    %429 = vmatprep.subr.mxu0 0.0
    %430 = vmatpush1.msra.mxu0 %v310
    %431 = vmatprep.subr.mxu0 0.0
    %432 = vmatpush1.msra.mxu0 %v311
    %433 = vmatprep.subr.mxu0 0.0
    %434 = vmatpush1.msra.mxu0 %v312
    %435 = vmatprep.subr.mxu0 0.0
    %436 = vmatpush1.msra.mxu0 %v313
    %437 = vmatprep.subr.mxu0 0.0
    %438 = vmatpush1.msra.mxu0 %v314
    %439 = vmatprep.subr.mxu0 0.0
    %440 = vmatpush1.msra.mxu0 %v315
    %441 = vmatprep.subr.mxu0 0.0
    %442 = vmatpush1.msra.mxu0 %v316
    %443 = vmatprep.subr.mxu0 0.0
    %444 = vmatpush1.msra.mxu0 %v317
    %445 = vmatprep.subr.mxu0 0.0
    %446 = vmatpush1.msra.mxu0 %v318
    %447 = vmatprep.subr.mxu0 0.0
    %448 = vmatpush1.msra.mxu0 %v319
    %449 = vmatprep.subr.mxu0 0.0
    %450 = vmatpush1.msra.mxu0 %v320
    %451 = vmatprep.subr.mxu0 0.0
    %452 = vmatpush1.msra.mxu0 %v321
    %453 = vmatprep.subr.mxu0 0.0
    %454 = vmatpush1.msra.mxu0 %v322
    %455 = vmatprep.subr.mxu0 0.0
    %456 = vmatpush1.msra.mxu0 %v323
    %457 = vmatprep.subr.mxu0 0.0
    %458 = vmatpush1.msra.mxu0 %v324
    %459 = vmatprep.mubr.f32.mxu0 %v196
    %460 = vmatmul.mubr.f32.gmra.mrb[0].mxu0 %v195
    %v461 = vpop.f32.mrb[0].mxu0
    %v462 = vadd.f32 %v392, %v461
    %v463 = vpop.f32.mrb[0].mxu0
    %464 = vdwg.mxu0
    %465 = vmatprep.subr.mxu0 0.0
    %466 = vmatpush1.msra.mxu0 %v197
    %467 = vmatprep.subr.mxu0 0.0
    %468 = vmatpush1.msra.mxu0 %v198
    %469 = vmatprep.subr.mxu0 0.0
    %470 = vmatpush1.msra.mxu0 %v199
    %471 = vmatprep.subr.mxu0 0.0
    %472 = vmatpush1.msra.mxu0 %v200
    %473 = vmatprep.subr.mxu0 0.0
    %474 = vmatpush1.msra.mxu0 %v201
    %475 = vmatprep.subr.mxu0 0.0
    %476 = vmatpush1.msra.mxu0 %v202
    %477 = vmatprep.subr.mxu0 0.0
    %478 = vmatpush1.msra.mxu0 %v203
    %479 = vmatprep.subr.mxu0 0.0
    %480 = vmatpush1.msra.mxu0 %v204
    %481 = vmatprep.subr.mxu0 0.0
    %482 = vmatpush1.msra.mxu0 %v205
    %483 = vmatprep.subr.mxu0 0.0
    %484 = vmatpush1.msra.mxu0 %v206
    %485 = vmatprep.subr.mxu0 0.0
    %486 = vmatpush1.msra.mxu0 %v207
    %487 = vmatprep.subr.mxu0 0.0
    %488 = vmatpush1.msra.mxu0 %v208
    %489 = vmatprep.subr.mxu0 0.0
    %490 = vmatpush1.msra.mxu0 %v209
    %491 = vmatprep.subr.mxu0 0.0
    %492 = vmatpush1.msra.mxu0 %v210
    %493 = vmatprep.subr.mxu0 0.0
    %494 = vmatpush1.msra.mxu0 %v211
    %495 = vmatprep.subr.mxu0 0.0
    %496 = vmatpush1.msra.mxu0 %v212
    %497 = vmatprep.subr.mxu0 0.0
    %498 = vmatpush1.msra.mxu0 %v213
    %499 = vmatprep.subr.mxu0 0.0
    %500 = vmatpush1.msra.mxu0 %v214
    %501 = vmatprep.subr.mxu0 0.0
    %502 = vmatpush1.msra.mxu0 %v215
    %503 = vmatprep.subr.mxu0 0.0
    %504 = vmatpush1.msra.mxu0 %v216
    %505 = vmatprep.subr.mxu0 0.0
    %506 = vmatpush1.msra.mxu0 %v217
    %507 = vmatprep.subr.mxu0 0.0
    %508 = vmatpush1.msra.mxu0 %v218
    %509 = vmatprep.subr.mxu0 0.0
    %510 = vmatpush1.msra.mxu0 %v219
    %511 = vmatprep.subr.mxu0 0.0
    %512 = vmatpush1.msra.mxu0 %v220
    %513 = vmatprep.subr.mxu0 0.0
    %514 = vmatpush1.msra.mxu0 %v221
    %515 = vmatprep.subr.mxu0 0.0
    %516 = vmatpush1.msra.mxu0 %v222
    %517 = vmatprep.subr.mxu0 0.0
    %518 = vmatpush1.msra.mxu0 %v223
    %519 = vmatprep.subr.mxu0 0.0
    %520 = vmatpush1.msra.mxu0 %v224
    %521 = vmatprep.subr.mxu0 0.0
    %522 = vmatpush1.msra.mxu0 %v225
    %523 = vmatprep.subr.mxu0 0.0
    %524 = vmatpush1.msra.mxu0 %v226
    %525 = vmatprep.subr.mxu0 0.0
    %526 = vmatpush1.msra.mxu0 %v227
    %527 = vmatprep.subr.mxu0 0.0
    %528 = vmatpush1.msra.mxu0 %v228
    %529 = vmatprep.mubr.f32.mxu0 %v116
    %530 = vmatmul.mubr.f32.gmra.mrb[0].mxu0 %v115
    %v531 = vpop.f32.mrb[0].mxu0
    %v532 = vadd.f32 %v462, %v531
    %v533 = vpop.f32.mrb[0].mxu0
    %534 = vdwg.mxu0
    %535 = vmatprep.subr.mxu0 0.0
    %536 = vmatpush1.msra.mxu0 %v229
    %537 = vmatprep.subr.mxu0 0.0
    %538 = vmatpush1.msra.mxu0 %v230
    %539 = vmatprep.subr.mxu0 0.0
    %540 = vmatpush1.msra.mxu0 %v231
    %541 = vmatprep.subr.mxu0 0.0
    %542 = vmatpush1.msra.mxu0 %v232
    %543 = vmatprep.subr.mxu0 0.0
    %544 = vmatpush1.msra.mxu0 %v233
    %545 = vmatprep.subr.mxu0 0.0
    %546 = vmatpush1.msra.mxu0 %v234
    %547 = vmatprep.subr.mxu0 0.0
    %548 = vmatpush1.msra.mxu0 %v235
    %549 = vmatprep.subr.mxu0 0.0
    %550 = vmatpush1.msra.mxu0 %v236
    %551 = vmatprep.subr.mxu0 0.0
    %552 = vmatpush1.msra.mxu0 %v237
    %553 = vmatprep.subr.mxu0 0.0
    %554 = vmatpush1.msra.mxu0 %v238
    %555 = vmatprep.subr.mxu0 0.0
    %556 = vmatpush1.msra.mxu0 %v239
    %557 = vmatprep.subr.mxu0 0.0
    %558 = vmatpush1.msra.mxu0 %v240
    %559 = vmatprep.subr.mxu0 0.0
    %560 = vmatpush1.msra.mxu0 %v241
    %561 = vmatprep.subr.mxu0 0.0
    %562 = vmatpush1.msra.mxu0 %v242
    %563 = vmatprep.subr.mxu0 0.0
    %564 = vmatpush1.msra.mxu0 %v243
    %565 = vmatprep.subr.mxu0 0.0
    %566 = vmatpush1.msra.mxu0 %v244
    %567 = vmatprep.subr.mxu0 0.0
    %568 = vmatpush1.msra.mxu0 %v245
    %569 = vmatprep.subr.mxu0 0.0
    %570 = vmatpush1.msra.mxu0 %v246
    %571 = vmatprep.subr.mxu0 0.0
    %572 = vmatpush1.msra.mxu0 %v247
    %573 = vmatprep.subr.mxu0 0.0
    %574 = vmatpush1.msra.mxu0 %v248
    %575 = vmatprep.subr.mxu0 0.0
    %576 = vmatpush1.msra.mxu0 %v249
    %577 = vmatprep.subr.mxu0 0.0
    %578 = vmatpush1.msra.mxu0 %v250
    %579 = vmatprep.subr.mxu0 0.0
    %580 = vmatpush1.msra.mxu0 %v251
    %581 = vmatprep.subr.mxu0 0.0
    %582 = vmatpush1.msra.mxu0 %v252
    %583 = vmatprep.subr.mxu0 0.0
    %584 = vmatpush1.msra.mxu0 %v253
    %585 = vmatprep.subr.mxu0 0.0
    %586 = vmatpush1.msra.mxu0 %v254
    %587 = vmatprep.subr.mxu0 0.0
    %588 = vmatpush1.msra.mxu0 %v255
    %589 = vmatprep.subr.mxu0 0.0
    %590 = vmatpush1.msra.mxu0 %v256
    %591 = vmatprep.subr.mxu0 0.0
    %592 = vmatpush1.msra.mxu0 %v257
    %593 = vmatprep.subr.mxu0 0.0
    %594 = vmatpush1.msra.mxu0 %v258
    %595 = vmatprep.subr.mxu0 0.0
    %596 = vmatpush1.msra.mxu0 %v259
    %597 = vmatprep.subr.mxu0 0.0
    %598 = vmatpush1.msra.mxu0 %v260
    %599 = vmatprep.mubr.f32.mxu0 %v118
    %600 = vmatmul.mubr.f32.gmra.mrb[0].mxu0 %v117
    %v601 = vpop.f32.mrb[0].mxu0
    %v602 = vadd.f32 %v532, %v601
    %v603 = vpop.f32.mrb[0].mxu0
    %604 = vdwg.mxu0
    %v605 = vld [vmem:[%s4] sm:$0x1]
    %v606 = vadd.f32 %v602, %v605
    %v607 = vmax.f32 %v606, 0.0
    %v608 = vld [vmem:[%s5] sm:$0xff]
    %v609 = vld [vmem:[%s5 + $0x8] sm:$0xff]
    %v610 = vld [vmem:[%s5 + $0x10] sm:$0xff]
    %v611 = vld [vmem:[%s5 + $0x18] sm:$0xff]
    %v612 = vld [vmem:[%s5 + $0x20] sm:$0xff]
    %v613 = vld [vmem:[%s5 + $0x28] sm:$0xff]
    %v614 = vld [vmem:[%s5 + $0x30] sm:$0xff]
    %v615 = vld [vmem:[%s5 + $0x38] sm:$0xff]
    %v616 = vld [vmem:[%s5 + $0x40] sm:$0xff]
    %v617 = vld [vmem:[%s5 + $0x48] sm:$0xff]
    %v618 = vld [vmem:[%s5 + $0x50] sm:$0xff]
    %v619 = vld [vmem:[%s5 + $0x58] sm:$0xff]
    %v620 = vld [vmem:[%s5 + $0x60] sm:$0xff]
    %v621 = vld [vmem:[%s5 + $0x68] sm:$0xff]
    %v622 = vld [vmem:[%s5 + $0x70] sm:$0xff]
    %v623 = vld [vmem:[%s5 + $0x78] sm:$0xff]
    %v624 = vld [vmem:[%s6] sm:$0x1]
    %625 = vmatprep.subr.mxu0 0.0
    %626 = vmatpush1.msra.mxu0 %v608
    %627 = vmatprep.subr.mxu0 0.0
    %628 = vmatpush1.msra.mxu0 %v609
    %629 = vmatprep.subr.mxu0 0.0
    %630 = vmatpush1.msra.mxu0 %v610
    %631 = vmatprep.subr.mxu0 0.0
    %632 = vmatpush1.msra.mxu0 %v611
    %633 = vmatprep.subr.mxu0 0.0
    %634 = vmatpush1.msra.mxu0 %v612
    %635 = vmatprep.subr.mxu0 0.0
    %636 = vmatpush1.msra.mxu0 %v613
    %637 = vmatprep.subr.mxu0 0.0
    %638 = vmatpush1.msra.mxu0 %v614
    %639 = vmatprep.subr.mxu0 0.0
    %640 = vmatpush1.msra.mxu0 %v615
    %641 = vmatprep.subr.mxu0 0.0
    %642 = vmatpush1.msra.mxu0 %v616
    %643 = vmatprep.subr.mxu0 0.0
    %644 = vmatpush1.msra.mxu0 %v617
    %645 = vmatprep.subr.mxu0 0.0
    %646 = vmatpush1.msra.mxu0 %v618
    %647 = vmatprep.subr.mxu0 0.0
    %648 = vmatpush1.msra.mxu0 %v619
    %649 = vmatprep.subr.mxu0 0.0
    %650 = vmatpush1.msra.mxu0 %v620
    %651 = vmatprep.subr.mxu0 0.0
    %652 = vmatpush1.msra.mxu0 %v621
    %653 = vmatprep.subr.mxu0 0.0
    %654 = vmatpush1.msra.mxu0 %v622
    %655 = vmatprep.subr.mxu0 0.0
    %656 = vmatpush1.msra.mxu0 %v623
    %657 = vmatprep.subr.mxu0 0.0
    %658 = vmatpush1.msra.mxu0 0.0
    %659 = vmatprep.subr.mxu0 0.0
    %660 = vmatpush1.msra.mxu0 0.0
    %661 = vmatprep.subr.mxu0 0.0
    %662 = vmatpush1.msra.mxu0 0.0
    %663 = vmatprep.subr.mxu0 0.0
    %664 = vmatpush1.msra.mxu0 0.0
    %665 = vmatprep.subr.mxu0 0.0
    %666 = vmatpush1.msra.mxu0 0.0
    %667 = vmatprep.subr.mxu0 0.0
    %668 = vmatpush1.msra.mxu0 0.0
    %669 = vmatprep.subr.mxu0 0.0
    %670 = vmatpush1.msra.mxu0 0.0
    %671 = vmatprep.subr.mxu0 0.0
    %672 = vmatpush1.msra.mxu0 0.0
    %673 = vmatprep.subr.mxu0 0.0
    %674 = vmatpush1.msra.mxu0 0.0
    %675 = vmatprep.subr.mxu0 0.0
    %676 = vmatpush1.msra.mxu0 0.0
    %677 = vmatprep.subr.mxu0 0.0
    %678 = vmatpush1.msra.mxu0 0.0
    %679 = vmatprep.subr.mxu0 0.0
    %680 = vmatpush1.msra.mxu0 0.0
    %681 = vmatprep.subr.mxu0 0.0
    %682 = vmatpush1.msra.mxu0 0.0
    %683 = vmatprep.subr.mxu0 0.0
    %684 = vmatpush1.msra.mxu0 0.0
    %685 = vmatprep.subr.mxu0 0.0
    %686 = vmatpush1.msra.mxu0 0.0
    %687 = vmatprep.subr.mxu0 0.0
    %688 = vmatpush1.msra.mxu0 0.0
    %689 = vmatprep.mubr.f32.mxu0 0.0
    %690 = vmatmul.mubr.f32.gmra.mrb[0].mxu0 %v607
    %v691 = vpop.f32.mrb[0].mxu0
    %v692 = vadd.f32 %v624, %v691
    %v693 = vpop.f32.mrb[0].mxu0
    %694 = vdwg.mxu0
    %v695 = vmax.f32 %v692, 0.0
    %v696 = vld [vmem:[%s7] sm:$0xff]
    %v697 = vld [vmem:[%s7 + $0x8] sm:$0xff]
    %v698 = vld [vmem:[%s7 + $0x10] sm:$0xff]
    %v699 = vld [vmem:[%s7 + $0x18] sm:$0xff]
    %v700 = vld [vmem:[%s7 + $0x20] sm:$0xff]
    %v701 = vld [vmem:[%s7 + $0x28] sm:$0xff]
    %v702 = vld [vmem:[%s7 + $0x30] sm:$0xff]
    %v703 = vld [vmem:[%s7 + $0x38] sm:$0xff]
    %v704 = vld [vmem:[%s8] sm:$0x1]
    %vm705 = vcmask 523264
    %v707 = vsel %vm705, %v695, 0
    %709 = vmatprep.subr.mxu0 0.0
    %710 = vmatpush1.msra.mxu0 %v696
    %711 = vmatprep.subr.mxu0 0.0
    %712 = vmatpush1.msra.mxu0 %v697
    %713 = vmatprep.subr.mxu0 0.0
    %714 = vmatpush1.msra.mxu0 %v698
    %715 = vmatprep.subr.mxu0 0.0
    %716 = vmatpush1.msra.mxu0 %v699
    %717 = vmatprep.subr.mxu0 0.0
    %718 = vmatpush1.msra.mxu0 %v700
    %719 = vmatprep.subr.mxu0 0.0
    %720 = vmatpush1.msra.mxu0 %v701
    %721 = vmatprep.subr.mxu0 0.0
    %722 = vmatpush1.msra.mxu0 %v702
    %723 = vmatprep.subr.mxu0 0.0
    %724 = vmatpush1.msra.mxu0 %v703
    %725 = vmatprep.subr.mxu0 0.0
    %726 = vmatpush1.msra.mxu0 0.0
    %727 = vmatprep.subr.mxu0 0.0
    %728 = vmatpush1.msra.mxu0 0.0
    %729 = vmatprep.subr.mxu0 0.0
    %730 = vmatpush1.msra.mxu0 0.0
    %731 = vmatprep.subr.mxu0 0.0
    %732 = vmatpush1.msra.mxu0 0.0
    %733 = vmatprep.subr.mxu0 0.0
    %734 = vmatpush1.msra.mxu0 0.0
    %735 = vmatprep.subr.mxu0 0.0
    %736 = vmatpush1.msra.mxu0 0.0
    %737 = vmatprep.subr.mxu0 0.0
    %738 = vmatpush1.msra.mxu0 0.0
    %739 = vmatprep.subr.mxu0 0.0
    %740 = vmatpush1.msra.mxu0 0.0
    %741 = vmatprep.subr.mxu0 0.0
    %742 = vmatpush1.msra.mxu0 0.0
    %743 = vmatprep.subr.mxu0 0.0
    %744 = vmatpush1.msra.mxu0 0.0
    %745 = vmatprep.subr.mxu0 0.0
    %746 = vmatpush1.msra.mxu0 0.0
    %747 = vmatprep.subr.mxu0 0.0
    %748 = vmatpush1.msra.mxu0 0.0
    %749 = vmatprep.subr.mxu0 0.0
    %750 = vmatpush1.msra.mxu0 0.0
    %751 = vmatprep.subr.mxu0 0.0
    %752 = vmatpush1.msra.mxu0 0.0
    %753 = vmatprep.subr.mxu0 0.0
    %754 = vmatpush1.msra.mxu0 0.0
    %755 = vmatprep.subr.mxu0 0.0
    %756 = vmatpush1.msra.mxu0 0.0
    %757 = vmatprep.subr.mxu0 0.0
    %758 = vmatpush1.msra.mxu0 0.0
    %759 = vmatprep.subr.mxu0 0.0
    %760 = vmatpush1.msra.mxu0 0.0
    %761 = vmatprep.subr.mxu0 0.0
    %762 = vmatpush1.msra.mxu0 0.0
    %763 = vmatprep.subr.mxu0 0.0
    %764 = vmatpush1.msra.mxu0 0.0
    %765 = vmatprep.subr.mxu0 0.0
    %766 = vmatpush1.msra.mxu0 0.0
    %767 = vmatprep.subr.mxu0 0.0
    %768 = vmatpush1.msra.mxu0 0.0
    %769 = vmatprep.subr.mxu0 0.0
    %770 = vmatpush1.msra.mxu0 0.0
    %771 = vmatprep.subr.mxu0 0.0
    %772 = vmatpush1.msra.mxu0 0.0
    %773 = vmatprep.mubr.f32.mxu0 0.0
    %774 = vmatmul.mubr.f32.gmra.mrb[0].mxu0 %v707
    %v775 = vpop.f32.mrb[0].mxu0
    %v776 = vadd.f32 %v704, %v775
    %v777 = vpop.f32.mrb[0].mxu0
    %778 = vdwg.mxu0
    %vm779 = vcmask 57344
    %v780 = vsel %vm779, %v776, -inf
    %781 = vmax.xlane.f32.xlu0 %v780
    %v782 = vpop.xlane.xlu0 %781
    %v783 = vsub.f32 %v776, %v782
    %v784 = vmul.f32 %v783, 1.442695
    %v785 = vpow.pop %v784
    %v786 = vsel %vm779, %v785, 0.0
    %787 = vadd.xlane.f32.xlu0 %v786
    %v788 = vpop.xlane.xlu0 %787
    %v789 = vlog2.pop %v788
    %v790 = vmul.f32 %v789, 0.6931472
    %v791 = vsub.f32 %v783, %v790
    %792 = vst.msk [vmem:[#allocation2] sm:$0x1] %vm779, %v791
    // Predicated region
    $region38: #{net_forward.9} parent=1 // pred_check
      _
    $region39: #{net_forward.9} parent=1 // pred_check_branch
      %794 = sbr.rel (0) target = $region41
    $region40: #{net_forward.9} parent=1 // pred_region
      %s796 = ssub.s32 16, 16
      %797 = vsyncadd [#allocation3], %s796
      %s799 = sshll.u32 [#allocation2], 4
      %s800 = int_to_ptr.vmem [resolvable:$true] %s799
      %802 = dma.vmem_to_hbm [thread:$0]  %s800, 16, %s9, [#allocation3]
    $region41: #{net_forward.9} parent=1 // pred_fallthru
      _
    // Predicated region
    $region42: #{net_forward.9} parent=1 // pred_check
      _
    $region43: #{net_forward.9} parent=1 // pred_check_branch
      %804 = sbr.rel (0) target = $region45
    $region44: #{net_forward.9} parent=1 // pred_region
      %805 = dma.done [#allocation3], 16
    $region45: #{net_forward.9} parent=1 // pred_fallthru
      _
    %806 = vsyncpa [#allocation3], 1

</llo_original>
